<compile_context>
chip_gen: v7x
topology: tpu7x:2x2x1
jax: 0.10.0
libtpu: 0.0.40
codegen_flags: <defaults>
</compile_context>

<pallas_src>
import math

import jax
import jax.numpy as jnp
from jax import lax
from jax.experimental import pallas as pl
from jax.experimental.pallas import tpu as pltpu


_NEG_INF = jnp.float32(-1e18)


# ----------------------------- in-kernel helpers -----------------------------

def _layer_norm(x, g, b, eps=1e-6):
    """LayerNorm over the last dim; statistics in f32."""
    mu = jnp.mean(x, axis=-1, keepdims=True)
    var = jnp.mean(jnp.square(x - mu), axis=-1, keepdims=True)
    return (x - mu) * lax.rsqrt(var + eps) * g + b


def _head_attention(qh, kh, vh, bias):
    """Single-head attention.  qh:(Lq,dk) kh:(Lk,dk) vh:(Lk,dv) f32 (Q pre-scaled),
    bias: additive mask (Lq or 1, Lk) f32.  Returns (attn:(Lq,Lk) f32, ctx:(Lq,dv) f32)."""
    s = lax.dot_general(qh.astype(jnp.bfloat16), kh.astype(jnp.bfloat16),
                        (((1,), (1,)), ((), ())),
                        preferred_element_type=jnp.float32)
    s = s + bias                                   # -1e18 absorbs scores exactly in f32
    m = jnp.max(s, axis=-1, keepdims=True)
    p = jnp.exp(s - m)
    a = p * pl.reciprocal(jnp.sum(p, axis=-1, keepdims=True), approx=True)
    ctx = jnp.dot(a.astype(jnp.bfloat16), vh.astype(jnp.bfloat16),
                  preferred_element_type=jnp.float32)
    return a, ctx


# ----------------------------- Pallas kernels -----------------------------

def _make_self_attn_kernel(heads, d_k):
    scale = 1.0 / math.sqrt(d_k)

    def kernel(x_ref, bias_ref, wq_ref, bq_ref, wk_ref, bk_ref, wv_ref, bv_ref,
               wo_ref, bo_ref, g_ref, b_ref, out_ref):
        x = x_ref[...]                               # (Lt, D) f32
        xb = x.astype(jnp.bfloat16)
        bias = bias_ref[...]                         # (Lt, Lt) additive causal+pad mask
        acc = jnp.zeros(x.shape, jnp.float32)        # fused output-projection accumulator
        for h in range(heads):                       # statically unrolled; all in VMEM
            qh = (jnp.dot(xb, wq_ref[h], preferred_element_type=jnp.float32)
                  + bq_ref[h]) * scale
            kh = jnp.dot(xb, wk_ref[h], preferred_element_type=jnp.float32) + bk_ref[h]
            vh = jnp.dot(xb, wv_ref[h], preferred_element_type=jnp.float32) + bv_ref[h]
            _, ctx_h = _head_attention(qh, kh, vh, bias)
            acc = acc + jnp.dot(ctx_h.astype(jnp.bfloat16), wo_ref[h],
                                preferred_element_type=jnp.float32)
        out = acc + bo_ref[...]
        # residual + shared LayerNorm fused into the same kernel
        out_ref[...] = _layer_norm(out + x, g_ref[...], b_ref[...]).astype(out_ref.dtype)

    return kernel


def _make_ctx_attn_kernel(heads, d_k):
    scale = 1.0 / math.sqrt(d_k)

    def kernel(q_ref, m_ref, bias_ref, wq_ref, bq_ref, wk_ref, bk_ref, wv_ref,
               bv_ref, wo_ref, bo_ref, g_ref, b_ref, out_ref, attn_ref):
        qn = q_ref[...]                              # (Lt, D) query_norm
        mem = m_ref[...]                             # (Ls, D) memory bank
        qb = qn.astype(jnp.bfloat16)
        mb = mem.astype(jnp.bfloat16)
        bias = bias_ref[...]                         # (1, Ls) additive src-pad mask
        acc = jnp.zeros(qn.shape, jnp.float32)
        for h in range(heads):
            qh = (jnp.dot(qb, wq_ref[h], preferred_element_type=jnp.float32)
                  + bq_ref[h]) * scale
            kh = jnp.dot(mb, wk_ref[h], preferred_element_type=jnp.float32) + bk_ref[h]
            vh = jnp.dot(mb, wv_ref[h], preferred_element_type=jnp.float32) + bv_ref[h]
            a_h, ctx_h = _head_attention(qh, kh, vh, bias)
            if h == 0:                               # only head 0 is consumed downstream
                attn_ref[...] = a_h.astype(attn_ref.dtype)
            acc = acc + jnp.dot(ctx_h.astype(jnp.bfloat16), wo_ref[h],
                                preferred_element_type=jnp.float32)
        out = acc + bo_ref[...]
        out_ref[...] = _layer_norm(out + qn, g_ref[...], b_ref[...]).astype(out_ref.dtype)

    return kernel


def _ffn_kernel(x_ref, g_ref, be_ref, w1_ref, b1_ref, w2_ref, b2_ref, o_ref):
    x = x_ref[...]                                   # (tm, D) f32
    xn = _layer_norm(x, g_ref[...], be_ref[...])
    h = jnp.dot(xn.astype(jnp.bfloat16), w1_ref[...],
                preferred_element_type=jnp.float32) + b1_ref[...]
    h = jnp.maximum(h, 0.0)
    y = jnp.dot(h.astype(jnp.bfloat16), w2_ref[...],
                preferred_element_type=jnp.float32) + b2_ref[...]
    o_ref[...] = (y + x).astype(o_ref.dtype)


# ----------------------------- wrappers -----------------------------

def _pack_heads(p, heads, d_k, d_v):
    """Repack (D, H*dk)-style weights into head-major (H, D, dk) bf16 slabs so the
    kernel can index heads along the leading (untiled) axis; biases stay f32."""
    D = p["wq"].shape[0]
    wq = p["wq"].reshape(D, heads, d_k).transpose(1, 0, 2).astype(jnp.bfloat16)
    wk = p["wk"].reshape(D, heads, d_k).transpose(1, 0, 2).astype(jnp.bfloat16)
    wv = p["wv"].reshape(D, heads, d_v).transpose(1, 0, 2).astype(jnp.bfloat16)
    wo = p["wo"].reshape(heads, d_v, D).astype(jnp.bfloat16)
    bq = p["bq"].reshape(heads, 1, d_k)
    bk = p["bk"].reshape(heads, 1, d_k)
    bv = p["bv"].reshape(heads, 1, d_v)
    bo = p["bo"].reshape(1, D)
    return wq, bq, wk, bk, wv, bv, wo, bo


def self_attn_block(x, dec_bias, p, ln_g, ln_b, heads, d_k, d_v):
    """Fused self-attention + residual + LayerNorm.  x:(B,Lt,D), dec_bias:(B,Lt,Lt)."""
    B, Lt, D = x.shape
    wq, bq, wk, bk, wv, bv, wo, bo = _pack_heads(p, heads, d_k, d_v)
    full2 = lambda b: (0, 0)
    full3 = lambda b: (0, 0, 0)
    return pl.pallas_call(
        _make_self_attn_kernel(heads, d_k),
        out_shape=jax.ShapeDtypeStruct((B, Lt, D), x.dtype),
        grid=(B,),
        in_specs=[
            pl.BlockSpec((None, Lt, D), lambda b: (b, 0, 0)),      # inputs
            pl.BlockSpec((None, Lt, Lt), lambda b: (b, 0, 0)),     # causal+pad bias
            pl.BlockSpec((heads, D, d_k), full3),                  # wq (resident)
            pl.BlockSpec((heads, 1, d_k), full3),                  # bq
            pl.BlockSpec((heads, D, d_k), full3),                  # wk
            pl.BlockSpec((heads, 1, d_k), full3),                  # bk
            pl.BlockSpec((heads, D, d_v), full3),                  # wv
            pl.BlockSpec((heads, 1, d_v), full3),                  # bv
            pl.BlockSpec((heads, d_v, D), full3),                  # wo
            pl.BlockSpec((1, D), full2),                           # bo
            pl.BlockSpec((1, D), full2),                           # ln gamma
            pl.BlockSpec((1, D), full2),                           # ln beta
        ],
        out_specs=pl.BlockSpec((None, Lt, D), lambda b: (b, 0, 0)),
        compiler_params=pltpu.CompilerParams(dimension_semantics=("parallel",)),
    )(x, dec_bias, wq, bq, wk, bk, wv, bv, wo, bo,
      ln_g.reshape(1, D), ln_b.reshape(1, D))


def ctx_attn_block(query_norm, memory, src_bias, p, ln_g, ln_b, heads, d_k, d_v):
    """Fused context attention + residual + LayerNorm; also emits head-0 attention."""
    B, Lt, D = query_norm.shape
    Ls = memory.shape[1]
    wq, bq, wk, bk, wv, bv, wo, bo = _pack_heads(p, heads, d_k, d_v)
    full2 = lambda b: (0, 0)
    full3 = lambda b: (0, 0, 0)
    out, attn0 = pl.pallas_call(
        _make_ctx_attn_kernel(heads, d_k),
        out_shape=(jax.ShapeDtypeStruct((B, Lt, D), query_norm.dtype),
                   jax.ShapeDtypeStruct((B, Lt, Ls), jnp.float32)),
        grid=(B,),
        in_specs=[
            pl.BlockSpec((None, Lt, D), lambda b: (b, 0, 0)),      # query_norm
            pl.BlockSpec((None, Ls, D), lambda b: (b, 0, 0)),      # memory_bank
            pl.BlockSpec((None, 1, Ls), lambda b: (b, 0, 0)),      # src-pad bias
            pl.BlockSpec((heads, D, d_k), full3),
            pl.BlockSpec((heads, 1, d_k), full3),
            pl.BlockSpec((heads, D, d_k), full3),
            pl.BlockSpec((heads, 1, d_k), full3),
            pl.BlockSpec((heads, D, d_v), full3),
            pl.BlockSpec((heads, 1, d_v), full3),
            pl.BlockSpec((heads, d_v, D), full3),
            pl.BlockSpec((1, D), full2),
            pl.BlockSpec((1, D), full2),
            pl.BlockSpec((1, D), full2),
        ],
        out_specs=(pl.BlockSpec((None, Lt, D), lambda b: (b, 0, 0)),
                   pl.BlockSpec((None, Lt, Ls), lambda b: (b, 0, 0))),
        compiler_params=pltpu.CompilerParams(dimension_semantics=("parallel",)),
    )(query_norm, memory, src_bias, wq, bq, wk, bk, wv, bv, wo, bo,
      ln_g.reshape(1, D), ln_b.reshape(1, D))
    return out, attn0


def _pick_row_tile(M, max_tile=512):
    """Largest row tile (multiple of 8, <= max_tile) dividing M with >= 2 grid steps."""
    for t in (512, 256, 128, 64, 32, 16, 8):
        if t <= max_tile and M % t == 0 and M // t >= 2:
            return t
    return M


def feed_forward(x, p):
    """PositionwiseFeedForward: W2(relu(W1(LN(x)))) + x, fused, tiled over rows."""
    M, D = x.shape
    F = p["w1"].shape[1]
    tm = _pick_row_tile(M)
    w1 = p["w1"].astype(jnp.bfloat16)
    w2 = p["w2"].astype(jnp.bfloat16)
    const2 = lambda i: (0, 0)
    return pl.pallas_call(
        _ffn_kernel,
        out_shape=jax.ShapeDtypeStruct((M, D), x.dtype),
        grid=(M // tm,),
        in_specs=[
            pl.BlockSpec((tm, D), lambda i: (i, 0)),               # activations (tiled)
            pl.BlockSpec((1, D), const2),                          # ln gamma
            pl.BlockSpec((1, D), const2),                          # ln beta
            pl.BlockSpec((D, F), const2),                          # w1 (resident)
            pl.BlockSpec((1, F), const2),                          # b1
            pl.BlockSpec((F, D), const2),                          # w2 (resident)
            pl.BlockSpec((1, D), const2),                          # b2
        ],
        out_specs=pl.BlockSpec((tm, D), lambda i: (i, 0)),
        compiler_params=pltpu.CompilerParams(dimension_semantics=("parallel",)),
    )(x, p["ln_g"].reshape(1, D), p["ln_b"].reshape(1, D),
      w1, p["b1"].reshape(1, F), w2, p["b2"].reshape(1, D))


# ----------------------------- full decoder layer -----------------------------

def transformer_decoder_layer(params, inputs, memory_bank, src_pad_mask, tgt_pad_mask,
                              heads, d_k, d_v):
    B, Lt, D = inputs.shape

    # Additive mask biases precomputed once (0 = attend, -1e18 = masked).  Adding
    # -1e18 in f32 is bit-identical to masked_fill(-1e18) since the score is absorbed.
    future = jnp.triu(jnp.ones((Lt, Lt), jnp.float32), k=1)[None]          # (1,Lt,Lt)
    dec_masked = (tgt_pad_mask.astype(jnp.float32) + future) > 0.0         # (B,Lt,Lt)
    dec_bias = jnp.where(dec_masked, _NEG_INF, jnp.float32(0.0))
    src_bias = jnp.where(src_pad_mask > 0, _NEG_INF,
                         jnp.float32(0.0)).astype(jnp.float32)             # (B,1,Ls)

    # 1) self attention + residual + shared LayerNorm   (one fused kernel)
    query_norm = self_attn_block(inputs, dec_bias, params["self_attn"],
                                 params["ln_g"], params["ln_b"], heads, d_k, d_v)

    # 2) context attention + residual + shared LayerNorm (one fused kernel, attn head 0)
    mid_norm, attn = ctx_attn_block(query_norm, memory_bank, src_bias,
                                    params["ctx_attn"], params["ln_g"],
                                    params["ln_b"], heads, d_k, d_v)

    # 3) position-wise feed forward (own LayerNorm + residual), row-tiled
    output = feed_forward(mid_norm.reshape(B * Lt, D),
                          params["ffn"]).reshape(B, Lt, D)

    coverage = None       # coverage_attn=False
    graph_attn = None     # include_graph=False
    return output, attn, coverage, graph_attn


# ----------------------------- parameter init -----------------------------

def init_params(key, d_model, heads, d_k, d_v, d_ff):
    def dense(k, din, dout):
        return 0.02 * jax.random.normal(k, (din, dout), jnp.float32)

    keys = jax.random.split(key, 12)

    def mha_params(ks):
        return {
            "wq": dense(ks[0], d_model, heads * d_k), "bq": jnp.zeros((heads * d_k,), jnp.float32),
            "wk": dense(ks[1], d_model, heads * d_k), "bk": jnp.zeros((heads * d_k,), jnp.float32),
            "wv": dense(ks[2], d_model, heads * d_v), "bv": jnp.zeros((heads * d_v,), jnp.float32),
            "wo": dense(ks[3], heads * d_v, d_model), "bo": jnp.zeros((d_model,), jnp.float32),
        }

    return {
        "self_attn": mha_params(keys[0:4]),
        "ctx_attn": mha_params(keys[4:8]),
        "ln_g": jnp.ones((d_model,), jnp.float32),
        "ln_b": jnp.zeros((d_model,), jnp.float32),
        "ffn": {
            "ln_g": jnp.ones((d_model,), jnp.float32),
            "ln_b": jnp.zeros((d_model,), jnp.float32),
            "w1": dense(keys[8], d_model, d_ff), "b1": jnp.zeros((d_ff,), jnp.float32),
            "w2": dense(keys[9], d_ff, d_model), "b2": jnp.zeros((d_model,), jnp.float32),
        },
    }


# ----------------------------- main -----------------------------

if __name__ == "__main__":
    B, Lt, Ls = 2, 8, 12
    d_model, heads, d_k, d_v, d_ff = 32, 4, 8, 8, 64

    root = jax.random.PRNGKey(0)
    k_param, k_in, k_mem = jax.random.split(root, 3)

    params = init_params(k_param, d_model, heads, d_k, d_v, d_ff)

    inputs = jax.random.normal(k_in, (B, Lt, d_model), jnp.float32)
    memory_bank = jax.random.normal(k_mem, (B, Ls, d_model), jnp.float32)

    # pad masks: 1 == padded position (LongTensor semantics in the reference)
    tgt_pad_mask = jnp.zeros((B, 1, Lt), jnp.int32)
    src_pad_mask = jnp.zeros((B, 1, Ls), jnp.int32).at[1, 0, Ls - 2:].set(1)

    fwd = jax.jit(lambda p, x, m, sm, tm: transformer_decoder_layer(
        p, x, m, sm, tm, heads, d_k, d_v))

    output, attn, coverage, graph_attn = fwd(
        params, inputs, memory_bank, src_pad_mask, tgt_pad_mask)
    jax.block_until_ready((output, attn))

    assert output.shape == (B, Lt, d_model)
    assert attn.shape == (B, Lt, Ls)
    assert bool(jnp.all(jnp.isfinite(output)))
    assert bool(jnp.all(jnp.isfinite(attn)))
    print("KERNEL_OK")
</pallas_src>

<mosaic_0001>
module attributes {stable_mosaic.version = 11 : i64} {
  func.func @kernel(%arg0: i32, %arg1: memref<1x8x32xf32, #tpu.memory_space<vmem>>, %arg2: memref<1x8x8xf32, #tpu.memory_space<vmem>>, %arg3: memref<4x32x8xbf16, #tpu.memory_space<vmem>>, %arg4: memref<4x1x8xf32, #tpu.memory_space<vmem>>, %arg5: memref<4x32x8xbf16, #tpu.memory_space<vmem>>, %arg6: memref<4x1x8xf32, #tpu.memory_space<vmem>>, %arg7: memref<4x32x8xbf16, #tpu.memory_space<vmem>>, %arg8: memref<4x1x8xf32, #tpu.memory_space<vmem>>, %arg9: memref<4x8x32xbf16, #tpu.memory_space<vmem>>, %arg10: memref<1x32xf32, #tpu.memory_space<vmem>>, %arg11: memref<1x32xf32, #tpu.memory_space<vmem>>, %arg12: memref<1x32xf32, #tpu.memory_space<vmem>>, %arg13: memref<1x8x32xf32, #tpu.memory_space<vmem>>) attributes {dimension_semantics = [#tpu.dimension_semantics<parallel>], iteration_bounds = array<i64: 2>, scalar_prefetch = 0 : i64, scratch_operands = 0 : i64, tpu.core_type = #tpu.core_type<tc>, window_params = [{transform_indices = @transform_0, window_bounds = array<i64: 1, 8, 32>}, {transform_indices = @transform_1, window_bounds = array<i64: 1, 8, 8>}, {pipeline_mode = #tpu.pipeline_mode<synchronous>, transform_indices = @transform_2, window_bounds = array<i64: 4, 32, 8>}, {pipeline_mode = #tpu.pipeline_mode<synchronous>, transform_indices = @transform_3, window_bounds = array<i64: 4, 1, 8>}, {pipeline_mode = #tpu.pipeline_mode<synchronous>, transform_indices = @transform_4, window_bounds = array<i64: 4, 32, 8>}, {pipeline_mode = #tpu.pipeline_mode<synchronous>, transform_indices = @transform_5, window_bounds = array<i64: 4, 1, 8>}, {pipeline_mode = #tpu.pipeline_mode<synchronous>, transform_indices = @transform_6, window_bounds = array<i64: 4, 32, 8>}, {pipeline_mode = #tpu.pipeline_mode<synchronous>, transform_indices = @transform_7, window_bounds = array<i64: 4, 1, 8>}, {pipeline_mode = #tpu.pipeline_mode<synchronous>, transform_indices = @transform_8, window_bounds = array<i64: 4, 8, 32>}, {pipeline_mode = #tpu.pipeline_mode<synchronous>, transform_indices = @transform_9, window_bounds = array<i64: 1, 32>}, {pipeline_mode = #tpu.pipeline_mode<synchronous>, transform_indices = @transform_10, window_bounds = array<i64: 1, 32>}, {pipeline_mode = #tpu.pipeline_mode<synchronous>, transform_indices = @transform_11, window_bounds = array<i64: 1, 32>}, {transform_indices = @transform_12, window_bounds = array<i64: 1, 8, 32>}]} {
    %c0 = arith.constant 0 : index
    %c0_0 = arith.constant 0 : index
    %c0_1 = arith.constant 0 : index
    %0 = vector.load %arg1[%c0, %c0_0, %c0_1] : memref<1x8x32xf32, #tpu.memory_space<vmem>>, vector<1x8x32xf32>
    %1 = vector.shape_cast %0 : vector<1x8x32xf32> to vector<8x32xf32>
    %2 = arith.truncf %1 : vector<8x32xf32> to vector<8x32xbf16>
    %c0_2 = arith.constant 0 : index
    %c0_3 = arith.constant 0 : index
    %c0_4 = arith.constant 0 : index
    %3 = vector.load %arg2[%c0_2, %c0_3, %c0_4] : memref<1x8x8xf32, #tpu.memory_space<vmem>>, vector<1x8x8xf32>
    %4 = vector.shape_cast %3 : vector<1x8x8xf32> to vector<8x8xf32>
    %cst = arith.constant 0.000000e+00 : f32
    %5 = vector.broadcast %cst : f32 to vector<8x32xf32>
    %c0_5 = arith.constant 0 : index
    %c0_6 = arith.constant 0 : index
    %c0_7 = arith.constant 0 : index
    %6 = vector.load %arg3[%c0_5, %c0_6, %c0_7] : memref<4x32x8xbf16, #tpu.memory_space<vmem>>, vector<1x32x8xbf16>
    %7 = vector.shape_cast %6 : vector<1x32x8xbf16> to vector<32x8xbf16>
    %cst_8 = arith.constant dense<0.000000e+00> : vector<8x8xf32>
    %8 = tpu.matmul %2, %7, %cst_8 {dimension_numbers = #tpu.dot_dimension_numbers<[1], [0], [0], [1], [0, 0, 1, 1], [], []>} : vector<8x32xbf16>, vector<32x8xbf16>, vector<8x8xf32> -> vector<8x8xf32>
    %c0_9 = arith.constant 0 : index
    %c0_10 = arith.constant 0 : index
    %c0_11 = arith.constant 0 : index
    %9 = vector.load %arg4[%c0_9, %c0_10, %c0_11] : memref<4x1x8xf32, #tpu.memory_space<vmem>>, vector<1x1x8xf32>
    %10 = vector.shape_cast %9 : vector<1x1x8xf32> to vector<1x8xf32>
    %11 = vector.broadcast %10 : vector<1x8xf32> to vector<8x8xf32>
    %12 = arith.addf %8, %11 : vector<8x8xf32>
    %cst_12 = arith.constant 0.353553385 : f32
    %13 = vector.broadcast %cst_12 : f32 to vector<8x8xf32>
    %14 = arith.mulf %12, %13 : vector<8x8xf32>
    %c0_13 = arith.constant 0 : index
    %c0_14 = arith.constant 0 : index
    %c0_15 = arith.constant 0 : index
    %15 = vector.load %arg5[%c0_13, %c0_14, %c0_15] : memref<4x32x8xbf16, #tpu.memory_space<vmem>>, vector<1x32x8xbf16>
    %16 = vector.shape_cast %15 : vector<1x32x8xbf16> to vector<32x8xbf16>
    %cst_16 = arith.constant dense<0.000000e+00> : vector<8x8xf32>
    %17 = tpu.matmul %2, %16, %cst_16 {dimension_numbers = #tpu.dot_dimension_numbers<[1], [0], [0], [1], [0, 0, 1, 1], [], []>} : vector<8x32xbf16>, vector<32x8xbf16>, vector<8x8xf32> -> vector<8x8xf32>
    %c0_17 = arith.constant 0 : index
    %c0_18 = arith.constant 0 : index
    %c0_19 = arith.constant 0 : index
    %18 = vector.load %arg6[%c0_17, %c0_18, %c0_19] : memref<4x1x8xf32, #tpu.memory_space<vmem>>, vector<1x1x8xf32>
    %19 = vector.shape_cast %18 : vector<1x1x8xf32> to vector<1x8xf32>
    %20 = vector.broadcast %19 : vector<1x8xf32> to vector<8x8xf32>
    %21 = arith.addf %17, %20 : vector<8x8xf32>
    %c0_20 = arith.constant 0 : index
    %c0_21 = arith.constant 0 : index
    %c0_22 = arith.constant 0 : index
    %22 = vector.load %arg7[%c0_20, %c0_21, %c0_22] : memref<4x32x8xbf16, #tpu.memory_space<vmem>>, vector<1x32x8xbf16>
    %23 = vector.shape_cast %22 : vector<1x32x8xbf16> to vector<32x8xbf16>
    %cst_23 = arith.constant dense<0.000000e+00> : vector<8x8xf32>
    %24 = tpu.matmul %2, %23, %cst_23 {dimension_numbers = #tpu.dot_dimension_numbers<[1], [0], [0], [1], [0, 0, 1, 1], [], []>} : vector<8x32xbf16>, vector<32x8xbf16>, vector<8x8xf32> -> vector<8x8xf32>
    %c0_24 = arith.constant 0 : index
    %c0_25 = arith.constant 0 : index
    %c0_26 = arith.constant 0 : index
    %25 = vector.load %arg8[%c0_24, %c0_25, %c0_26] : memref<4x1x8xf32, #tpu.memory_space<vmem>>, vector<1x1x8xf32>
    %26 = vector.shape_cast %25 : vector<1x1x8xf32> to vector<1x8xf32>
    %27 = vector.broadcast %26 : vector<1x8xf32> to vector<8x8xf32>
    %28 = arith.addf %24, %27 : vector<8x8xf32>
    %29 = arith.truncf %14 : vector<8x8xf32> to vector<8x8xbf16>
    %30 = arith.truncf %21 : vector<8x8xf32> to vector<8x8xbf16>
    %cst_27 = arith.constant dense<0.000000e+00> : vector<8x8xf32>
    %31 = tpu.matmul %29, %30, %cst_27 {dimension_numbers = #tpu.dot_dimension_numbers<[1], [1], [0], [0], [0, 0, 1, 0], [], []>} : vector<8x8xbf16>, vector<8x8xbf16>, vector<8x8xf32> -> vector<8x8xf32>
    %32 = arith.addf %31, %4 : vector<8x8xf32>
    %cst_28 = arith.constant dense<0xFF800000> : vector<8xf32>
    %33 = vector.multi_reduction <maximumf>, %32, %cst_28 [1] : vector<8x8xf32> to vector<8xf32>
    %34 = vector.shape_cast %33 : vector<8xf32> to vector<8x1xf32>
    %35 = vector.broadcast %34 : vector<8x1xf32> to vector<8x8xf32>
    %36 = arith.subf %32, %35 : vector<8x8xf32>
    %37 = math.exp %36 : vector<8x8xf32>
    %cst_29 = arith.constant dense<0.000000e+00> : vector<8xf32>
    %38 = vector.multi_reduction <add>, %37, %cst_29 [1] : vector<8x8xf32> to vector<8xf32>
    %39 = vector.shape_cast %38 : vector<8xf32> to vector<8x1xf32>
    %40 = tpu.reciprocal %39 {approx = true} : vector<8x1xf32> -> vector<8x1xf32>
    %41 = vector.broadcast %40 : vector<8x1xf32> to vector<8x8xf32>
    %42 = arith.mulf %37, %41 : vector<8x8xf32>
    %43 = arith.truncf %42 : vector<8x8xf32> to vector<8x8xbf16>
    %44 = arith.truncf %28 : vector<8x8xf32> to vector<8x8xbf16>
    %cst_30 = arith.constant dense<0.000000e+00> : vector<8x8xf32>
    %45 = tpu.matmul %43, %44, %cst_30 {dimension_numbers = #tpu.dot_dimension_numbers<[1], [0], [0], [1], [0, 0, 1, 1], [], []>} : vector<8x8xbf16>, vector<8x8xbf16>, vector<8x8xf32> -> vector<8x8xf32>
    %46 = arith.truncf %45 : vector<8x8xf32> to vector<8x8xbf16>
    %c0_31 = arith.constant 0 : index
    %c0_32 = arith.constant 0 : index
    %c0_33 = arith.constant 0 : index
    %47 = vector.load %arg9[%c0_31, %c0_32, %c0_33] : memref<4x8x32xbf16, #tpu.memory_space<vmem>>, vector<1x8x32xbf16>
    %48 = vector.shape_cast %47 : vector<1x8x32xbf16> to vector<8x32xbf16>
    %cst_34 = arith.constant dense<0.000000e+00> : vector<8x32xf32>
    %49 = tpu.matmul %46, %48, %cst_34 {dimension_numbers = #tpu.dot_dimension_numbers<[1], [0], [0], [1], [0, 0, 1, 1], [], []>} : vector<8x8xbf16>, vector<8x32xbf16>, vector<8x32xf32> -> vector<8x32xf32>
    %50 = arith.addf %5, %49 : vector<8x32xf32>
    %c1 = arith.constant 1 : index
    %c0_35 = arith.constant 0 : index
    %c0_36 = arith.constant 0 : index
    %51 = vector.load %arg3[%c1, %c0_35, %c0_36] : memref<4x32x8xbf16, #tpu.memory_space<vmem>>, vector<1x32x8xbf16>
    %52 = vector.shape_cast %51 : vector<1x32x8xbf16> to vector<32x8xbf16>
    %cst_37 = arith.constant dense<0.000000e+00> : vector<8x8xf32>
    %53 = tpu.matmul %2, %52, %cst_37 {dimension_numbers = #tpu.dot_dimension_numbers<[1], [0], [0], [1], [0, 0, 1, 1], [], []>} : vector<8x32xbf16>, vector<32x8xbf16>, vector<8x8xf32> -> vector<8x8xf32>
    %c1_38 = arith.constant 1 : index
    %c0_39 = arith.constant 0 : index
    %c0_40 = arith.constant 0 : index
    %54 = vector.load %arg4[%c1_38, %c0_39, %c0_40] : memref<4x1x8xf32, #tpu.memory_space<vmem>>, vector<1x1x8xf32>
    %55 = vector.shape_cast %54 : vector<1x1x8xf32> to vector<1x8xf32>
    %56 = vector.broadcast %55 : vector<1x8xf32> to vector<8x8xf32>
    %57 = arith.addf %53, %56 : vector<8x8xf32>
    %cst_41 = arith.constant 0.353553385 : f32
    %58 = vector.broadcast %cst_41 : f32 to vector<8x8xf32>
    %59 = arith.mulf %57, %58 : vector<8x8xf32>
    %c1_42 = arith.constant 1 : index
    %c0_43 = arith.constant 0 : index
    %c0_44 = arith.constant 0 : index
    %60 = vector.load %arg5[%c1_42, %c0_43, %c0_44] : memref<4x32x8xbf16, #tpu.memory_space<vmem>>, vector<1x32x8xbf16>
    %61 = vector.shape_cast %60 : vector<1x32x8xbf16> to vector<32x8xbf16>
    %cst_45 = arith.constant dense<0.000000e+00> : vector<8x8xf32>
    %62 = tpu.matmul %2, %61, %cst_45 {dimension_numbers = #tpu.dot_dimension_numbers<[1], [0], [0], [1], [0, 0, 1, 1], [], []>} : vector<8x32xbf16>, vector<32x8xbf16>, vector<8x8xf32> -> vector<8x8xf32>
    %c1_46 = arith.constant 1 : index
    %c0_47 = arith.constant 0 : index
    %c0_48 = arith.constant 0 : index
    %63 = vector.load %arg6[%c1_46, %c0_47, %c0_48] : memref<4x1x8xf32, #tpu.memory_space<vmem>>, vector<1x1x8xf32>
    %64 = vector.shape_cast %63 : vector<1x1x8xf32> to vector<1x8xf32>
    %65 = vector.broadcast %64 : vector<1x8xf32> to vector<8x8xf32>
    %66 = arith.addf %62, %65 : vector<8x8xf32>
    %c1_49 = arith.constant 1 : index
    %c0_50 = arith.constant 0 : index
    %c0_51 = arith.constant 0 : index
    %67 = vector.load %arg7[%c1_49, %c0_50, %c0_51] : memref<4x32x8xbf16, #tpu.memory_space<vmem>>, vector<1x32x8xbf16>
    %68 = vector.shape_cast %67 : vector<1x32x8xbf16> to vector<32x8xbf16>
    %cst_52 = arith.constant dense<0.000000e+00> : vector<8x8xf32>
    %69 = tpu.matmul %2, %68, %cst_52 {dimension_numbers = #tpu.dot_dimension_numbers<[1], [0], [0], [1], [0, 0, 1, 1], [], []>} : vector<8x32xbf16>, vector<32x8xbf16>, vector<8x8xf32> -> vector<8x8xf32>
    %c1_53 = arith.constant 1 : index
    %c0_54 = arith.constant 0 : index
    %c0_55 = arith.constant 0 : index
    %70 = vector.load %arg8[%c1_53, %c0_54, %c0_55] : memref<4x1x8xf32, #tpu.memory_space<vmem>>, vector<1x1x8xf32>
    %71 = vector.shape_cast %70 : vector<1x1x8xf32> to vector<1x8xf32>
    %72 = vector.broadcast %71 : vector<1x8xf32> to vector<8x8xf32>
    %73 = arith.addf %69, %72 : vector<8x8xf32>
    %74 = arith.truncf %59 : vector<8x8xf32> to vector<8x8xbf16>
    %75 = arith.truncf %66 : vector<8x8xf32> to vector<8x8xbf16>
    %cst_56 = arith.constant dense<0.000000e+00> : vector<8x8xf32>
    %76 = tpu.matmul %74, %75, %cst_56 {dimension_numbers = #tpu.dot_dimension_numbers<[1], [1], [0], [0], [0, 0, 1, 0], [], []>} : vector<8x8xbf16>, vector<8x8xbf16>, vector<8x8xf32> -> vector<8x8xf32>
    %77 = arith.addf %76, %4 : vector<8x8xf32>
    %cst_57 = arith.constant dense<0xFF800000> : vector<8xf32>
    %78 = vector.multi_reduction <maximumf>, %77, %cst_57 [1] : vector<8x8xf32> to vector<8xf32>
    %79 = vector.shape_cast %78 : vector<8xf32> to vector<8x1xf32>
    %80 = vector.broadcast %79 : vector<8x1xf32> to vector<8x8xf32>
    %81 = arith.subf %77, %80 : vector<8x8xf32>
    %82 = math.exp %81 : vector<8x8xf32>
    %cst_58 = arith.constant dense<0.000000e+00> : vector<8xf32>
    %83 = vector.multi_reduction <add>, %82, %cst_58 [1] : vector<8x8xf32> to vector<8xf32>
    %84 = vector.shape_cast %83 : vector<8xf32> to vector<8x1xf32>
    %85 = tpu.reciprocal %84 {approx = true} : vector<8x1xf32> -> vector<8x1xf32>
    %86 = vector.broadcast %85 : vector<8x1xf32> to vector<8x8xf32>
    %87 = arith.mulf %82, %86 : vector<8x8xf32>
    %88 = arith.truncf %87 : vector<8x8xf32> to vector<8x8xbf16>
    %89 = arith.truncf %73 : vector<8x8xf32> to vector<8x8xbf16>
    %cst_59 = arith.constant dense<0.000000e+00> : vector<8x8xf32>
    %90 = tpu.matmul %88, %89, %cst_59 {dimension_numbers = #tpu.dot_dimension_numbers<[1], [0], [0], [1], [0, 0, 1, 1], [], []>} : vector<8x8xbf16>, vector<8x8xbf16>, vector<8x8xf32> -> vector<8x8xf32>
    %91 = arith.truncf %90 : vector<8x8xf32> to vector<8x8xbf16>
    %c1_60 = arith.constant 1 : index
    %c0_61 = arith.constant 0 : index
    %c0_62 = arith.constant 0 : index
    %92 = vector.load %arg9[%c1_60, %c0_61, %c0_62] : memref<4x8x32xbf16, #tpu.memory_space<vmem>>, vector<1x8x32xbf16>
    %93 = vector.shape_cast %92 : vector<1x8x32xbf16> to vector<8x32xbf16>
    %cst_63 = arith.constant dense<0.000000e+00> : vector<8x32xf32>
    %94 = tpu.matmul %91, %93, %cst_63 {dimension_numbers = #tpu.dot_dimension_numbers<[1], [0], [0], [1], [0, 0, 1, 1], [], []>} : vector<8x8xbf16>, vector<8x32xbf16>, vector<8x32xf32> -> vector<8x32xf32>
    %95 = arith.addf %50, %94 : vector<8x32xf32>
    %c2 = arith.constant 2 : index
    %c0_64 = arith.constant 0 : index
    %c0_65 = arith.constant 0 : index
    %96 = vector.load %arg3[%c2, %c0_64, %c0_65] : memref<4x32x8xbf16, #tpu.memory_space<vmem>>, vector<1x32x8xbf16>
    %97 = vector.shape_cast %96 : vector<1x32x8xbf16> to vector<32x8xbf16>
    %cst_66 = arith.constant dense<0.000000e+00> : vector<8x8xf32>
    %98 = tpu.matmul %2, %97, %cst_66 {dimension_numbers = #tpu.dot_dimension_numbers<[1], [0], [0], [1], [0, 0, 1, 1], [], []>} : vector<8x32xbf16>, vector<32x8xbf16>, vector<8x8xf32> -> vector<8x8xf32>
    %c2_67 = arith.constant 2 : index
    %c0_68 = arith.constant 0 : index
    %c0_69 = arith.constant 0 : index
    %99 = vector.load %arg4[%c2_67, %c0_68, %c0_69] : memref<4x1x8xf32, #tpu.memory_space<vmem>>, vector<1x1x8xf32>
    %100 = vector.shape_cast %99 : vector<1x1x8xf32> to vector<1x8xf32>
    %101 = vector.broadcast %100 : vector<1x8xf32> to vector<8x8xf32>
    %102 = arith.addf %98, %101 : vector<8x8xf32>
    %cst_70 = arith.constant 0.353553385 : f32
    %103 = vector.broadcast %cst_70 : f32 to vector<8x8xf32>
    %104 = arith.mulf %102, %103 : vector<8x8xf32>
    %c2_71 = arith.constant 2 : index
    %c0_72 = arith.constant 0 : index
    %c0_73 = arith.constant 0 : index
    %105 = vector.load %arg5[%c2_71, %c0_72, %c0_73] : memref<4x32x8xbf16, #tpu.memory_space<vmem>>, vector<1x32x8xbf16>
    %106 = vector.shape_cast %105 : vector<1x32x8xbf16> to vector<32x8xbf16>
    %cst_74 = arith.constant dense<0.000000e+00> : vector<8x8xf32>
    %107 = tpu.matmul %2, %106, %cst_74 {dimension_numbers = #tpu.dot_dimension_numbers<[1], [0], [0], [1], [0, 0, 1, 1], [], []>} : vector<8x32xbf16>, vector<32x8xbf16>, vector<8x8xf32> -> vector<8x8xf32>
    %c2_75 = arith.constant 2 : index
    %c0_76 = arith.constant 0 : index
    %c0_77 = arith.constant 0 : index
    %108 = vector.load %arg6[%c2_75, %c0_76, %c0_77] : memref<4x1x8xf32, #tpu.memory_space<vmem>>, vector<1x1x8xf32>
    %109 = vector.shape_cast %108 : vector<1x1x8xf32> to vector<1x8xf32>
    %110 = vector.broadcast %109 : vector<1x8xf32> to vector<8x8xf32>
    %111 = arith.addf %107, %110 : vector<8x8xf32>
    %c2_78 = arith.constant 2 : index
    %c0_79 = arith.constant 0 : index
    %c0_80 = arith.constant 0 : index
    %112 = vector.load %arg7[%c2_78, %c0_79, %c0_80] : memref<4x32x8xbf16, #tpu.memory_space<vmem>>, vector<1x32x8xbf16>
    %113 = vector.shape_cast %112 : vector<1x32x8xbf16> to vector<32x8xbf16>
    %cst_81 = arith.constant dense<0.000000e+00> : vector<8x8xf32>
    %114 = tpu.matmul %2, %113, %cst_81 {dimension_numbers = #tpu.dot_dimension_numbers<[1], [0], [0], [1], [0, 0, 1, 1], [], []>} : vector<8x32xbf16>, vector<32x8xbf16>, vector<8x8xf32> -> vector<8x8xf32>
    %c2_82 = arith.constant 2 : index
    %c0_83 = arith.constant 0 : index
    %c0_84 = arith.constant 0 : index
    %115 = vector.load %arg8[%c2_82, %c0_83, %c0_84] : memref<4x1x8xf32, #tpu.memory_space<vmem>>, vector<1x1x8xf32>
    %116 = vector.shape_cast %115 : vector<1x1x8xf32> to vector<1x8xf32>
    %117 = vector.broadcast %116 : vector<1x8xf32> to vector<8x8xf32>
    %118 = arith.addf %114, %117 : vector<8x8xf32>
    %119 = arith.truncf %104 : vector<8x8xf32> to vector<8x8xbf16>
    %120 = arith.truncf %111 : vector<8x8xf32> to vector<8x8xbf16>
    %cst_85 = arith.constant dense<0.000000e+00> : vector<8x8xf32>
    %121 = tpu.matmul %119, %120, %cst_85 {dimension_numbers = #tpu.dot_dimension_numbers<[1], [1], [0], [0], [0, 0, 1, 0], [], []>} : vector<8x8xbf16>, vector<8x8xbf16>, vector<8x8xf32> -> vector<8x8xf32>
    %122 = arith.addf %121, %4 : vector<8x8xf32>
    %cst_86 = arith.constant dense<0xFF800000> : vector<8xf32>
    %123 = vector.multi_reduction <maximumf>, %122, %cst_86 [1] : vector<8x8xf32> to vector<8xf32>
    %124 = vector.shape_cast %123 : vector<8xf32> to vector<8x1xf32>
    %125 = vector.broadcast %124 : vector<8x1xf32> to vector<8x8xf32>
    %126 = arith.subf %122, %125 : vector<8x8xf32>
    %127 = math.exp %126 : vector<8x8xf32>
    %cst_87 = arith.constant dense<0.000000e+00> : vector<8xf32>
    %128 = vector.multi_reduction <add>, %127, %cst_87 [1] : vector<8x8xf32> to vector<8xf32>
    %129 = vector.shape_cast %128 : vector<8xf32> to vector<8x1xf32>
    %130 = tpu.reciprocal %129 {approx = true} : vector<8x1xf32> -> vector<8x1xf32>
    %131 = vector.broadcast %130 : vector<8x1xf32> to vector<8x8xf32>
    %132 = arith.mulf %127, %131 : vector<8x8xf32>
    %133 = arith.truncf %132 : vector<8x8xf32> to vector<8x8xbf16>
    %134 = arith.truncf %118 : vector<8x8xf32> to vector<8x8xbf16>
    %cst_88 = arith.constant dense<0.000000e+00> : vector<8x8xf32>
    %135 = tpu.matmul %133, %134, %cst_88 {dimension_numbers = #tpu.dot_dimension_numbers<[1], [0], [0], [1], [0, 0, 1, 1], [], []>} : vector<8x8xbf16>, vector<8x8xbf16>, vector<8x8xf32> -> vector<8x8xf32>
    %136 = arith.truncf %135 : vector<8x8xf32> to vector<8x8xbf16>
    %c2_89 = arith.constant 2 : index
    %c0_90 = arith.constant 0 : index
    %c0_91 = arith.constant 0 : index
    %137 = vector.load %arg9[%c2_89, %c0_90, %c0_91] : memref<4x8x32xbf16, #tpu.memory_space<vmem>>, vector<1x8x32xbf16>
    %138 = vector.shape_cast %137 : vector<1x8x32xbf16> to vector<8x32xbf16>
    %cst_92 = arith.constant dense<0.000000e+00> : vector<8x32xf32>
    %139 = tpu.matmul %136, %138, %cst_92 {dimension_numbers = #tpu.dot_dimension_numbers<[1], [0], [0], [1], [0, 0, 1, 1], [], []>} : vector<8x8xbf16>, vector<8x32xbf16>, vector<8x32xf32> -> vector<8x32xf32>
    %140 = arith.addf %95, %139 : vector<8x32xf32>
    %c3 = arith.constant 3 : index
    %c0_93 = arith.constant 0 : index
    %c0_94 = arith.constant 0 : index
    %141 = vector.load %arg3[%c3, %c0_93, %c0_94] : memref<4x32x8xbf16, #tpu.memory_space<vmem>>, vector<1x32x8xbf16>
    %142 = vector.shape_cast %141 : vector<1x32x8xbf16> to vector<32x8xbf16>
    %cst_95 = arith.constant dense<0.000000e+00> : vector<8x8xf32>
    %143 = tpu.matmul %2, %142, %cst_95 {dimension_numbers = #tpu.dot_dimension_numbers<[1], [0], [0], [1], [0, 0, 1, 1], [], []>} : vector<8x32xbf16>, vector<32x8xbf16>, vector<8x8xf32> -> vector<8x8xf32>
    %c3_96 = arith.constant 3 : index
    %c0_97 = arith.constant 0 : index
    %c0_98 = arith.constant 0 : index
    %144 = vector.load %arg4[%c3_96, %c0_97, %c0_98] : memref<4x1x8xf32, #tpu.memory_space<vmem>>, vector<1x1x8xf32>
    %145 = vector.shape_cast %144 : vector<1x1x8xf32> to vector<1x8xf32>
    %146 = vector.broadcast %145 : vector<1x8xf32> to vector<8x8xf32>
    %147 = arith.addf %143, %146 : vector<8x8xf32>
    %cst_99 = arith.constant 0.353553385 : f32
    %148 = vector.broadcast %cst_99 : f32 to vector<8x8xf32>
    %149 = arith.mulf %147, %148 : vector<8x8xf32>
    %c3_100 = arith.constant 3 : index
    %c0_101 = arith.constant 0 : index
    %c0_102 = arith.constant 0 : index
    %150 = vector.load %arg5[%c3_100, %c0_101, %c0_102] : memref<4x32x8xbf16, #tpu.memory_space<vmem>>, vector<1x32x8xbf16>
    %151 = vector.shape_cast %150 : vector<1x32x8xbf16> to vector<32x8xbf16>
    %cst_103 = arith.constant dense<0.000000e+00> : vector<8x8xf32>
    %152 = tpu.matmul %2, %151, %cst_103 {dimension_numbers = #tpu.dot_dimension_numbers<[1], [0], [0], [1], [0, 0, 1, 1], [], []>} : vector<8x32xbf16>, vector<32x8xbf16>, vector<8x8xf32> -> vector<8x8xf32>
    %c3_104 = arith.constant 3 : index
    %c0_105 = arith.constant 0 : index
    %c0_106 = arith.constant 0 : index
    %153 = vector.load %arg6[%c3_104, %c0_105, %c0_106] : memref<4x1x8xf32, #tpu.memory_space<vmem>>, vector<1x1x8xf32>
    %154 = vector.shape_cast %153 : vector<1x1x8xf32> to vector<1x8xf32>
    %155 = vector.broadcast %154 : vector<1x8xf32> to vector<8x8xf32>
    %156 = arith.addf %152, %155 : vector<8x8xf32>
    %c3_107 = arith.constant 3 : index
    %c0_108 = arith.constant 0 : index
    %c0_109 = arith.constant 0 : index
    %157 = vector.load %arg7[%c3_107, %c0_108, %c0_109] : memref<4x32x8xbf16, #tpu.memory_space<vmem>>, vector<1x32x8xbf16>
    %158 = vector.shape_cast %157 : vector<1x32x8xbf16> to vector<32x8xbf16>
    %cst_110 = arith.constant dense<0.000000e+00> : vector<8x8xf32>
    %159 = tpu.matmul %2, %158, %cst_110 {dimension_numbers = #tpu.dot_dimension_numbers<[1], [0], [0], [1], [0, 0, 1, 1], [], []>} : vector<8x32xbf16>, vector<32x8xbf16>, vector<8x8xf32> -> vector<8x8xf32>
    %c3_111 = arith.constant 3 : index
    %c0_112 = arith.constant 0 : index
    %c0_113 = arith.constant 0 : index
    %160 = vector.load %arg8[%c3_111, %c0_112, %c0_113] : memref<4x1x8xf32, #tpu.memory_space<vmem>>, vector<1x1x8xf32>
    %161 = vector.shape_cast %160 : vector<1x1x8xf32> to vector<1x8xf32>
    %162 = vector.broadcast %161 : vector<1x8xf32> to vector<8x8xf32>
    %163 = arith.addf %159, %162 : vector<8x8xf32>
    %164 = arith.truncf %149 : vector<8x8xf32> to vector<8x8xbf16>
    %165 = arith.truncf %156 : vector<8x8xf32> to vector<8x8xbf16>
    %cst_114 = arith.constant dense<0.000000e+00> : vector<8x8xf32>
    %166 = tpu.matmul %164, %165, %cst_114 {dimension_numbers = #tpu.dot_dimension_numbers<[1], [1], [0], [0], [0, 0, 1, 0], [], []>} : vector<8x8xbf16>, vector<8x8xbf16>, vector<8x8xf32> -> vector<8x8xf32>
    %167 = arith.addf %166, %4 : vector<8x8xf32>
    %cst_115 = arith.constant dense<0xFF800000> : vector<8xf32>
    %168 = vector.multi_reduction <maximumf>, %167, %cst_115 [1] : vector<8x8xf32> to vector<8xf32>
    %169 = vector.shape_cast %168 : vector<8xf32> to vector<8x1xf32>
    %170 = vector.broadcast %169 : vector<8x1xf32> to vector<8x8xf32>
    %171 = arith.subf %167, %170 : vector<8x8xf32>
    %172 = math.exp %171 : vector<8x8xf32>
    %cst_116 = arith.constant dense<0.000000e+00> : vector<8xf32>
    %173 = vector.multi_reduction <add>, %172, %cst_116 [1] : vector<8x8xf32> to vector<8xf32>
    %174 = vector.shape_cast %173 : vector<8xf32> to vector<8x1xf32>
    %175 = tpu.reciprocal %174 {approx = true} : vector<8x1xf32> -> vector<8x1xf32>
    %176 = vector.broadcast %175 : vector<8x1xf32> to vector<8x8xf32>
    %177 = arith.mulf %172, %176 : vector<8x8xf32>
    %178 = arith.truncf %177 : vector<8x8xf32> to vector<8x8xbf16>
    %179 = arith.truncf %163 : vector<8x8xf32> to vector<8x8xbf16>
    %cst_117 = arith.constant dense<0.000000e+00> : vector<8x8xf32>
    %180 = tpu.matmul %178, %179, %cst_117 {dimension_numbers = #tpu.dot_dimension_numbers<[1], [0], [0], [1], [0, 0, 1, 1], [], []>} : vector<8x8xbf16>, vector<8x8xbf16>, vector<8x8xf32> -> vector<8x8xf32>
    %181 = arith.truncf %180 : vector<8x8xf32> to vector<8x8xbf16>
    %c3_118 = arith.constant 3 : index
    %c0_119 = arith.constant 0 : index
    %c0_120 = arith.constant 0 : index
    %182 = vector.load %arg9[%c3_118, %c0_119, %c0_120] : memref<4x8x32xbf16, #tpu.memory_space<vmem>>, vector<1x8x32xbf16>
    %183 = vector.shape_cast %182 : vector<1x8x32xbf16> to vector<8x32xbf16>
    %cst_121 = arith.constant dense<0.000000e+00> : vector<8x32xf32>
    %184 = tpu.matmul %181, %183, %cst_121 {dimension_numbers = #tpu.dot_dimension_numbers<[1], [0], [0], [1], [0, 0, 1, 1], [], []>} : vector<8x8xbf16>, vector<8x32xbf16>, vector<8x32xf32> -> vector<8x32xf32>
    %185 = arith.addf %140, %184 : vector<8x32xf32>
    %c0_122 = arith.constant 0 : index
    %c0_123 = arith.constant 0 : index
    %186 = vector.load %arg10[%c0_122, %c0_123] : memref<1x32xf32, #tpu.memory_space<vmem>>, vector<1x32xf32>
    %187 = vector.broadcast %186 : vector<1x32xf32> to vector<8x32xf32>
    %188 = arith.addf %185, %187 : vector<8x32xf32>
    %189 = arith.addf %188, %1 : vector<8x32xf32>
    %c0_124 = arith.constant 0 : index
    %c0_125 = arith.constant 0 : index
    %190 = vector.load %arg11[%c0_124, %c0_125] : memref<1x32xf32, #tpu.memory_space<vmem>>, vector<1x32xf32>
    %c0_126 = arith.constant 0 : index
    %c0_127 = arith.constant 0 : index
    %191 = vector.load %arg12[%c0_126, %c0_127] : memref<1x32xf32, #tpu.memory_space<vmem>>, vector<1x32xf32>
    %cst_128 = arith.constant dense<0.000000e+00> : vector<8xf32>
    %192 = vector.multi_reduction <add>, %189, %cst_128 [1] : vector<8x32xf32> to vector<8xf32>
    %193 = vector.shape_cast %192 : vector<8xf32> to vector<8x1xf32>
    %cst_129 = arith.constant 3.200000e+01 : f32
    %194 = vector.broadcast %cst_129 : f32 to vector<8x1xf32>
    %195 = arith.divf %193, %194 : vector<8x1xf32>
    %196 = vector.broadcast %195 : vector<8x1xf32> to vector<8x32xf32>
    %197 = arith.subf %189, %196 : vector<8x32xf32>
    %198 = arith.mulf %197, %197 : vector<8x32xf32>
    %cst_130 = arith.constant dense<0.000000e+00> : vector<8xf32>
    %199 = vector.multi_reduction <add>, %198, %cst_130 [1] : vector<8x32xf32> to vector<8xf32>
    %200 = vector.shape_cast %199 : vector<8xf32> to vector<8x1xf32>
    %cst_131 = arith.constant 3.200000e+01 : f32
    %201 = vector.broadcast %cst_131 : f32 to vector<8x1xf32>
    %202 = arith.divf %200, %201 : vector<8x1xf32>
    %203 = vector.broadcast %195 : vector<8x1xf32> to vector<8x32xf32>
    %204 = arith.subf %189, %203 : vector<8x32xf32>
    %cst_132 = arith.constant 9.99999997E-7 : f32
    %205 = vector.broadcast %cst_132 : f32 to vector<8x1xf32>
    %206 = arith.addf %202, %205 : vector<8x1xf32>
    %207 = math.rsqrt %206 : vector<8x1xf32>
    %208 = vector.broadcast %207 : vector<8x1xf32> to vector<8x32xf32>
    %209 = arith.mulf %204, %208 : vector<8x32xf32>
    %210 = vector.broadcast %190 : vector<1x32xf32> to vector<8x32xf32>
    %211 = arith.mulf %209, %210 : vector<8x32xf32>
    %212 = vector.broadcast %191 : vector<1x32xf32> to vector<8x32xf32>
    %213 = arith.addf %211, %212 : vector<8x32xf32>
    %c0_133 = arith.constant 0 : index
    %c0_134 = arith.constant 0 : index
    %c0_135 = arith.constant 0 : index
    %214 = vector.load %arg13[%c0_133, %c0_134, %c0_135] : memref<1x8x32xf32, #tpu.memory_space<vmem>>, vector<1x8x32xf32>
    %215 = vector.shape_cast %214 : vector<1x8x32xf32> to vector<8x32xf32>
    %216 = vector.shape_cast %213 : vector<8x32xf32> to vector<1x8x32xf32>
    tpu.vector_store %arg13[%c0_133, %c0_134, %c0_135], %216 {strides = array<i32>} : memref<1x8x32xf32, #tpu.memory_space<vmem>>, vector<1x8x32xf32>,
    return
  }
  func.func @transform_0(%arg0: i32) -> (i32, i32, i32) {
    %c0_i32 = arith.constant 0 : i32
    %c0_i32_0 = arith.constant 0 : i32
    %c0_i32_1 = arith.constant 0 : i32
    return %arg0, %c0_i32, %c0_i32_0 : i32, i32, i32
  }
  func.func @transform_1(%arg0: i32) -> (i32, i32, i32) {
    %c0_i32 = arith.constant 0 : i32
    %c0_i32_0 = arith.constant 0 : i32
    %c0_i32_1 = arith.constant 0 : i32
    return %arg0, %c0_i32, %c0_i32_0 : i32, i32, i32
  }
  func.func @transform_2(%arg0: i32) -> (i32, i32, i32) {
    %c0_i32 = arith.constant 0 : i32
    %c0_i32_0 = arith.constant 0 : i32
    %c0_i32_1 = arith.constant 0 : i32
    %c0_i32_2 = arith.constant 0 : i32
    return %c0_i32, %c0_i32_0, %c0_i32_1 : i32, i32, i32
  }
  func.func @transform_3(%arg0: i32) -> (i32, i32, i32) {
    %c0_i32 = arith.constant 0 : i32
    %c0_i32_0 = arith.constant 0 : i32
    %c0_i32_1 = arith.constant 0 : i32
    %c0_i32_2 = arith.constant 0 : i32
    return %c0_i32, %c0_i32_0, %c0_i32_1 : i32, i32, i32
  }
  func.func @transform_4(%arg0: i32) -> (i32, i32, i32) {
    %c0_i32 = arith.constant 0 : i32
    %c0_i32_0 = arith.constant 0 : i32
    %c0_i32_1 = arith.constant 0 : i32
    %c0_i32_2 = arith.constant 0 : i32
    return %c0_i32, %c0_i32_0, %c0_i32_1 : i32, i32, i32
  }
  func.func @transform_5(%arg0: i32) -> (i32, i32, i32) {
    %c0_i32 = arith.constant 0 : i32
    %c0_i32_0 = arith.constant 0 : i32
    %c0_i32_1 = arith.constant 0 : i32
    %c0_i32_2 = arith.constant 0 : i32
    return %c0_i32, %c0_i32_0, %c0_i32_1 : i32, i32, i32
  }
  func.func @transform_6(%arg0: i32) -> (i32, i32, i32) {
    %c0_i32 = arith.constant 0 : i32
    %c0_i32_0 = arith.constant 0 : i32
    %c0_i32_1 = arith.constant 0 : i32
    %c0_i32_2 = arith.constant 0 : i32
    return %c0_i32, %c0_i32_0, %c0_i32_1 : i32, i32, i32
  }
  func.func @transform_7(%arg0: i32) -> (i32, i32, i32) {
    %c0_i32 = arith.constant 0 : i32
    %c0_i32_0 = arith.constant 0 : i32
    %c0_i32_1 = arith.constant 0 : i32
    %c0_i32_2 = arith.constant 0 : i32
    return %c0_i32, %c0_i32_0, %c0_i32_1 : i32, i32, i32
  }
  func.func @transform_8(%arg0: i32) -> (i32, i32, i32) {
    %c0_i32 = arith.constant 0 : i32
    %c0_i32_0 = arith.constant 0 : i32
    %c0_i32_1 = arith.constant 0 : i32
    %c0_i32_2 = arith.constant 0 : i32
    return %c0_i32, %c0_i32_0, %c0_i32_1 : i32, i32, i32
  }
  func.func @transform_9(%arg0: i32) -> (i32, i32) {
    %c0_i32 = arith.constant 0 : i32
    %c0_i32_0 = arith.constant 0 : i32
    %c0_i32_1 = arith.constant 0 : i32
    return %c0_i32, %c0_i32_0 : i32, i32
  }
  func.func @transform_10(%arg0: i32) -> (i32, i32) {
    %c0_i32 = arith.constant 0 : i32
    %c0_i32_0 = arith.constant 0 : i32
    %c0_i32_1 = arith.constant 0 : i32
    return %c0_i32, %c0_i32_0 : i32, i32
  }
  func.func @transform_11(%arg0: i32) -> (i32, i32) {
    %c0_i32 = arith.constant 0 : i32
    %c0_i32_0 = arith.constant 0 : i32
    %c0_i32_1 = arith.constant 0 : i32
    return %c0_i32, %c0_i32_0 : i32, i32
  }
  func.func @transform_12(%arg0: i32) -> (i32, i32, i32) {
    %c0_i32 = arith.constant 0 : i32
    %c0_i32_0 = arith.constant 0 : i32
    %c0_i32_1 = arith.constant 0 : i32
    return %arg0, %c0_i32, %c0_i32_0 : i32, i32, i32
  }
}

module attributes {stable_mosaic.version = 11 : i64} {
  func.func @kernel(%arg0: i32, %arg1: memref<1x8x32xf32, #tpu.memory_space<vmem>>, %arg2: memref<1x12x32xf32, #tpu.memory_space<vmem>>, %arg3: memref<1x1x12xf32, #tpu.memory_space<vmem>>, %arg4: memref<4x32x8xbf16, #tpu.memory_space<vmem>>, %arg5: memref<4x1x8xf32, #tpu.memory_space<vmem>>, %arg6: memref<4x32x8xbf16, #tpu.memory_space<vmem>>, %arg7: memref<4x1x8xf32, #tpu.memory_space<vmem>>, %arg8: memref<4x32x8xbf16, #tpu.memory_space<vmem>>, %arg9: memref<4x1x8xf32, #tpu.memory_space<vmem>>, %arg10: memref<4x8x32xbf16, #tpu.memory_space<vmem>>, %arg11: memref<1x32xf32, #tpu.memory_space<vmem>>, %arg12: memref<1x32xf32, #tpu.memory_space<vmem>>, %arg13: memref<1x32xf32, #tpu.memory_space<vmem>>, %arg14: memref<1x8x32xf32, #tpu.memory_space<vmem>>, %arg15: memref<1x8x12xf32, #tpu.memory_space<vmem>>) attributes {dimension_semantics = [#tpu.dimension_semantics<parallel>], iteration_bounds = array<i64: 2>, scalar_prefetch = 0 : i64, scratch_operands = 0 : i64, tpu.core_type = #tpu.core_type<tc>, window_params = [{transform_indices = @transform_0, window_bounds = array<i64: 1, 8, 32>}, {transform_indices = @transform_1, window_bounds = array<i64: 1, 12, 32>}, {transform_indices = @transform_2, window_bounds = array<i64: 1, 1, 12>}, {pipeline_mode = #tpu.pipeline_mode<synchronous>, transform_indices = @transform_3, window_bounds = array<i64: 4, 32, 8>}, {pipeline_mode = #tpu.pipeline_mode<synchronous>, transform_indices = @transform_4, window_bounds = array<i64: 4, 1, 8>}, {pipeline_mode = #tpu.pipeline_mode<synchronous>, transform_indices = @transform_5, window_bounds = array<i64: 4, 32, 8>}, {pipeline_mode = #tpu.pipeline_mode<synchronous>, transform_indices = @transform_6, window_bounds = array<i64: 4, 1, 8>}, {pipeline_mode = #tpu.pipeline_mode<synchronous>, transform_indices = @transform_7, window_bounds = array<i64: 4, 32, 8>}, {pipeline_mode = #tpu.pipeline_mode<synchronous>, transform_indices = @transform_8, window_bounds = array<i64: 4, 1, 8>}, {pipeline_mode = #tpu.pipeline_mode<synchronous>, transform_indices = @transform_9, window_bounds = array<i64: 4, 8, 32>}, {pipeline_mode = #tpu.pipeline_mode<synchronous>, transform_indices = @transform_10, window_bounds = array<i64: 1, 32>}, {pipeline_mode = #tpu.pipeline_mode<synchronous>, transform_indices = @transform_11, window_bounds = array<i64: 1, 32>}, {pipeline_mode = #tpu.pipeline_mode<synchronous>, transform_indices = @transform_12, window_bounds = array<i64: 1, 32>}, {transform_indices = @transform_13, window_bounds = array<i64: 1, 8, 32>}, {transform_indices = @transform_14, window_bounds = array<i64: 1, 8, 12>}]} {
    %c0 = arith.constant 0 : index
    %c0_0 = arith.constant 0 : index
    %c0_1 = arith.constant 0 : index
    %0 = vector.load %arg1[%c0, %c0_0, %c0_1] : memref<1x8x32xf32, #tpu.memory_space<vmem>>, vector<1x8x32xf32>
    %1 = vector.shape_cast %0 : vector<1x8x32xf32> to vector<8x32xf32>
    %c0_2 = arith.constant 0 : index
    %c0_3 = arith.constant 0 : index
    %c0_4 = arith.constant 0 : index
    %2 = vector.load %arg2[%c0_2, %c0_3, %c0_4] : memref<1x12x32xf32, #tpu.memory_space<vmem>>, vector<1x12x32xf32>
    %3 = vector.shape_cast %2 : vector<1x12x32xf32> to vector<12x32xf32>
    %4 = arith.truncf %1 : vector<8x32xf32> to vector<8x32xbf16>
    %5 = arith.truncf %3 : vector<12x32xf32> to vector<12x32xbf16>
    %c0_5 = arith.constant 0 : index
    %c0_6 = arith.constant 0 : index
    %c0_7 = arith.constant 0 : index
    %6 = vector.load %arg3[%c0_5, %c0_6, %c0_7] : memref<1x1x12xf32, #tpu.memory_space<vmem>>, vector<1x1x12xf32>
    %7 = vector.shape_cast %6 : vector<1x1x12xf32> to vector<1x12xf32>
    %cst = arith.constant 0.000000e+00 : f32
    %8 = vector.broadcast %cst : f32 to vector<8x32xf32>
    %c0_8 = arith.constant 0 : index
    %c0_9 = arith.constant 0 : index
    %c0_10 = arith.constant 0 : index
    %9 = vector.load %arg4[%c0_8, %c0_9, %c0_10] : memref<4x32x8xbf16, #tpu.memory_space<vmem>>, vector<1x32x8xbf16>
    %10 = vector.shape_cast %9 : vector<1x32x8xbf16> to vector<32x8xbf16>
    %cst_11 = arith.constant dense<0.000000e+00> : vector<8x8xf32>
    %11 = tpu.matmul %4, %10, %cst_11 {dimension_numbers = #tpu.dot_dimension_numbers<[1], [0], [0], [1], [0, 0, 1, 1], [], []>} : vector<8x32xbf16>, vector<32x8xbf16>, vector<8x8xf32> -> vector<8x8xf32>
    %c0_12 = arith.constant 0 : index
    %c0_13 = arith.constant 0 : index
    %c0_14 = arith.constant 0 : index
    %12 = vector.load %arg5[%c0_12, %c0_13, %c0_14] : memref<4x1x8xf32, #tpu.memory_space<vmem>>, vector<1x1x8xf32>
    %13 = vector.shape_cast %12 : vector<1x1x8xf32> to vector<1x8xf32>
    %14 = vector.broadcast %13 : vector<1x8xf32> to vector<8x8xf32>
    %15 = arith.addf %11, %14 : vector<8x8xf32>
    %cst_15 = arith.constant 0.353553385 : f32
    %16 = vector.broadcast %cst_15 : f32 to vector<8x8xf32>
    %17 = arith.mulf %15, %16 : vector<8x8xf32>
    %c0_16 = arith.constant 0 : index
    %c0_17 = arith.constant 0 : index
    %c0_18 = arith.constant 0 : index
    %18 = vector.load %arg6[%c0_16, %c0_17, %c0_18] : memref<4x32x8xbf16, #tpu.memory_space<vmem>>, vector<1x32x8xbf16>
    %19 = vector.shape_cast %18 : vector<1x32x8xbf16> to vector<32x8xbf16>
    %cst_19 = arith.constant dense<0.000000e+00> : vector<12x8xf32>
    %20 = tpu.matmul %5, %19, %cst_19 {dimension_numbers = #tpu.dot_dimension_numbers<[1], [0], [0], [1], [0, 0, 1, 1], [], []>} : vector<12x32xbf16>, vector<32x8xbf16>, vector<12x8xf32> -> vector<12x8xf32>
    %c0_20 = arith.constant 0 : index
    %c0_21 = arith.constant 0 : index
    %c0_22 = arith.constant 0 : index
    %21 = vector.load %arg7[%c0_20, %c0_21, %c0_22] : memref<4x1x8xf32, #tpu.memory_space<vmem>>, vector<1x1x8xf32>
    %22 = vector.shape_cast %21 : vector<1x1x8xf32> to vector<1x8xf32>
    %23 = vector.broadcast %22 : vector<1x8xf32> to vector<12x8xf32>
    %24 = arith.addf %20, %23 : vector<12x8xf32>
    %c0_23 = arith.constant 0 : index
    %c0_24 = arith.constant 0 : index
    %c0_25 = arith.constant 0 : index
    %25 = vector.load %arg8[%c0_23, %c0_24, %c0_25] : memref<4x32x8xbf16, #tpu.memory_space<vmem>>, vector<1x32x8xbf16>
    %26 = vector.shape_cast %25 : vector<1x32x8xbf16> to vector<32x8xbf16>
    %cst_26 = arith.constant dense<0.000000e+00> : vector<12x8xf32>
    %27 = tpu.matmul %5, %26, %cst_26 {dimension_numbers = #tpu.dot_dimension_numbers<[1], [0], [0], [1], [0, 0, 1, 1], [], []>} : vector<12x32xbf16>, vector<32x8xbf16>, vector<12x8xf32> -> vector<12x8xf32>
    %c0_27 = arith.constant 0 : index
    %c0_28 = arith.constant 0 : index
    %c0_29 = arith.constant 0 : index
    %28 = vector.load %arg9[%c0_27, %c0_28, %c0_29] : memref<4x1x8xf32, #tpu.memory_space<vmem>>, vector<1x1x8xf32>
    %29 = vector.shape_cast %28 : vector<1x1x8xf32> to vector<1x8xf32>
    %30 = vector.broadcast %29 : vector<1x8xf32> to vector<12x8xf32>
    %31 = arith.addf %27, %30 : vector<12x8xf32>
    %32 = arith.truncf %17 : vector<8x8xf32> to vector<8x8xbf16>
    %33 = arith.truncf %24 : vector<12x8xf32> to vector<12x8xbf16>
    %cst_30 = arith.constant dense<0.000000e+00> : vector<8x12xf32>
    %34 = tpu.matmul %32, %33, %cst_30 {dimension_numbers = #tpu.dot_dimension_numbers<[1], [1], [0], [0], [0, 0, 1, 0], [], []>} : vector<8x8xbf16>, vector<12x8xbf16>, vector<8x12xf32> -> vector<8x12xf32>
    %35 = vector.broadcast %7 : vector<1x12xf32> to vector<8x12xf32>
    %36 = arith.addf %34, %35 : vector<8x12xf32>
    %cst_31 = arith.constant dense<0xFF800000> : vector<8xf32>
    %37 = vector.multi_reduction <maximumf>, %36, %cst_31 [1] : vector<8x12xf32> to vector<8xf32>
    %38 = vector.shape_cast %37 : vector<8xf32> to vector<8x1xf32>
    %39 = vector.broadcast %38 : vector<8x1xf32> to vector<8x12xf32>
    %40 = arith.subf %36, %39 : vector<8x12xf32>
    %41 = math.exp %40 : vector<8x12xf32>
    %cst_32 = arith.constant dense<0.000000e+00> : vector<8xf32>
    %42 = vector.multi_reduction <add>, %41, %cst_32 [1] : vector<8x12xf32> to vector<8xf32>
    %43 = vector.shape_cast %42 : vector<8xf32> to vector<8x1xf32>
    %44 = tpu.reciprocal %43 {approx = true} : vector<8x1xf32> -> vector<8x1xf32>
    %45 = vector.broadcast %44 : vector<8x1xf32> to vector<8x12xf32>
    %46 = arith.mulf %41, %45 : vector<8x12xf32>
    %47 = arith.truncf %46 : vector<8x12xf32> to vector<8x12xbf16>
    %48 = arith.truncf %31 : vector<12x8xf32> to vector<12x8xbf16>
    %cst_33 = arith.constant dense<0.000000e+00> : vector<8x8xf32>
    %49 = tpu.matmul %47, %48, %cst_33 {dimension_numbers = #tpu.dot_dimension_numbers<[1], [0], [0], [1], [0, 0, 1, 1], [], []>} : vector<8x12xbf16>, vector<12x8xbf16>, vector<8x8xf32> -> vector<8x8xf32>
    %c0_34 = arith.constant 0 : index
    %c0_35 = arith.constant 0 : index
    %c0_36 = arith.constant 0 : index
    %50 = vector.load %arg15[%c0_34, %c0_35, %c0_36] : memref<1x8x12xf32, #tpu.memory_space<vmem>>, vector<1x8x12xf32>
    %51 = vector.shape_cast %50 : vector<1x8x12xf32> to vector<8x12xf32>
    %52 = vector.shape_cast %46 : vector<8x12xf32> to vector<1x8x12xf32>
    tpu.vector_store %arg15[%c0_34, %c0_35, %c0_36], %52 {strides = array<i32>} : memref<1x8x12xf32, #tpu.memory_space<vmem>>, vector<1x8x12xf32>,
    %53 = arith.truncf %49 : vector<8x8xf32> to vector<8x8xbf16>
    %c0_37 = arith.constant 0 : index
    %c0_38 = arith.constant 0 : index
    %c0_39 = arith.constant 0 : index
    %54 = vector.load %arg10[%c0_37, %c0_38, %c0_39] : memref<4x8x32xbf16, #tpu.memory_space<vmem>>, vector<1x8x32xbf16>
    %55 = vector.shape_cast %54 : vector<1x8x32xbf16> to vector<8x32xbf16>
    %cst_40 = arith.constant dense<0.000000e+00> : vector<8x32xf32>
    %56 = tpu.matmul %53, %55, %cst_40 {dimension_numbers = #tpu.dot_dimension_numbers<[1], [0], [0], [1], [0, 0, 1, 1], [], []>} : vector<8x8xbf16>, vector<8x32xbf16>, vector<8x32xf32> -> vector<8x32xf32>
    %57 = arith.addf %8, %56 : vector<8x32xf32>
    %c1 = arith.constant 1 : index
    %c0_41 = arith.constant 0 : index
    %c0_42 = arith.constant 0 : index
    %58 = vector.load %arg4[%c1, %c0_41, %c0_42] : memref<4x32x8xbf16, #tpu.memory_space<vmem>>, vector<1x32x8xbf16>
    %59 = vector.shape_cast %58 : vector<1x32x8xbf16> to vector<32x8xbf16>
    %cst_43 = arith.constant dense<0.000000e+00> : vector<8x8xf32>
    %60 = tpu.matmul %4, %59, %cst_43 {dimension_numbers = #tpu.dot_dimension_numbers<[1], [0], [0], [1], [0, 0, 1, 1], [], []>} : vector<8x32xbf16>, vector<32x8xbf16>, vector<8x8xf32> -> vector<8x8xf32>
    %c1_44 = arith.constant 1 : index
    %c0_45 = arith.constant 0 : index
    %c0_46 = arith.constant 0 : index
    %61 = vector.load %arg5[%c1_44, %c0_45, %c0_46] : memref<4x1x8xf32, #tpu.memory_space<vmem>>, vector<1x1x8xf32>
    %62 = vector.shape_cast %61 : vector<1x1x8xf32> to vector<1x8xf32>
    %63 = vector.broadcast %62 : vector<1x8xf32> to vector<8x8xf32>
    %64 = arith.addf %60, %63 : vector<8x8xf32>
    %cst_47 = arith.constant 0.353553385 : f32
    %65 = vector.broadcast %cst_47 : f32 to vector<8x8xf32>
    %66 = arith.mulf %64, %65 : vector<8x8xf32>
    %c1_48 = arith.constant 1 : index
    %c0_49 = arith.constant 0 : index
    %c0_50 = arith.constant 0 : index
    %67 = vector.load %arg6[%c1_48, %c0_49, %c0_50] : memref<4x32x8xbf16, #tpu.memory_space<vmem>>, vector<1x32x8xbf16>
    %68 = vector.shape_cast %67 : vector<1x32x8xbf16> to vector<32x8xbf16>
    %cst_51 = arith.constant dense<0.000000e+00> : vector<12x8xf32>
    %69 = tpu.matmul %5, %68, %cst_51 {dimension_numbers = #tpu.dot_dimension_numbers<[1], [0], [0], [1], [0, 0, 1, 1], [], []>} : vector<12x32xbf16>, vector<32x8xbf16>, vector<12x8xf32> -> vector<12x8xf32>
    %c1_52 = arith.constant 1 : index
    %c0_53 = arith.constant 0 : index
    %c0_54 = arith.constant 0 : index
    %70 = vector.load %arg7[%c1_52, %c0_53, %c0_54] : memref<4x1x8xf32, #tpu.memory_space<vmem>>, vector<1x1x8xf32>
    %71 = vector.shape_cast %70 : vector<1x1x8xf32> to vector<1x8xf32>
    %72 = vector.broadcast %71 : vector<1x8xf32> to vector<12x8xf32>
    %73 = arith.addf %69, %72 : vector<12x8xf32>
    %c1_55 = arith.constant 1 : index
    %c0_56 = arith.constant 0 : index
    %c0_57 = arith.constant 0 : index
    %74 = vector.load %arg8[%c1_55, %c0_56, %c0_57] : memref<4x32x8xbf16, #tpu.memory_space<vmem>>, vector<1x32x8xbf16>
    %75 = vector.shape_cast %74 : vector<1x32x8xbf16> to vector<32x8xbf16>
    %cst_58 = arith.constant dense<0.000000e+00> : vector<12x8xf32>
    %76 = tpu.matmul %5, %75, %cst_58 {dimension_numbers = #tpu.dot_dimension_numbers<[1], [0], [0], [1], [0, 0, 1, 1], [], []>} : vector<12x32xbf16>, vector<32x8xbf16>, vector<12x8xf32> -> vector<12x8xf32>
    %c1_59 = arith.constant 1 : index
    %c0_60 = arith.constant 0 : index
    %c0_61 = arith.constant 0 : index
    %77 = vector.load %arg9[%c1_59, %c0_60, %c0_61] : memref<4x1x8xf32, #tpu.memory_space<vmem>>, vector<1x1x8xf32>
    %78 = vector.shape_cast %77 : vector<1x1x8xf32> to vector<1x8xf32>
    %79 = vector.broadcast %78 : vector<1x8xf32> to vector<12x8xf32>
    %80 = arith.addf %76, %79 : vector<12x8xf32>
    %81 = arith.truncf %66 : vector<8x8xf32> to vector<8x8xbf16>
    %82 = arith.truncf %73 : vector<12x8xf32> to vector<12x8xbf16>
    %cst_62 = arith.constant dense<0.000000e+00> : vector<8x12xf32>
    %83 = tpu.matmul %81, %82, %cst_62 {dimension_numbers = #tpu.dot_dimension_numbers<[1], [1], [0], [0], [0, 0, 1, 0], [], []>} : vector<8x8xbf16>, vector<12x8xbf16>, vector<8x12xf32> -> vector<8x12xf32>
    %84 = vector.broadcast %7 : vector<1x12xf32> to vector<8x12xf32>
    %85 = arith.addf %83, %84 : vector<8x12xf32>
    %cst_63 = arith.constant dense<0xFF800000> : vector<8xf32>
    %86 = vector.multi_reduction <maximumf>, %85, %cst_63 [1] : vector<8x12xf32> to vector<8xf32>
    %87 = vector.shape_cast %86 : vector<8xf32> to vector<8x1xf32>
    %88 = vector.broadcast %87 : vector<8x1xf32> to vector<8x12xf32>
    %89 = arith.subf %85, %88 : vector<8x12xf32>
    %90 = math.exp %89 : vector<8x12xf32>
    %cst_64 = arith.constant dense<0.000000e+00> : vector<8xf32>
    %91 = vector.multi_reduction <add>, %90, %cst_64 [1] : vector<8x12xf32> to vector<8xf32>
    %92 = vector.shape_cast %91 : vector<8xf32> to vector<8x1xf32>
    %93 = tpu.reciprocal %92 {approx = true} : vector<8x1xf32> -> vector<8x1xf32>
    %94 = vector.broadcast %93 : vector<8x1xf32> to vector<8x12xf32>
    %95 = arith.mulf %90, %94 : vector<8x12xf32>
    %96 = arith.truncf %95 : vector<8x12xf32> to vector<8x12xbf16>
    %97 = arith.truncf %80 : vector<12x8xf32> to vector<12x8xbf16>
    %cst_65 = arith.constant dense<0.000000e+00> : vector<8x8xf32>
    %98 = tpu.matmul %96, %97, %cst_65 {dimension_numbers = #tpu.dot_dimension_numbers<[1], [0], [0], [1], [0, 0, 1, 1], [], []>} : vector<8x12xbf16>, vector<12x8xbf16>, vector<8x8xf32> -> vector<8x8xf32>
    %99 = arith.truncf %98 : vector<8x8xf32> to vector<8x8xbf16>
    %c1_66 = arith.constant 1 : index
    %c0_67 = arith.constant 0 : index
    %c0_68 = arith.constant 0 : index
    %100 = vector.load %arg10[%c1_66, %c0_67, %c0_68] : memref<4x8x32xbf16, #tpu.memory_space<vmem>>, vector<1x8x32xbf16>
    %101 = vector.shape_cast %100 : vector<1x8x32xbf16> to vector<8x32xbf16>
    %cst_69 = arith.constant dense<0.000000e+00> : vector<8x32xf32>
    %102 = tpu.matmul %99, %101, %cst_69 {dimension_numbers = #tpu.dot_dimension_numbers<[1], [0], [0], [1], [0, 0, 1, 1], [], []>} : vector<8x8xbf16>, vector<8x32xbf16>, vector<8x32xf32> -> vector<8x32xf32>
    %103 = arith.addf %57, %102 : vector<8x32xf32>
    %c2 = arith.constant 2 : index
    %c0_70 = arith.constant 0 : index
    %c0_71 = arith.constant 0 : index
    %104 = vector.load %arg4[%c2, %c0_70, %c0_71] : memref<4x32x8xbf16, #tpu.memory_space<vmem>>, vector<1x32x8xbf16>
    %105 = vector.shape_cast %104 : vector<1x32x8xbf16> to vector<32x8xbf16>
    %cst_72 = arith.constant dense<0.000000e+00> : vector<8x8xf32>
    %106 = tpu.matmul %4, %105, %cst_72 {dimension_numbers = #tpu.dot_dimension_numbers<[1], [0], [0], [1], [0, 0, 1, 1], [], []>} : vector<8x32xbf16>, vector<32x8xbf16>, vector<8x8xf32> -> vector<8x8xf32>
    %c2_73 = arith.constant 2 : index
    %c0_74 = arith.constant 0 : index
    %c0_75 = arith.constant 0 : index
    %107 = vector.load %arg5[%c2_73, %c0_74, %c0_75] : memref<4x1x8xf32, #tpu.memory_space<vmem>>, vector<1x1x8xf32>
    %108 = vector.shape_cast %107 : vector<1x1x8xf32> to vector<1x8xf32>
    %109 = vector.broadcast %108 : vector<1x8xf32> to vector<8x8xf32>
    %110 = arith.addf %106, %109 : vector<8x8xf32>
    %cst_76 = arith.constant 0.353553385 : f32
    %111 = vector.broadcast %cst_76 : f32 to vector<8x8xf32>
    %112 = arith.mulf %110, %111 : vector<8x8xf32>
    %c2_77 = arith.constant 2 : index
    %c0_78 = arith.constant 0 : index
    %c0_79 = arith.constant 0 : index
    %113 = vector.load %arg6[%c2_77, %c0_78, %c0_79] : memref<4x32x8xbf16, #tpu.memory_space<vmem>>, vector<1x32x8xbf16>
    %114 = vector.shape_cast %113 : vector<1x32x8xbf16> to vector<32x8xbf16>
    %cst_80 = arith.constant dense<0.000000e+00> : vector<12x8xf32>
    %115 = tpu.matmul %5, %114, %cst_80 {dimension_numbers = #tpu.dot_dimension_numbers<[1], [0], [0], [1], [0, 0, 1, 1], [], []>} : vector<12x32xbf16>, vector<32x8xbf16>, vector<12x8xf32> -> vector<12x8xf32>
    %c2_81 = arith.constant 2 : index
    %c0_82 = arith.constant 0 : index
    %c0_83 = arith.constant 0 : index
    %116 = vector.load %arg7[%c2_81, %c0_82, %c0_83] : memref<4x1x8xf32, #tpu.memory_space<vmem>>, vector<1x1x8xf32>
    %117 = vector.shape_cast %116 : vector<1x1x8xf32> to vector<1x8xf32>
    %118 = vector.broadcast %117 : vector<1x8xf32> to vector<12x8xf32>
    %119 = arith.addf %115, %118 : vector<12x8xf32>
    %c2_84 = arith.constant 2 : index
    %c0_85 = arith.constant 0 : index
    %c0_86 = arith.constant 0 : index
    %120 = vector.load %arg8[%c2_84, %c0_85, %c0_86] : memref<4x32x8xbf16, #tpu.memory_space<vmem>>, vector<1x32x8xbf16>
    %121 = vector.shape_cast %120 : vector<1x32x8xbf16> to vector<32x8xbf16>
    %cst_87 = arith.constant dense<0.000000e+00> : vector<12x8xf32>
    %122 = tpu.matmul %5, %121, %cst_87 {dimension_numbers = #tpu.dot_dimension_numbers<[1], [0], [0], [1], [0, 0, 1, 1], [], []>} : vector<12x32xbf16>, vector<32x8xbf16>, vector<12x8xf32> -> vector<12x8xf32>
    %c2_88 = arith.constant 2 : index
    %c0_89 = arith.constant 0 : index
    %c0_90 = arith.constant 0 : index
    %123 = vector.load %arg9[%c2_88, %c0_89, %c0_90] : memref<4x1x8xf32, #tpu.memory_space<vmem>>, vector<1x1x8xf32>
    %124 = vector.shape_cast %123 : vector<1x1x8xf32> to vector<1x8xf32>
    %125 = vector.broadcast %124 : vector<1x8xf32> to vector<12x8xf32>
    %126 = arith.addf %122, %125 : vector<12x8xf32>
    %127 = arith.truncf %112 : vector<8x8xf32> to vector<8x8xbf16>
    %128 = arith.truncf %119 : vector<12x8xf32> to vector<12x8xbf16>
    %cst_91 = arith.constant dense<0.000000e+00> : vector<8x12xf32>
    %129 = tpu.matmul %127, %128, %cst_91 {dimension_numbers = #tpu.dot_dimension_numbers<[1], [1], [0], [0], [0, 0, 1, 0], [], []>} : vector<8x8xbf16>, vector<12x8xbf16>, vector<8x12xf32> -> vector<8x12xf32>
    %130 = vector.broadcast %7 : vector<1x12xf32> to vector<8x12xf32>
    %131 = arith.addf %129, %130 : vector<8x12xf32>
    %cst_92 = arith.constant dense<0xFF800000> : vector<8xf32>
    %132 = vector.multi_reduction <maximumf>, %131, %cst_92 [1] : vector<8x12xf32> to vector<8xf32>
    %133 = vector.shape_cast %132 : vector<8xf32> to vector<8x1xf32>
    %134 = vector.broadcast %133 : vector<8x1xf32> to vector<8x12xf32>
    %135 = arith.subf %131, %134 : vector<8x12xf32>
    %136 = math.exp %135 : vector<8x12xf32>
    %cst_93 = arith.constant dense<0.000000e+00> : vector<8xf32>
    %137 = vector.multi_reduction <add>, %136, %cst_93 [1] : vector<8x12xf32> to vector<8xf32>
    %138 = vector.shape_cast %137 : vector<8xf32> to vector<8x1xf32>
    %139 = tpu.reciprocal %138 {approx = true} : vector<8x1xf32> -> vector<8x1xf32>
    %140 = vector.broadcast %139 : vector<8x1xf32> to vector<8x12xf32>
    %141 = arith.mulf %136, %140 : vector<8x12xf32>
    %142 = arith.truncf %141 : vector<8x12xf32> to vector<8x12xbf16>
    %143 = arith.truncf %126 : vector<12x8xf32> to vector<12x8xbf16>
    %cst_94 = arith.constant dense<0.000000e+00> : vector<8x8xf32>
    %144 = tpu.matmul %142, %143, %cst_94 {dimension_numbers = #tpu.dot_dimension_numbers<[1], [0], [0], [1], [0, 0, 1, 1], [], []>} : vector<8x12xbf16>, vector<12x8xbf16>, vector<8x8xf32> -> vector<8x8xf32>
    %145 = arith.truncf %144 : vector<8x8xf32> to vector<8x8xbf16>
    %c2_95 = arith.constant 2 : index
    %c0_96 = arith.constant 0 : index
    %c0_97 = arith.constant 0 : index
    %146 = vector.load %arg10[%c2_95, %c0_96, %c0_97] : memref<4x8x32xbf16, #tpu.memory_space<vmem>>, vector<1x8x32xbf16>
    %147 = vector.shape_cast %146 : vector<1x8x32xbf16> to vector<8x32xbf16>
    %cst_98 = arith.constant dense<0.000000e+00> : vector<8x32xf32>
    %148 = tpu.matmul %145, %147, %cst_98 {dimension_numbers = #tpu.dot_dimension_numbers<[1], [0], [0], [1], [0, 0, 1, 1], [], []>} : vector<8x8xbf16>, vector<8x32xbf16>, vector<8x32xf32> -> vector<8x32xf32>
    %149 = arith.addf %103, %148 : vector<8x32xf32>
    %c3 = arith.constant 3 : index
    %c0_99 = arith.constant 0 : index
    %c0_100 = arith.constant 0 : index
    %150 = vector.load %arg4[%c3, %c0_99, %c0_100] : memref<4x32x8xbf16, #tpu.memory_space<vmem>>, vector<1x32x8xbf16>
    %151 = vector.shape_cast %150 : vector<1x32x8xbf16> to vector<32x8xbf16>
    %cst_101 = arith.constant dense<0.000000e+00> : vector<8x8xf32>
    %152 = tpu.matmul %4, %151, %cst_101 {dimension_numbers = #tpu.dot_dimension_numbers<[1], [0], [0], [1], [0, 0, 1, 1], [], []>} : vector<8x32xbf16>, vector<32x8xbf16>, vector<8x8xf32> -> vector<8x8xf32>
    %c3_102 = arith.constant 3 : index
    %c0_103 = arith.constant 0 : index
    %c0_104 = arith.constant 0 : index
    %153 = vector.load %arg5[%c3_102, %c0_103, %c0_104] : memref<4x1x8xf32, #tpu.memory_space<vmem>>, vector<1x1x8xf32>
    %154 = vector.shape_cast %153 : vector<1x1x8xf32> to vector<1x8xf32>
    %155 = vector.broadcast %154 : vector<1x8xf32> to vector<8x8xf32>
    %156 = arith.addf %152, %155 : vector<8x8xf32>
    %cst_105 = arith.constant 0.353553385 : f32
    %157 = vector.broadcast %cst_105 : f32 to vector<8x8xf32>
    %158 = arith.mulf %156, %157 : vector<8x8xf32>
    %c3_106 = arith.constant 3 : index
    %c0_107 = arith.constant 0 : index
    %c0_108 = arith.constant 0 : index
    %159 = vector.load %arg6[%c3_106, %c0_107, %c0_108] : memref<4x32x8xbf16, #tpu.memory_space<vmem>>, vector<1x32x8xbf16>
    %160 = vector.shape_cast %159 : vector<1x32x8xbf16> to vector<32x8xbf16>
    %cst_109 = arith.constant dense<0.000000e+00> : vector<12x8xf32>
    %161 = tpu.matmul %5, %160, %cst_109 {dimension_numbers = #tpu.dot_dimension_numbers<[1], [0], [0], [1], [0, 0, 1, 1], [], []>} : vector<12x32xbf16>, vector<32x8xbf16>, vector<12x8xf32> -> vector<12x8xf32>
    %c3_110 = arith.constant 3 : index
    %c0_111 = arith.constant 0 : index
    %c0_112 = arith.constant 0 : index
    %162 = vector.load %arg7[%c3_110, %c0_111, %c0_112] : memref<4x1x8xf32, #tpu.memory_space<vmem>>, vector<1x1x8xf32>
    %163 = vector.shape_cast %162 : vector<1x1x8xf32> to vector<1x8xf32>
    %164 = vector.broadcast %163 : vector<1x8xf32> to vector<12x8xf32>
    %165 = arith.addf %161, %164 : vector<12x8xf32>
    %c3_113 = arith.constant 3 : index
    %c0_114 = arith.constant 0 : index
    %c0_115 = arith.constant 0 : index
    %166 = vector.load %arg8[%c3_113, %c0_114, %c0_115] : memref<4x32x8xbf16, #tpu.memory_space<vmem>>, vector<1x32x8xbf16>
    %167 = vector.shape_cast %166 : vector<1x32x8xbf16> to vector<32x8xbf16>
    %cst_116 = arith.constant dense<0.000000e+00> : vector<12x8xf32>
    %168 = tpu.matmul %5, %167, %cst_116 {dimension_numbers = #tpu.dot_dimension_numbers<[1], [0], [0], [1], [0, 0, 1, 1], [], []>} : vector<12x32xbf16>, vector<32x8xbf16>, vector<12x8xf32> -> vector<12x8xf32>
    %c3_117 = arith.constant 3 : index
    %c0_118 = arith.constant 0 : index
    %c0_119 = arith.constant 0 : index
    %169 = vector.load %arg9[%c3_117, %c0_118, %c0_119] : memref<4x1x8xf32, #tpu.memory_space<vmem>>, vector<1x1x8xf32>
    %170 = vector.shape_cast %169 : vector<1x1x8xf32> to vector<1x8xf32>
    %171 = vector.broadcast %170 : vector<1x8xf32> to vector<12x8xf32>
    %172 = arith.addf %168, %171 : vector<12x8xf32>
    %173 = arith.truncf %158 : vector<8x8xf32> to vector<8x8xbf16>
    %174 = arith.truncf %165 : vector<12x8xf32> to vector<12x8xbf16>
    %cst_120 = arith.constant dense<0.000000e+00> : vector<8x12xf32>
    %175 = tpu.matmul %173, %174, %cst_120 {dimension_numbers = #tpu.dot_dimension_numbers<[1], [1], [0], [0], [0, 0, 1, 0], [], []>} : vector<8x8xbf16>, vector<12x8xbf16>, vector<8x12xf32> -> vector<8x12xf32>
    %176 = vector.broadcast %7 : vector<1x12xf32> to vector<8x12xf32>
    %177 = arith.addf %175, %176 : vector<8x12xf32>
    %cst_121 = arith.constant dense<0xFF800000> : vector<8xf32>
    %178 = vector.multi_reduction <maximumf>, %177, %cst_121 [1] : vector<8x12xf32> to vector<8xf32>
    %179 = vector.shape_cast %178 : vector<8xf32> to vector<8x1xf32>
    %180 = vector.broadcast %179 : vector<8x1xf32> to vector<8x12xf32>
    %181 = arith.subf %177, %180 : vector<8x12xf32>
    %182 = math.exp %181 : vector<8x12xf32>
    %cst_122 = arith.constant dense<0.000000e+00> : vector<8xf32>
    %183 = vector.multi_reduction <add>, %182, %cst_122 [1] : vector<8x12xf32> to vector<8xf32>
    %184 = vector.shape_cast %183 : vector<8xf32> to vector<8x1xf32>
    %185 = tpu.reciprocal %184 {approx = true} : vector<8x1xf32> -> vector<8x1xf32>
    %186 = vector.broadcast %185 : vector<8x1xf32> to vector<8x12xf32>
    %187 = arith.mulf %182, %186 : vector<8x12xf32>
    %188 = arith.truncf %187 : vector<8x12xf32> to vector<8x12xbf16>
    %189 = arith.truncf %172 : vector<12x8xf32> to vector<12x8xbf16>
    %cst_123 = arith.constant dense<0.000000e+00> : vector<8x8xf32>
    %190 = tpu.matmul %188, %189, %cst_123 {dimension_numbers = #tpu.dot_dimension_numbers<[1], [0], [0], [1], [0, 0, 1, 1], [], []>} : vector<8x12xbf16>, vector<12x8xbf16>, vector<8x8xf32> -> vector<8x8xf32>
    %191 = arith.truncf %190 : vector<8x8xf32> to vector<8x8xbf16>
    %c3_124 = arith.constant 3 : index
    %c0_125 = arith.constant 0 : index
    %c0_126 = arith.constant 0 : index
    %192 = vector.load %arg10[%c3_124, %c0_125, %c0_126] : memref<4x8x32xbf16, #tpu.memory_space<vmem>>, vector<1x8x32xbf16>
    %193 = vector.shape_cast %192 : vector<1x8x32xbf16> to vector<8x32xbf16>
    %cst_127 = arith.constant dense<0.000000e+00> : vector<8x32xf32>
    %194 = tpu.matmul %191, %193, %cst_127 {dimension_numbers = #tpu.dot_dimension_numbers<[1], [0], [0], [1], [0, 0, 1, 1], [], []>} : vector<8x8xbf16>, vector<8x32xbf16>, vector<8x32xf32> -> vector<8x32xf32>
    %195 = arith.addf %149, %194 : vector<8x32xf32>
    %c0_128 = arith.constant 0 : index
    %c0_129 = arith.constant 0 : index
    %196 = vector.load %arg11[%c0_128, %c0_129] : memref<1x32xf32, #tpu.memory_space<vmem>>, vector<1x32xf32>
    %197 = vector.broadcast %196 : vector<1x32xf32> to vector<8x32xf32>
    %198 = arith.addf %195, %197 : vector<8x32xf32>
    %199 = arith.addf %198, %1 : vector<8x32xf32>
    %c0_130 = arith.constant 0 : index
    %c0_131 = arith.constant 0 : index
    %200 = vector.load %arg12[%c0_130, %c0_131] : memref<1x32xf32, #tpu.memory_space<vmem>>, vector<1x32xf32>
    %c0_132 = arith.constant 0 : index
    %c0_133 = arith.constant 0 : index
    %201 = vector.load %arg13[%c0_132, %c0_133] : memref<1x32xf32, #tpu.memory_space<vmem>>, vector<1x32xf32>
    %cst_134 = arith.constant dense<0.000000e+00> : vector<8xf32>
    %202 = vector.multi_reduction <add>, %199, %cst_134 [1] : vector<8x32xf32> to vector<8xf32>
    %203 = vector.shape_cast %202 : vector<8xf32> to vector<8x1xf32>
    %cst_135 = arith.constant 3.200000e+01 : f32
    %204 = vector.broadcast %cst_135 : f32 to vector<8x1xf32>
    %205 = arith.divf %203, %204 : vector<8x1xf32>
    %206 = vector.broadcast %205 : vector<8x1xf32> to vector<8x32xf32>
    %207 = arith.subf %199, %206 : vector<8x32xf32>
    %208 = arith.mulf %207, %207 : vector<8x32xf32>
    %cst_136 = arith.constant dense<0.000000e+00> : vector<8xf32>
    %209 = vector.multi_reduction <add>, %208, %cst_136 [1] : vector<8x32xf32> to vector<8xf32>
    %210 = vector.shape_cast %209 : vector<8xf32> to vector<8x1xf32>
    %cst_137 = arith.constant 3.200000e+01 : f32
    %211 = vector.broadcast %cst_137 : f32 to vector<8x1xf32>
    %212 = arith.divf %210, %211 : vector<8x1xf32>
    %213 = vector.broadcast %205 : vector<8x1xf32> to vector<8x32xf32>
    %214 = arith.subf %199, %213 : vector<8x32xf32>
    %cst_138 = arith.constant 9.99999997E-7 : f32
    %215 = vector.broadcast %cst_138 : f32 to vector<8x1xf32>
    %216 = arith.addf %212, %215 : vector<8x1xf32>
    %217 = math.rsqrt %216 : vector<8x1xf32>
    %218 = vector.broadcast %217 : vector<8x1xf32> to vector<8x32xf32>
    %219 = arith.mulf %214, %218 : vector<8x32xf32>
    %220 = vector.broadcast %200 : vector<1x32xf32> to vector<8x32xf32>
    %221 = arith.mulf %219, %220 : vector<8x32xf32>
    %222 = vector.broadcast %201 : vector<1x32xf32> to vector<8x32xf32>
    %223 = arith.addf %221, %222 : vector<8x32xf32>
    %c0_139 = arith.constant 0 : index
    %c0_140 = arith.constant 0 : index
    %c0_141 = arith.constant 0 : index
    %224 = vector.load %arg14[%c0_139, %c0_140, %c0_141] : memref<1x8x32xf32, #tpu.memory_space<vmem>>, vector<1x8x32xf32>
    %225 = vector.shape_cast %224 : vector<1x8x32xf32> to vector<8x32xf32>
    %226 = vector.shape_cast %223 : vector<8x32xf32> to vector<1x8x32xf32>
    tpu.vector_store %arg14[%c0_139, %c0_140, %c0_141], %226 {strides = array<i32>} : memref<1x8x32xf32, #tpu.memory_space<vmem>>, vector<1x8x32xf32>,
    return
  }
  func.func @transform_0(%arg0: i32) -> (i32, i32, i32) {
    %c0_i32 = arith.constant 0 : i32
    %c0_i32_0 = arith.constant 0 : i32
    %c0_i32_1 = arith.constant 0 : i32
    return %arg0, %c0_i32, %c0_i32_0 : i32, i32, i32
  }
  func.func @transform_1(%arg0: i32) -> (i32, i32, i32) {
    %c0_i32 = arith.constant 0 : i32
    %c0_i32_0 = arith.constant 0 : i32
    %c0_i32_1 = arith.constant 0 : i32
    return %arg0, %c0_i32, %c0_i32_0 : i32, i32, i32
  }
  func.func @transform_2(%arg0: i32) -> (i32, i32, i32) {
    %c0_i32 = arith.constant 0 : i32
    %c0_i32_0 = arith.constant 0 : i32
    %c0_i32_1 = arith.constant 0 : i32
    return %arg0, %c0_i32, %c0_i32_0 : i32, i32, i32
  }
  func.func @transform_3(%arg0: i32) -> (i32, i32, i32) {
    %c0_i32 = arith.constant 0 : i32
    %c0_i32_0 = arith.constant 0 : i32
    %c0_i32_1 = arith.constant 0 : i32
    %c0_i32_2 = arith.constant 0 : i32
    return %c0_i32, %c0_i32_0, %c0_i32_1 : i32, i32, i32
  }
  func.func @transform_4(%arg0: i32) -> (i32, i32, i32) {
    %c0_i32 = arith.constant 0 : i32
    %c0_i32_0 = arith.constant 0 : i32
    %c0_i32_1 = arith.constant 0 : i32
    %c0_i32_2 = arith.constant 0 : i32
    return %c0_i32, %c0_i32_0, %c0_i32_1 : i32, i32, i32
  }
  func.func @transform_5(%arg0: i32) -> (i32, i32, i32) {
    %c0_i32 = arith.constant 0 : i32
    %c0_i32_0 = arith.constant 0 : i32
    %c0_i32_1 = arith.constant 0 : i32
    %c0_i32_2 = arith.constant 0 : i32
    return %c0_i32, %c0_i32_0, %c0_i32_1 : i32, i32, i32
  }
  func.func @transform_6(%arg0: i32) -> (i32, i32, i32) {
    %c0_i32 = arith.constant 0 : i32
    %c0_i32_0 = arith.constant 0 : i32
    %c0_i32_1 = arith.constant 0 : i32
    %c0_i32_2 = arith.constant 0 : i32
    return %c0_i32, %c0_i32_0, %c0_i32_1 : i32, i32, i32
  }
  func.func @transform_7(%arg0: i32) -> (i32, i32, i32) {
    %c0_i32 = arith.constant 0 : i32
    %c0_i32_0 = arith.constant 0 : i32
    %c0_i32_1 = arith.constant 0 : i32
    %c0_i32_2 = arith.constant 0 : i32
    return %c0_i32, %c0_i32_0, %c0_i32_1 : i32, i32, i32
  }
  func.func @transform_8(%arg0: i32) -> (i32, i32, i32) {
    %c0_i32 = arith.constant 0 : i32
    %c0_i32_0 = arith.constant 0 : i32
    %c0_i32_1 = arith.constant 0 : i32
    %c0_i32_2 = arith.constant 0 : i32
    return %c0_i32, %c0_i32_0, %c0_i32_1 : i32, i32, i32
  }
  func.func @transform_9(%arg0: i32) -> (i32, i32, i32) {
    %c0_i32 = arith.constant 0 : i32
    %c0_i32_0 = arith.constant 0 : i32
    %c0_i32_1 = arith.constant 0 : i32
    %c0_i32_2 = arith.constant 0 : i32
    return %c0_i32, %c0_i32_0, %c0_i32_1 : i32, i32, i32
  }
  func.func @transform_10(%arg0: i32) -> (i32, i32) {
    %c0_i32 = arith.constant 0 : i32
    %c0_i32_0 = arith.constant 0 : i32
    %c0_i32_1 = arith.constant 0 : i32
    return %c0_i32, %c0_i32_0 : i32, i32
  }
  func.func @transform_11(%arg0: i32) -> (i32, i32) {
    %c0_i32 = arith.constant 0 : i32
    %c0_i32_0 = arith.constant 0 : i32
    %c0_i32_1 = arith.constant 0 : i32
    return %c0_i32, %c0_i32_0 : i32, i32
  }
  func.func @transform_12(%arg0: i32) -> (i32, i32) {
    %c0_i32 = arith.constant 0 : i32
    %c0_i32_0 = arith.constant 0 : i32
    %c0_i32_1 = arith.constant 0 : i32
    return %c0_i32, %c0_i32_0 : i32, i32
  }
  func.func @transform_13(%arg0: i32) -> (i32, i32, i32) {
    %c0_i32 = arith.constant 0 : i32
    %c0_i32_0 = arith.constant 0 : i32
    %c0_i32_1 = arith.constant 0 : i32
    return %arg0, %c0_i32, %c0_i32_0 : i32, i32, i32
  }
  func.func @transform_14(%arg0: i32) -> (i32, i32, i32) {
    %c0_i32 = arith.constant 0 : i32
    %c0_i32_0 = arith.constant 0 : i32
    %c0_i32_1 = arith.constant 0 : i32
    return %arg0, %c0_i32, %c0_i32_0 : i32, i32, i32
  }
}

module attributes {stable_mosaic.version = 11 : i64} {
  func.func @_ffn_kernel(%arg0: i32, %arg1: memref<8x32xf32, #tpu.memory_space<vmem>>, %arg2: memref<1x32xf32, #tpu.memory_space<vmem>>, %arg3: memref<1x32xf32, #tpu.memory_space<vmem>>, %arg4: memref<32x64xbf16, #tpu.memory_space<vmem>>, %arg5: memref<1x64xf32, #tpu.memory_space<vmem>>, %arg6: memref<64x32xbf16, #tpu.memory_space<vmem>>, %arg7: memref<1x32xf32, #tpu.memory_space<vmem>>, %arg8: memref<8x32xf32, #tpu.memory_space<vmem>>) attributes {dimension_semantics = [#tpu.dimension_semantics<parallel>], iteration_bounds = array<i64: 2>, scalar_prefetch = 0 : i64, scratch_operands = 0 : i64, tpu.core_type = #tpu.core_type<tc>, window_params = [{transform_indices = @transform_0, window_bounds = array<i64: 8, 32>}, {pipeline_mode = #tpu.pipeline_mode<synchronous>, transform_indices = @transform_1, window_bounds = array<i64: 1, 32>}, {pipeline_mode = #tpu.pipeline_mode<synchronous>, transform_indices = @transform_2, window_bounds = array<i64: 1, 32>}, {pipeline_mode = #tpu.pipeline_mode<synchronous>, transform_indices = @transform_3, window_bounds = array<i64: 32, 64>}, {pipeline_mode = #tpu.pipeline_mode<synchronous>, transform_indices = @transform_4, window_bounds = array<i64: 1, 64>}, {pipeline_mode = #tpu.pipeline_mode<synchronous>, transform_indices = @transform_5, window_bounds = array<i64: 64, 32>}, {pipeline_mode = #tpu.pipeline_mode<synchronous>, transform_indices = @transform_6, window_bounds = array<i64: 1, 32>}, {transform_indices = @transform_7, window_bounds = array<i64: 8, 32>}]} {
    %c0 = arith.constant 0 : index
    %c0_0 = arith.constant 0 : index
    %0 = vector.load %arg1[%c0, %c0_0] : memref<8x32xf32, #tpu.memory_space<vmem>>, vector<8x32xf32>
    %c0_1 = arith.constant 0 : index
    %c0_2 = arith.constant 0 : index
    %1 = vector.load %arg2[%c0_1, %c0_2] : memref<1x32xf32, #tpu.memory_space<vmem>>, vector<1x32xf32>
    %c0_3 = arith.constant 0 : index
    %c0_4 = arith.constant 0 : index
    %2 = vector.load %arg3[%c0_3, %c0_4] : memref<1x32xf32, #tpu.memory_space<vmem>>, vector<1x32xf32>
    %cst = arith.constant dense<0.000000e+00> : vector<8xf32>
    %3 = vector.multi_reduction <add>, %0, %cst [1] : vector<8x32xf32> to vector<8xf32>
    %4 = vector.shape_cast %3 : vector<8xf32> to vector<8x1xf32>
    %cst_5 = arith.constant 3.200000e+01 : f32
    %5 = vector.broadcast %cst_5 : f32 to vector<8x1xf32>
    %6 = arith.divf %4, %5 : vector<8x1xf32>
    %7 = vector.broadcast %6 : vector<8x1xf32> to vector<8x32xf32>
    %8 = arith.subf %0, %7 : vector<8x32xf32>
    %9 = arith.mulf %8, %8 : vector<8x32xf32>
    %cst_6 = arith.constant dense<0.000000e+00> : vector<8xf32>
    %10 = vector.multi_reduction <add>, %9, %cst_6 [1] : vector<8x32xf32> to vector<8xf32>
    %11 = vector.shape_cast %10 : vector<8xf32> to vector<8x1xf32>
    %cst_7 = arith.constant 3.200000e+01 : f32
    %12 = vector.broadcast %cst_7 : f32 to vector<8x1xf32>
    %13 = arith.divf %11, %12 : vector<8x1xf32>
    %14 = vector.broadcast %6 : vector<8x1xf32> to vector<8x32xf32>
    %15 = arith.subf %0, %14 : vector<8x32xf32>
    %cst_8 = arith.constant 9.99999997E-7 : f32
    %16 = vector.broadcast %cst_8 : f32 to vector<8x1xf32>
    %17 = arith.addf %13, %16 : vector<8x1xf32>
    %18 = math.rsqrt %17 : vector<8x1xf32>
    %19 = vector.broadcast %18 : vector<8x1xf32> to vector<8x32xf32>
    %20 = arith.mulf %15, %19 : vector<8x32xf32>
    %21 = vector.broadcast %1 : vector<1x32xf32> to vector<8x32xf32>
    %22 = arith.mulf %20, %21 : vector<8x32xf32>
    %23 = vector.broadcast %2 : vector<1x32xf32> to vector<8x32xf32>
    %24 = arith.addf %22, %23 : vector<8x32xf32>
    %25 = arith.truncf %24 : vector<8x32xf32> to vector<8x32xbf16>
    %c0_9 = arith.constant 0 : index
    %c0_10 = arith.constant 0 : index
    %26 = vector.load %arg4[%c0_9, %c0_10] : memref<32x64xbf16, #tpu.memory_space<vmem>>, vector<32x64xbf16>
    %cst_11 = arith.constant dense<0.000000e+00> : vector<8x64xf32>
    %27 = tpu.matmul %25, %26, %cst_11 {dimension_numbers = #tpu.dot_dimension_numbers<[1], [0], [0], [1], [0, 0, 1, 1], [], []>} : vector<8x32xbf16>, vector<32x64xbf16>, vector<8x64xf32> -> vector<8x64xf32>
    %c0_12 = arith.constant 0 : index
    %c0_13 = arith.constant 0 : index
    %28 = vector.load %arg5[%c0_12, %c0_13] : memref<1x64xf32, #tpu.memory_space<vmem>>, vector<1x64xf32>
    %29 = vector.broadcast %28 : vector<1x64xf32> to vector<8x64xf32>
    %30 = arith.addf %27, %29 : vector<8x64xf32>
    %cst_14 = arith.constant 0.000000e+00 : f32
    %31 = vector.broadcast %cst_14 : f32 to vector<8x64xf32>
    %32 = arith.maximumf %30, %31 : vector<8x64xf32>
    %33 = arith.truncf %32 : vector<8x64xf32> to vector<8x64xbf16>
    %c0_15 = arith.constant 0 : index
    %c0_16 = arith.constant 0 : index
    %34 = vector.load %arg6[%c0_15, %c0_16] : memref<64x32xbf16, #tpu.memory_space<vmem>>, vector<64x32xbf16>
    %cst_17 = arith.constant dense<0.000000e+00> : vector<8x32xf32>
    %35 = tpu.matmul %33, %34, %cst_17 {dimension_numbers = #tpu.dot_dimension_numbers<[1], [0], [0], [1], [0, 0, 1, 1], [], []>} : vector<8x64xbf16>, vector<64x32xbf16>, vector<8x32xf32> -> vector<8x32xf32>
    %c0_18 = arith.constant 0 : index
    %c0_19 = arith.constant 0 : index
    %36 = vector.load %arg7[%c0_18, %c0_19] : memref<1x32xf32, #tpu.memory_space<vmem>>, vector<1x32xf32>
    %37 = vector.broadcast %36 : vector<1x32xf32> to vector<8x32xf32>
    %38 = arith.addf %35, %37 : vector<8x32xf32>
    %39 = arith.addf %38, %0 : vector<8x32xf32>
    %c0_20 = arith.constant 0 : index
    %c0_21 = arith.constant 0 : index
    %40 = vector.load %arg8[%c0_20, %c0_21] : memref<8x32xf32, #tpu.memory_space<vmem>>, vector<8x32xf32>
    tpu.vector_store %arg8[%c0_20, %c0_21], %39 {strides = array<i32>} : memref<8x32xf32, #tpu.memory_space<vmem>>, vector<8x32xf32>,
    return
  }
  func.func @transform_0(%arg0: i32) -> (i32, i32) {
    %c0_i32 = arith.constant 0 : i32
    %c0_i32_0 = arith.constant 0 : i32
    return %arg0, %c0_i32 : i32, i32
  }
  func.func @transform_1(%arg0: i32) -> (i32, i32) {
    %c0_i32 = arith.constant 0 : i32
    %c0_i32_0 = arith.constant 0 : i32
    %c0_i32_1 = arith.constant 0 : i32
    return %c0_i32, %c0_i32_0 : i32, i32
  }
  func.func @transform_2(%arg0: i32) -> (i32, i32) {
    %c0_i32 = arith.constant 0 : i32
    %c0_i32_0 = arith.constant 0 : i32
    %c0_i32_1 = arith.constant 0 : i32
    return %c0_i32, %c0_i32_0 : i32, i32
  }
  func.func @transform_3(%arg0: i32) -> (i32, i32) {
    %c0_i32 = arith.constant 0 : i32
    %c0_i32_0 = arith.constant 0 : i32
    %c0_i32_1 = arith.constant 0 : i32
    return %c0_i32, %c0_i32_0 : i32, i32
  }
  func.func @transform_4(%arg0: i32) -> (i32, i32) {
    %c0_i32 = arith.constant 0 : i32
    %c0_i32_0 = arith.constant 0 : i32
    %c0_i32_1 = arith.constant 0 : i32
    return %c0_i32, %c0_i32_0 : i32, i32
  }
  func.func @transform_5(%arg0: i32) -> (i32, i32) {
    %c0_i32 = arith.constant 0 : i32
    %c0_i32_0 = arith.constant 0 : i32
    %c0_i32_1 = arith.constant 0 : i32
    return %c0_i32, %c0_i32_0 : i32, i32
  }
  func.func @transform_6(%arg0: i32) -> (i32, i32) {
    %c0_i32 = arith.constant 0 : i32
    %c0_i32_0 = arith.constant 0 : i32
    %c0_i32_1 = arith.constant 0 : i32
    return %c0_i32, %c0_i32_0 : i32, i32
  }
  func.func @transform_7(%arg0: i32) -> (i32, i32) {
    %c0_i32 = arith.constant 0 : i32
    %c0_i32_0 = arith.constant 0 : i32
    return %arg0, %c0_i32 : i32, i32
  }
}

</mosaic_0001>

<llo_original>
// kernel: _lambda_.5
$region0: #{_lambda_.5}
  #allocation0 [shape = 'u32[]', space=smem, size = 0x4, offset = 0x4, fixed_abs, tag = 'smem constant byte address 0x4 - core index']
  #allocation1 [shape = 'u32[144,128]{1,0:T(1,128)}', space=vmem, size = 0x12000, scoped, tag = 'internal scratch']
  %s0 = inlined_call_operand.vmem [shape: f32[16,32], index: 0, kind: input, shape index: {}]
  %s1 = inlined_call_operand.vmem [shape: f32[1,32], index: 1, kind: input, shape index: {}]
  %s2 = inlined_call_operand.vmem [shape: f32[1,32], index: 2, kind: input, shape index: {}]
  %s3 = inlined_call_operand.vmem [shape: bf16[32,64], index: 3, kind: input, shape index: {}]
  %s4 = inlined_call_operand.vmem [shape: f32[1,64], index: 4, kind: input, shape index: {}]
  %s5 = inlined_call_operand.vmem [shape: bf16[64,32], index: 5, kind: input, shape index: {}]
  %s6 = inlined_call_operand.vmem [shape: f32[1,32], index: 6, kind: input, shape index: {}]
  %s7 = inlined_call_operand.hbm [shape: f32[16,32], index: 7, kind: output, shape index: {}]
  %s8 = sld [smem:[#allocation0]]
  $region61: #{_lambda_.5} parent=0
    _
  %s10 = ssub.s32 1, %s8
  %s11 = scalar_select 0, %s10, %s8
  $region1: #{_lambda_.5} parent=0
    #allocation2 [shape = 'u8[8192]{0}', space=vmem, size = 0x2000, scoped, tag = 'output window, operand 0']
    #allocation3 [shape = 's32[2]{0}', space=sflag, size = 0x8, scoped, tag = 'scoped memory for _lambda_.5']
    %12 = vsyncpa [#allocation3], 0
    %s13 = scalar_lea.sflag [#allocation3], 1
    %14 = vsyncpa %s13, 0
    loop: start=0, step=1, limit=4
    $region2: #{_lambda_.5} parent=1 // loop_pre_header
      _
    $region3: #{_lambda_.5} parent=1 // loop_header
      %s16 = sphi 0, %s20
      %p17 = scmp.ge.s32.totalorder %s16, 4
      %s26 = sphi 0, %s28
      %s29 = sphi 0, %s26
      %s30 = sphi 0, %s29
      %s46 = sphi 0, %s30
      %s50 = sphi 0, %s50
      %s52 = sphi 0, %s50
      %s53 = sphi 0, %s52
      %s67 = sphi 0, %s53
      %s71 = sphi 0, %s71
      %s73 = sphi 0, %s71
      %s74 = sphi 0, %s73
      %s88 = sphi 0, %s74
      %s92 = sphi 0, %s92
      %s94 = sphi 0, %s92
      %s95 = sphi 0, %s94
      %s109 = sphi 0, %s95
      %s113 = sphi 0, %s113
      %s115 = sphi 0, %s113
      %s116 = sphi 0, %s115
      %s130 = sphi 0, %s116
      %s134 = sphi 0, %s134
      %s136 = sphi 0, %s134
      %s137 = sphi 0, %s136
      %s151 = sphi 0, %s137
      %s155 = sphi 0, %s155
      %s157 = sphi 0, %s155
      %s158 = sphi 0, %s157
      %s172 = sphi 0, %s158
      %s178 = sphi 0, %s180
      %s181 = sphi 0, %s178
      %s182 = sphi 0, %s181
      %s198 = sphi 0, %s182
    $region4: #{_lambda_.5} parent=1 // loop_header_branch
      %19 = sbr.rel (%p17) target = $region8
    $region5: #{_lambda_.5} parent=1 // loop_body
      %s21 = ssub.s32 %s16, 1
      %s22 = ssub.s32 %s16, 2
      %s23 = sadd.s32 %s16, 1
      %s24 = ssub.s32 %s16, %s23
      %p25 = scmp.eq.s32.totalorder %s24, 0
      %s27 = sadd.s32 %s26, 1
      %s28 = scalar_select %p25, %s26, %s27
      %p31 = pneg %p25
      %p32 = scmp.eq.s32.totalorder %s16, 1
      %p33 = por %p31, %p32
      %p34 = scmp.ne.s32.totalorder %s26, %s29
      %p35 = scmp.eq.s32.totalorder %s16, 0
      %p36 = por %p34, %p35
      %p37 = scmp.ne.s32.totalorder %s26, %s29
      %p38 = scmp.eq.s32.totalorder %s21, 1
      %p39 = por %p37, %p38
      %p40 = scmp.ne.s32.totalorder %s29, %s30
      %p41 = scmp.eq.s32.totalorder %s21, 0
      %p42 = por %p40, %p41
      %p43 = scmp.ne.s32.totalorder %s29, %s30
      %p44 = scmp.eq.s32.totalorder %s22, 1
      %p45 = por %p43, %p44
      %p47 = scmp.ne.s32.totalorder %s30, %s46
      %p48 = scmp.eq.s32.totalorder %s22, 0
      %p49 = por %p47, %p48
      %s51 = sadd.s32 %s50, 1
      %p54 = scmp.eq.s32.totalorder %s16, 1
      %p55 = scmp.ne.s32.totalorder %s50, %s52
      %p56 = scmp.eq.s32.totalorder %s16, 0
      %p57 = por %p55, %p56
      %p58 = scmp.ne.s32.totalorder %s50, %s52
      %p59 = scmp.eq.s32.totalorder %s21, 1
      %p60 = por %p58, %p59
      %p61 = scmp.ne.s32.totalorder %s52, %s53
      %p62 = scmp.eq.s32.totalorder %s21, 0
      %p63 = por %p61, %p62
      %p64 = scmp.ne.s32.totalorder %s52, %s53
      %p65 = scmp.eq.s32.totalorder %s22, 1
      %p66 = por %p64, %p65
      %p68 = scmp.ne.s32.totalorder %s53, %s67
      %p69 = scmp.eq.s32.totalorder %s22, 0
      %p70 = por %p68, %p69
      %s72 = sadd.s32 %s71, 1
      %p75 = scmp.eq.s32.totalorder %s16, 1
      %p76 = scmp.ne.s32.totalorder %s71, %s73
      %p77 = scmp.eq.s32.totalorder %s16, 0
      %p78 = por %p76, %p77
      %p79 = scmp.ne.s32.totalorder %s71, %s73
      %p80 = scmp.eq.s32.totalorder %s21, 1
      %p81 = por %p79, %p80
      %p82 = scmp.ne.s32.totalorder %s73, %s74
      %p83 = scmp.eq.s32.totalorder %s21, 0
      %p84 = por %p82, %p83
      %p85 = scmp.ne.s32.totalorder %s73, %s74
      %p86 = scmp.eq.s32.totalorder %s22, 1
      %p87 = por %p85, %p86
      %p89 = scmp.ne.s32.totalorder %s74, %s88
      %p90 = scmp.eq.s32.totalorder %s22, 0
      %p91 = por %p89, %p90
      %s93 = sadd.s32 %s92, 1
      %p96 = scmp.eq.s32.totalorder %s16, 1
      %p97 = scmp.ne.s32.totalorder %s92, %s94
      %p98 = scmp.eq.s32.totalorder %s16, 0
      %p99 = por %p97, %p98
      %p100 = scmp.ne.s32.totalorder %s92, %s94
      %p101 = scmp.eq.s32.totalorder %s21, 1
      %p102 = por %p100, %p101
      %p103 = scmp.ne.s32.totalorder %s94, %s95
      %p104 = scmp.eq.s32.totalorder %s21, 0
      %p105 = por %p103, %p104
      %p106 = scmp.ne.s32.totalorder %s94, %s95
      %p107 = scmp.eq.s32.totalorder %s22, 1
      %p108 = por %p106, %p107
      %p110 = scmp.ne.s32.totalorder %s95, %s109
      %p111 = scmp.eq.s32.totalorder %s22, 0
      %p112 = por %p110, %p111
      %s114 = sadd.s32 %s113, 1
      %p117 = scmp.eq.s32.totalorder %s16, 1
      %p118 = scmp.ne.s32.totalorder %s113, %s115
      %p119 = scmp.eq.s32.totalorder %s16, 0
      %p120 = por %p118, %p119
      %p121 = scmp.ne.s32.totalorder %s113, %s115
      %p122 = scmp.eq.s32.totalorder %s21, 1
      %p123 = por %p121, %p122
      %p124 = scmp.ne.s32.totalorder %s115, %s116
      %p125 = scmp.eq.s32.totalorder %s21, 0
      %p126 = por %p124, %p125
      %p127 = scmp.ne.s32.totalorder %s115, %s116
      %p128 = scmp.eq.s32.totalorder %s22, 1
      %p129 = por %p127, %p128
      %p131 = scmp.ne.s32.totalorder %s116, %s130
      %p132 = scmp.eq.s32.totalorder %s22, 0
      %p133 = por %p131, %p132
      %s135 = sadd.s32 %s134, 1
      %p138 = scmp.eq.s32.totalorder %s16, 1
      %p139 = scmp.ne.s32.totalorder %s134, %s136
      %p140 = scmp.eq.s32.totalorder %s16, 0
      %p141 = por %p139, %p140
      %p142 = scmp.ne.s32.totalorder %s134, %s136
      %p143 = scmp.eq.s32.totalorder %s21, 1
      %p144 = por %p142, %p143
      %p145 = scmp.ne.s32.totalorder %s136, %s137
      %p146 = scmp.eq.s32.totalorder %s21, 0
      %p147 = por %p145, %p146
      %p148 = scmp.ne.s32.totalorder %s136, %s137
      %p149 = scmp.eq.s32.totalorder %s22, 1
      %p150 = por %p148, %p149
      %p152 = scmp.ne.s32.totalorder %s137, %s151
      %p153 = scmp.eq.s32.totalorder %s22, 0
      %p154 = por %p152, %p153
      %s156 = sadd.s32 %s155, 1
      %p159 = scmp.eq.s32.totalorder %s16, 1
      %p160 = scmp.ne.s32.totalorder %s155, %s157
      %p161 = scmp.eq.s32.totalorder %s16, 0
      %p162 = por %p160, %p161
      %p163 = scmp.ne.s32.totalorder %s155, %s157
      %p164 = scmp.eq.s32.totalorder %s21, 1
      %p165 = por %p163, %p164
      %p166 = scmp.ne.s32.totalorder %s157, %s158
      %p167 = scmp.eq.s32.totalorder %s21, 0
      %p168 = por %p166, %p167
      %p169 = scmp.ne.s32.totalorder %s157, %s158
      %p170 = scmp.eq.s32.totalorder %s22, 1
      %p171 = por %p169, %p170
      %p173 = scmp.ne.s32.totalorder %s158, %s172
      %p174 = scmp.eq.s32.totalorder %s22, 0
      %p175 = por %p173, %p174
      %s176 = ssub.s32 %s16, %s23
      %p177 = scmp.eq.s32.totalorder %s176, 0
      %s179 = sadd.s32 %s178, 1
      %s180 = scalar_select %p177, %s178, %s179
      %p183 = pneg %p177
      %p184 = scmp.eq.s32.totalorder %s16, 1
      %p185 = por %p183, %p184
      %p186 = scmp.ne.s32.totalorder %s178, %s181
      %p187 = scmp.eq.s32.totalorder %s16, 0
      %p188 = por %p186, %p187
      %p189 = scmp.ne.s32.totalorder %s178, %s181
      %p190 = scmp.eq.s32.totalorder %s21, 1
      %p191 = por %p189, %p190
      %p192 = scmp.ne.s32.totalorder %s181, %s182
      %p193 = scmp.eq.s32.totalorder %s21, 0
      %p194 = por %p192, %p193
      %p195 = scmp.ne.s32.totalorder %s181, %s182
      %p196 = scmp.eq.s32.totalorder %s22, 1
      %p197 = por %p195, %p196
      %p199 = scmp.ne.s32.totalorder %s182, %s198
      %p200 = scmp.eq.s32.totalorder %s22, 0
      %p201 = por %p199, %p200
      %p202 = scmp.le.s32.totalorder 1, %s16
      %p203 = scmp.lt.s32.totalorder %s16, 3
      %p204 = pnand %p202, %p203
      %p205 = pneg %p204
      // Predicated region
      $region9: #{_lambda_.5} parent=5 // pred_check
        _
      $region10: #{_lambda_.5} parent=5 // pred_check_branch
        %207 = sbr.rel (%p204) target = $region12
      $region11: #{_lambda_.5} parent=5 // pred_region
        %s208 = ssub.s32 %s16, 1
        // Predicated region
        $region13: #{_lambda_.5} parent=11 // pred_check
          %p209 = pneg %p63
        $region14: #{_lambda_.5} parent=11 // pred_check_branch
          %211 = sbr.rel (%p209) target = $region16
        $region15: #{_lambda_.5} parent=11 // pred_region
          _
        $region16: #{_lambda_.5} parent=11 // pred_fallthru
          _
        // Predicated region
        $region17: #{_lambda_.5} parent=11 // pred_check
          %p212 = pneg %p84
        $region18: #{_lambda_.5} parent=11 // pred_check_branch
          %214 = sbr.rel (%p212) target = $region20
        $region19: #{_lambda_.5} parent=11 // pred_region
          _
        $region20: #{_lambda_.5} parent=11 // pred_fallthru
          _
        // Predicated region
        $region21: #{_lambda_.5} parent=11 // pred_check
          %p215 = pneg %p105
        $region22: #{_lambda_.5} parent=11 // pred_check_branch
          %217 = sbr.rel (%p215) target = $region24
        $region23: #{_lambda_.5} parent=11 // pred_region
          _
        $region24: #{_lambda_.5} parent=11 // pred_fallthru
          _
        // Predicated region
        $region25: #{_lambda_.5} parent=11 // pred_check
          %p218 = pneg %p126
        $region26: #{_lambda_.5} parent=11 // pred_check_branch
          %220 = sbr.rel (%p218) target = $region28
        $region27: #{_lambda_.5} parent=11 // pred_region
          _
        $region28: #{_lambda_.5} parent=11 // pred_fallthru
          _
        // Predicated region
        $region29: #{_lambda_.5} parent=11 // pred_check
          %p221 = pneg %p147
        $region30: #{_lambda_.5} parent=11 // pred_check_branch
          %223 = sbr.rel (%p221) target = $region32
        $region31: #{_lambda_.5} parent=11 // pred_region
          _
        $region32: #{_lambda_.5} parent=11 // pred_fallthru
          _
        // Predicated region
        $region33: #{_lambda_.5} parent=11 // pred_check
          %p224 = pneg %p168
        $region34: #{_lambda_.5} parent=11 // pred_check_branch
          %226 = sbr.rel (%p224) target = $region36
        $region35: #{_lambda_.5} parent=11 // pred_region
          _
        $region36: #{_lambda_.5} parent=11 // pred_fallthru
          _
      $region12: #{_lambda_.5} parent=5 // pred_fallthru
        _
      %p227 = scmp.lt.s32.totalorder %s16, 2
      // Predicated region
      $region37: #{_lambda_.5} parent=5 // pred_check
        %p228 = pneg %p227
      $region38: #{_lambda_.5} parent=5 // pred_check_branch
        %230 = sbr.rel (%p228) target = $region40
      $region39: #{_lambda_.5} parent=5 // pred_region
        // Predicated region
        $region41: #{_lambda_.5} parent=39 // pred_check
          %p231 = pneg %p36
        $region42: #{_lambda_.5} parent=39 // pred_check_branch
          %233 = sbr.rel (%p231) target = $region44
        $region43: #{_lambda_.5} parent=39 // pred_region
          %p234 = scmp.lt.s32.totalorder %s16, 1
          %s235 = scalar_select %p234, %s16, 1
          %s236 = smul.addr %s235, 8
          %s237 = scalar_lea.vmem %s0, %s236
        $region44: #{_lambda_.5} parent=39 // pred_fallthru
          _
      $region40: #{_lambda_.5} parent=5 // pred_fallthru
        _
      %p238 = scmp.le.s32.totalorder 1, %s16
      %p239 = scmp.lt.s32.totalorder %s16, 3
      %p240 = pnand %p238, %p239
      %p241 = pneg %p240
      // Predicated region
      $region45: #{_lambda_.5} parent=5 // pred_check
        _
      $region46: #{_lambda_.5} parent=5 // pred_check_branch
        %243 = sbr.rel (%p240) target = $region48
      $region47: #{_lambda_.5} parent=5 // pred_region
        %s244 = ssub.s32 %s16, 1
        %p245 = scmp.lt.s32.totalorder %s21, 1
        %s246 = scalar_select %p245, %s21, 1
        %s247 = smul.addr %s246, 8
        %s248 = scalar_lea.vmem %s0, %s247
        %p249 = pneg %p42
        %p250 = pneg %p39
        %p251 = pneg %p63
        %p252 = pneg %p60
        %p253 = pneg %p84
        %p254 = pneg %p81
        %p255 = pneg %p105
        %p256 = pneg %p102
        %p257 = pneg %p126
        %p258 = pneg %p123
        %p259 = pneg %p147
        %p260 = pneg %p144
        %p261 = pneg %p168
        %p262 = pneg %p165
        %p263 = pneg %p194
        %p264 = pneg %p191
        %s265 = sand.u32 %s181, 1
        %s266 = scalar_lea.sflag [#allocation3], %s265
        %s267 = sand.u32 %s181, 1
        %s268 = smul.addr %s267, 8
        %s269 = scalar_lea.vmem [#allocation2], %s268
        %p270 = scmp.lt.s32.totalorder %s21, 1
        %s271 = scalar_select %p270, %s21, 1
        %s272 = smul.addr %s271, 8
        %s273 = scalar_lea.vmem %s0, %s272
        %v275 = vld [vmem:[%s273] sm:$0xff]
        %v276 = vld [vmem:[%s1] sm:$0x1]
        %v277 = vld [vmem:[%s2] sm:$0x1]
        %vm278 = vcmask 261120
        %v279 = vsel %vm278, %v275, 0.0
        %280 = vadd.xlane.f32.xlu0 %v279
        %v281 = vpop.xlane.xlu0 %280
        %v282 = vrcp.pop 32.0
        %v283 = vmul.f32 %v281, %v282
        %v284 = vsub.f32 %v275, %v283
        %v285 = vmul.f32 %v284, %v284
        %v286 = vsel %vm278, %v285, 0.0
        %287 = vadd.xlane.f32.xlu0 %v286
        %v288 = vpop.xlane.xlu0 %287
        %v289 = vmul.f32 %v288, %v282
        %v290 = vadd.f32 %v289, 1e-06
        %v291 = vrsqrt.pop %v290
        %v292 = vmul.f32 %v284, %v291
        %v294 = vlaneseq
        %v295 = vshrl.u32 %v294, 7
        %v296 = vsub.s32 0, %v295
        %v297 = vrot.slane %v276, %v296
        %v299 = vmul.f32 %v292, %v297
        %v301 = vlaneseq
        %v302 = vshrl.u32 %v301, 7
        %v303 = vsub.s32 0, %v302
        %v304 = vrot.slane %v277, %v303
        %v306 = vadd.f32 %v299, %v304
        %v307 = vpack.c.bf16 %v306, %v306
        %v308 = vld [vmem:[%s3] sm:$0xf]
        %v309 = vld [vmem:[%s3 + $0x4] sm:$0xf]
        %v310 = vld [vmem:[%s3 + $0x8] sm:$0xf]
        %v311 = vld [vmem:[%s3 + $0xc] sm:$0xf]
        %v312 = vld [vmem:[%s4] sm:$0x1]
        %v314 = vlaneseq
        %v315 = vshrl.u32 %v314, 7
        %v316 = vsub.s32 0, %v315
        %v317 = vrot.slane %v312, %v316
        %v323 = vunpack.c.l.b16 %v308
        %v324 = vunpack.c.l.b16 %v309
        %v325 = vunpack.c.l.b16 %v310
        %v326 = vunpack.c.l.b16 %v311
        %v327 = vpack.c.b16 %v324, %v323
        %v328 = vpack.c.b16 %v326, %v325
        %v332 = vsel %vm278, %v307, 0
        %334 = vmatprep.subr.bf16.mxu0 0
        %335 = vmatpush1.bf16.msra.mxu0 %v327
        %336 = vmatprep.subr.bf16.mxu0 0
        %337 = vmatpush1.bf16.msra.mxu0 %v328
        %338 = vmatprep.subr.bf16.mxu0 0
        %339 = vmatpush1.bf16.msra.mxu0 0
        %340 = vmatprep.subr.bf16.mxu0 0
        %341 = vmatpush1.bf16.msra.mxu0 0
        %342 = vmatprep.subr.bf16.mxu0 0
        %343 = vmatpush1.bf16.msra.mxu0 0
        %344 = vmatprep.subr.bf16.mxu0 0
        %345 = vmatpush1.bf16.msra.mxu0 0
        %346 = vmatprep.subr.bf16.mxu0 0
        %347 = vmatpush1.bf16.msra.mxu0 0
        %348 = vmatprep.subr.bf16.mxu0 0
        %349 = vmatpush1.bf16.msra.mxu0 0
        %350 = vmatprep.subr.bf16.mxu0 0
        %351 = vmatpush1.bf16.msra.mxu0 0
        %352 = vmatprep.subr.bf16.mxu0 0
        %353 = vmatpush1.bf16.msra.mxu0 0
        %354 = vmatprep.subr.bf16.mxu0 0
        %355 = vmatpush1.bf16.msra.mxu0 0
        %356 = vmatprep.subr.bf16.mxu0 0
        %357 = vmatpush1.bf16.msra.mxu0 0
        %358 = vmatprep.subr.bf16.mxu0 0
        %359 = vmatpush1.bf16.msra.mxu0 0
        %360 = vmatprep.subr.bf16.mxu0 0
        %361 = vmatpush1.bf16.msra.mxu0 0
        %362 = vmatprep.subr.bf16.mxu0 0
        %363 = vmatpush1.bf16.msra.mxu0 0
        %364 = vmatprep.subr.bf16.mxu0 0
        %365 = vmatpush1.bf16.msra.mxu0 0
        %366 = vmatprep.mubr.bf16.mxu0 0
        %367 = vmatmul.mubr.bf16.gmra.mrb[0].mxu0 %v332
        %v368 = vpop.f32.mrb[0].mxu0
        %v369 = vadd.f32 %v317, %v368
        %v370 = vpop.f32.mrb[0].mxu0
        %v371 = vpop.f32.mrb[0].mxu0
        %v372 = vpop.f32.mrb[0].mxu0
        %373 = vdwg.mxu0
        %v374 = vmax.f32 %v369, 0.0
        %v375 = vpack.c.bf16 %v374, %v374
        %v376 = vld [vmem:[%s5] sm:$0xf]
        %v377 = vld [vmem:[%s5 + $0x4] sm:$0xf]
        %v378 = vld [vmem:[%s5 + $0x8] sm:$0xf]
        %v379 = vld [vmem:[%s5 + $0xc] sm:$0xf]
        %v380 = vld [vmem:[%s5 + $0x10] sm:$0xf]
        %v381 = vld [vmem:[%s5 + $0x14] sm:$0xf]
        %v382 = vld [vmem:[%s5 + $0x18] sm:$0xf]
        %v383 = vld [vmem:[%s5 + $0x1c] sm:$0xf]
        %v384 = vld [vmem:[%s6] sm:$0x1]
        %v386 = vlaneseq
        %v387 = vshrl.u32 %v386, 7
        %v388 = vsub.s32 0, %v387
        %v389 = vrot.slane %v384, %v388
        %v399 = vunpack.c.l.b16 %v376
        %v400 = vunpack.c.l.b16 %v377
        %v401 = vunpack.c.l.b16 %v378
        %v402 = vunpack.c.l.b16 %v379
        %v403 = vunpack.c.l.b16 %v380
        %v404 = vunpack.c.l.b16 %v381
        %v405 = vunpack.c.l.b16 %v382
        %v406 = vunpack.c.l.b16 %v383
        %v407 = vpack.c.b16 %v400, %v399
        %v408 = vpack.c.b16 %v402, %v401
        %v409 = vpack.c.b16 %v404, %v403
        %v410 = vpack.c.b16 %v406, %v405
        %vm415 = vcmask 523264
        %v417 = vsel %vm415, %v375, 0
        %419 = vmatprep.subr.bf16.mxu0 0
        %420 = vmatpush1.bf16.msra.mxu0 %v407
        %421 = vmatprep.subr.bf16.mxu0 0
        %422 = vmatpush1.bf16.msra.mxu0 %v408
        %423 = vmatprep.subr.bf16.mxu0 0
        %424 = vmatpush1.bf16.msra.mxu0 %v409
        %425 = vmatprep.subr.bf16.mxu0 0
        %426 = vmatpush1.bf16.msra.mxu0 %v410
        %427 = vmatprep.subr.bf16.mxu0 0
        %428 = vmatpush1.bf16.msra.mxu0 0
        %429 = vmatprep.subr.bf16.mxu0 0
        %430 = vmatpush1.bf16.msra.mxu0 0
        %431 = vmatprep.subr.bf16.mxu0 0
        %432 = vmatpush1.bf16.msra.mxu0 0
        %433 = vmatprep.subr.bf16.mxu0 0
        %434 = vmatpush1.bf16.msra.mxu0 0
        %435 = vmatprep.subr.bf16.mxu0 0
        %436 = vmatpush1.bf16.msra.mxu0 0
        %437 = vmatprep.subr.bf16.mxu0 0
        %438 = vmatpush1.bf16.msra.mxu0 0
        %439 = vmatprep.subr.bf16.mxu0 0
        %440 = vmatpush1.bf16.msra.mxu0 0
        %441 = vmatprep.subr.bf16.mxu0 0
        %442 = vmatpush1.bf16.msra.mxu0 0
        %443 = vmatprep.subr.bf16.mxu0 0
        %444 = vmatpush1.bf16.msra.mxu0 0
        %445 = vmatprep.subr.bf16.mxu0 0
        %446 = vmatpush1.bf16.msra.mxu0 0
        %447 = vmatprep.subr.bf16.mxu0 0
        %448 = vmatpush1.bf16.msra.mxu0 0
        %449 = vmatprep.subr.bf16.mxu0 0
        %450 = vmatpush1.bf16.msra.mxu0 0
        %451 = vmatprep.mubr.bf16.mxu0 0
        %452 = vmatmul.mubr.bf16.gmra.mrb[0].mxu0 %v417
        %v453 = vpop.f32.mrb[0].mxu0
        %v454 = vadd.f32 %v389, %v453
        %v455 = vpop.f32.mrb[0].mxu0
        %v456 = vpop.f32.mrb[0].mxu0
        %v457 = vpop.f32.mrb[0].mxu0
        %458 = vdwg.mxu0
        %v459 = vadd.f32 %v454, %v275
        %460 = vst.msk [vmem:[%s269] sm:$0xff] %vm278, %v459
        %s461 = sand.u32 %s181, 1
        %s462 = scalar_lea.sflag [#allocation3], %s461
        %s463 = sand.u32 %s181, 1
        %s464 = smul.addr %s463, 8
        %s465 = scalar_lea.vmem [#allocation2], %s464
        // Predicated region
        $region49: #{_lambda_.5} parent=47 // pred_check
          %p466 = pneg %p191
        $region50: #{_lambda_.5} parent=47 // pred_check_branch
          %468 = sbr.rel (%p466) target = $region52
        $region51: #{_lambda_.5} parent=47 // pred_region
          %s470 = ssub.s32 128, 128
          %471 = vsyncadd %s462, %s470
          %s472 = smul.addr %s21, 128
          %s473 = scalar_lea.hbm %s7, %s472
          %s475 = sshll.u32 %s465, 4
          %s476 = int_to_ptr.vmem [resolvable:$true] %s475
          %478 = dma.vmem_to_hbm [thread:$0]  %s476, 128, %s473, %s462
        $region52: #{_lambda_.5} parent=47 // pred_fallthru
          _
      $region48: #{_lambda_.5} parent=5 // pred_fallthru
        _
      %p479 = scmp.le.s32.totalorder 2, %s16
      // Predicated region
      $region53: #{_lambda_.5} parent=5 // pred_check
        %p480 = pneg %p479
      $region54: #{_lambda_.5} parent=5 // pred_check_branch
        %482 = sbr.rel (%p480) target = $region56
      $region55: #{_lambda_.5} parent=5 // pred_region
        %s483 = ssub.s32 %s16, 2
        // Predicated region
        $region57: #{_lambda_.5} parent=55 // pred_check
          %p484 = pneg %p197
        $region58: #{_lambda_.5} parent=55 // pred_check_branch
          %486 = sbr.rel (%p484) target = $region60
        $region59: #{_lambda_.5} parent=55 // pred_region
          %s487 = sand.u32 %s182, 1
          %s488 = scalar_lea.sflag [#allocation3], %s487
          %s489 = sand.u32 %s182, 1
          %s490 = smul.addr %s489, 8
          %s491 = scalar_lea.vmem [#allocation2], %s490
          %492 = dma.done %s488, 128
        $region60: #{_lambda_.5} parent=55 // pred_fallthru
          _
      $region56: #{_lambda_.5} parent=5 // pred_fallthru
        _
    $region6: #{_lambda_.5} parent=1 // loop_footer
      %s20 = sadd.s32 1, %s16
    $region7: #{_lambda_.5} parent=1 // loop_footer_branch
      %15 = sbr.rel target = $region3
    $region8: #{_lambda_.5} parent=1 // loop_exit
      _
    %493 = vsyncpa [#allocation3], 1
    %s494 = scalar_lea.sflag [#allocation3], 1
    %495 = vsyncpa %s494, 1

// kernel: _lambda_.3
$region0: #{_lambda_.3}
  #allocation0 [shape = 'u32[]', space=smem, size = 0x4, offset = 0x4, fixed_abs, tag = 'smem constant byte address 0x4 - core index']
  #allocation1 [shape = 'u32[144,128]{1,0:T(1,128)}', space=vmem, size = 0x12000, scoped, tag = 'internal scratch']
  %s0 = inlined_call_operand.vmem [shape: f32[2,8,32], index: 0, kind: input, shape index: {}]
  %s1 = inlined_call_operand.vmem [shape: f32[2,8,8], index: 1, kind: input, shape index: {}]
  %s2 = inlined_call_operand.vmem [shape: bf16[4,32,8], index: 2, kind: input, shape index: {}]
  %s3 = inlined_call_operand.vmem [shape: f32[4,1,8], index: 3, kind: input, shape index: {}]
  %s4 = inlined_call_operand.vmem [shape: bf16[4,32,8], index: 4, kind: input, shape index: {}]
  %s5 = inlined_call_operand.vmem [shape: f32[4,1,8], index: 5, kind: input, shape index: {}]
  %s6 = inlined_call_operand.vmem [shape: bf16[4,32,8], index: 6, kind: input, shape index: {}]
  %s7 = inlined_call_operand.vmem [shape: f32[4,1,8], index: 7, kind: input, shape index: {}]
  %s8 = inlined_call_operand.vmem [shape: bf16[4,8,32], index: 8, kind: input, shape index: {}]
  %s9 = inlined_call_operand.vmem [shape: f32[1,32], index: 9, kind: input, shape index: {}]
  %s10 = inlined_call_operand.vmem [shape: f32[1,32], index: 10, kind: input, shape index: {}]
  %s11 = inlined_call_operand.vmem [shape: f32[1,32], index: 11, kind: input, shape index: {}]
  %s12 = inlined_call_operand.vmem [shape: f32[2,8,32], index: 12, kind: output, shape index: {}]
  %s13 = sld [smem:[#allocation0]]
  $region81: #{_lambda_.3} parent=0
    _
  %s15 = ssub.s32 1, %s13
  %s16 = scalar_select 0, %s15, %s13
  loop: start=0, step=1, limit=4
  $region2: #{_lambda_.3} parent=0 // loop_pre_header
    _
  $region3: #{_lambda_.3} parent=0 // loop_header
    %s18 = sphi 0, %s22
    %p19 = scmp.ge.s32.totalorder %s18, 4
    %s28 = sphi 0, %s30
    %s31 = sphi 0, %s28
    %s32 = sphi 0, %s31
    %s48 = sphi 0, %s32
    %s54 = sphi 0, %s56
    %s57 = sphi 0, %s54
    %s58 = sphi 0, %s57
    %s74 = sphi 0, %s58
    %s78 = sphi 0, %s78
    %s80 = sphi 0, %s78
    %s81 = sphi 0, %s80
    %s95 = sphi 0, %s81
    %s99 = sphi 0, %s99
    %s101 = sphi 0, %s99
    %s102 = sphi 0, %s101
    %s116 = sphi 0, %s102
    %s120 = sphi 0, %s120
    %s122 = sphi 0, %s120
    %s123 = sphi 0, %s122
    %s137 = sphi 0, %s123
    %s141 = sphi 0, %s141
    %s143 = sphi 0, %s141
    %s144 = sphi 0, %s143
    %s158 = sphi 0, %s144
    %s162 = sphi 0, %s162
    %s164 = sphi 0, %s162
    %s165 = sphi 0, %s164
    %s179 = sphi 0, %s165
    %s183 = sphi 0, %s183
    %s185 = sphi 0, %s183
    %s186 = sphi 0, %s185
    %s200 = sphi 0, %s186
    %s204 = sphi 0, %s204
    %s206 = sphi 0, %s204
    %s207 = sphi 0, %s206
    %s221 = sphi 0, %s207
    %s225 = sphi 0, %s225
    %s227 = sphi 0, %s225
    %s228 = sphi 0, %s227
    %s242 = sphi 0, %s228
    %s246 = sphi 0, %s246
    %s248 = sphi 0, %s246
    %s249 = sphi 0, %s248
    %s263 = sphi 0, %s249
    %s267 = sphi 0, %s267
    %s269 = sphi 0, %s267
    %s270 = sphi 0, %s269
    %s284 = sphi 0, %s270
    %s290 = sphi 0, %s292
    %s293 = sphi 0, %s290
    %s294 = sphi 0, %s293
    %s310 = sphi 0, %s294
  $region4: #{_lambda_.3} parent=0 // loop_header_branch
    %21 = sbr.rel (%p19) target = $region8
  $region5: #{_lambda_.3} parent=0 // loop_body
    %s23 = ssub.s32 %s18, 1
    %s24 = ssub.s32 %s18, 2
    %s25 = sadd.s32 %s18, 1
    %s26 = ssub.s32 %s18, %s25
    %p27 = scmp.eq.s32.totalorder %s26, 0
    %s29 = sadd.s32 %s28, 1
    %s30 = scalar_select %p27, %s28, %s29
    %p33 = pneg %p27
    %p34 = scmp.eq.s32.totalorder %s18, 1
    %p35 = por %p33, %p34
    %p36 = scmp.ne.s32.totalorder %s28, %s31
    %p37 = scmp.eq.s32.totalorder %s18, 0
    %p38 = por %p36, %p37
    %p39 = scmp.ne.s32.totalorder %s28, %s31
    %p40 = scmp.eq.s32.totalorder %s23, 1
    %p41 = por %p39, %p40
    %p42 = scmp.ne.s32.totalorder %s31, %s32
    %p43 = scmp.eq.s32.totalorder %s23, 0
    %p44 = por %p42, %p43
    %p45 = scmp.ne.s32.totalorder %s31, %s32
    %p46 = scmp.eq.s32.totalorder %s24, 1
    %p47 = por %p45, %p46
    %p49 = scmp.ne.s32.totalorder %s32, %s48
    %p50 = scmp.eq.s32.totalorder %s24, 0
    %p51 = por %p49, %p50
    %s52 = ssub.s32 %s18, %s25
    %p53 = scmp.eq.s32.totalorder %s52, 0
    %s55 = sadd.s32 %s54, 1
    %s56 = scalar_select %p53, %s54, %s55
    %p59 = pneg %p53
    %p60 = scmp.eq.s32.totalorder %s18, 1
    %p61 = por %p59, %p60
    %p62 = scmp.ne.s32.totalorder %s54, %s57
    %p63 = scmp.eq.s32.totalorder %s18, 0
    %p64 = por %p62, %p63
    %p65 = scmp.ne.s32.totalorder %s54, %s57
    %p66 = scmp.eq.s32.totalorder %s23, 1
    %p67 = por %p65, %p66
    %p68 = scmp.ne.s32.totalorder %s57, %s58
    %p69 = scmp.eq.s32.totalorder %s23, 0
    %p70 = por %p68, %p69
    %p71 = scmp.ne.s32.totalorder %s57, %s58
    %p72 = scmp.eq.s32.totalorder %s24, 1
    %p73 = por %p71, %p72
    %p75 = scmp.ne.s32.totalorder %s58, %s74
    %p76 = scmp.eq.s32.totalorder %s24, 0
    %p77 = por %p75, %p76
    %s79 = sadd.s32 %s78, 1
    %p82 = scmp.eq.s32.totalorder %s18, 1
    %p83 = scmp.ne.s32.totalorder %s78, %s80
    %p84 = scmp.eq.s32.totalorder %s18, 0
    %p85 = por %p83, %p84
    %p86 = scmp.ne.s32.totalorder %s78, %s80
    %p87 = scmp.eq.s32.totalorder %s23, 1
    %p88 = por %p86, %p87
    %p89 = scmp.ne.s32.totalorder %s80, %s81
    %p90 = scmp.eq.s32.totalorder %s23, 0
    %p91 = por %p89, %p90
    %p92 = scmp.ne.s32.totalorder %s80, %s81
    %p93 = scmp.eq.s32.totalorder %s24, 1
    %p94 = por %p92, %p93
    %p96 = scmp.ne.s32.totalorder %s81, %s95
    %p97 = scmp.eq.s32.totalorder %s24, 0
    %p98 = por %p96, %p97
    %s100 = sadd.s32 %s99, 1
    %p103 = scmp.eq.s32.totalorder %s18, 1
    %p104 = scmp.ne.s32.totalorder %s99, %s101
    %p105 = scmp.eq.s32.totalorder %s18, 0
    %p106 = por %p104, %p105
    %p107 = scmp.ne.s32.totalorder %s99, %s101
    %p108 = scmp.eq.s32.totalorder %s23, 1
    %p109 = por %p107, %p108
    %p110 = scmp.ne.s32.totalorder %s101, %s102
    %p111 = scmp.eq.s32.totalorder %s23, 0
    %p112 = por %p110, %p111
    %p113 = scmp.ne.s32.totalorder %s101, %s102
    %p114 = scmp.eq.s32.totalorder %s24, 1
    %p115 = por %p113, %p114
    %p117 = scmp.ne.s32.totalorder %s102, %s116
    %p118 = scmp.eq.s32.totalorder %s24, 0
    %p119 = por %p117, %p118
    %s121 = sadd.s32 %s120, 1
    %p124 = scmp.eq.s32.totalorder %s18, 1
    %p125 = scmp.ne.s32.totalorder %s120, %s122
    %p126 = scmp.eq.s32.totalorder %s18, 0
    %p127 = por %p125, %p126
    %p128 = scmp.ne.s32.totalorder %s120, %s122
    %p129 = scmp.eq.s32.totalorder %s23, 1
    %p130 = por %p128, %p129
    %p131 = scmp.ne.s32.totalorder %s122, %s123
    %p132 = scmp.eq.s32.totalorder %s23, 0
    %p133 = por %p131, %p132
    %p134 = scmp.ne.s32.totalorder %s122, %s123
    %p135 = scmp.eq.s32.totalorder %s24, 1
    %p136 = por %p134, %p135
    %p138 = scmp.ne.s32.totalorder %s123, %s137
    %p139 = scmp.eq.s32.totalorder %s24, 0
    %p140 = por %p138, %p139
    %s142 = sadd.s32 %s141, 1
    %p145 = scmp.eq.s32.totalorder %s18, 1
    %p146 = scmp.ne.s32.totalorder %s141, %s143
    %p147 = scmp.eq.s32.totalorder %s18, 0
    %p148 = por %p146, %p147
    %p149 = scmp.ne.s32.totalorder %s141, %s143
    %p150 = scmp.eq.s32.totalorder %s23, 1
    %p151 = por %p149, %p150
    %p152 = scmp.ne.s32.totalorder %s143, %s144
    %p153 = scmp.eq.s32.totalorder %s23, 0
    %p154 = por %p152, %p153
    %p155 = scmp.ne.s32.totalorder %s143, %s144
    %p156 = scmp.eq.s32.totalorder %s24, 1
    %p157 = por %p155, %p156
    %p159 = scmp.ne.s32.totalorder %s144, %s158
    %p160 = scmp.eq.s32.totalorder %s24, 0
    %p161 = por %p159, %p160
    %s163 = sadd.s32 %s162, 1
    %p166 = scmp.eq.s32.totalorder %s18, 1
    %p167 = scmp.ne.s32.totalorder %s162, %s164
    %p168 = scmp.eq.s32.totalorder %s18, 0
    %p169 = por %p167, %p168
    %p170 = scmp.ne.s32.totalorder %s162, %s164
    %p171 = scmp.eq.s32.totalorder %s23, 1
    %p172 = por %p170, %p171
    %p173 = scmp.ne.s32.totalorder %s164, %s165
    %p174 = scmp.eq.s32.totalorder %s23, 0
    %p175 = por %p173, %p174
    %p176 = scmp.ne.s32.totalorder %s164, %s165
    %p177 = scmp.eq.s32.totalorder %s24, 1
    %p178 = por %p176, %p177
    %p180 = scmp.ne.s32.totalorder %s165, %s179
    %p181 = scmp.eq.s32.totalorder %s24, 0
    %p182 = por %p180, %p181
    %s184 = sadd.s32 %s183, 1
    %p187 = scmp.eq.s32.totalorder %s18, 1
    %p188 = scmp.ne.s32.totalorder %s183, %s185
    %p189 = scmp.eq.s32.totalorder %s18, 0
    %p190 = por %p188, %p189
    %p191 = scmp.ne.s32.totalorder %s183, %s185
    %p192 = scmp.eq.s32.totalorder %s23, 1
    %p193 = por %p191, %p192
    %p194 = scmp.ne.s32.totalorder %s185, %s186
    %p195 = scmp.eq.s32.totalorder %s23, 0
    %p196 = por %p194, %p195
    %p197 = scmp.ne.s32.totalorder %s185, %s186
    %p198 = scmp.eq.s32.totalorder %s24, 1
    %p199 = por %p197, %p198
    %p201 = scmp.ne.s32.totalorder %s186, %s200
    %p202 = scmp.eq.s32.totalorder %s24, 0
    %p203 = por %p201, %p202
    %s205 = sadd.s32 %s204, 1
    %p208 = scmp.eq.s32.totalorder %s18, 1
    %p209 = scmp.ne.s32.totalorder %s204, %s206
    %p210 = scmp.eq.s32.totalorder %s18, 0
    %p211 = por %p209, %p210
    %p212 = scmp.ne.s32.totalorder %s204, %s206
    %p213 = scmp.eq.s32.totalorder %s23, 1
    %p214 = por %p212, %p213
    %p215 = scmp.ne.s32.totalorder %s206, %s207
    %p216 = scmp.eq.s32.totalorder %s23, 0
    %p217 = por %p215, %p216
    %p218 = scmp.ne.s32.totalorder %s206, %s207
    %p219 = scmp.eq.s32.totalorder %s24, 1
    %p220 = por %p218, %p219
    %p222 = scmp.ne.s32.totalorder %s207, %s221
    %p223 = scmp.eq.s32.totalorder %s24, 0
    %p224 = por %p222, %p223
    %s226 = sadd.s32 %s225, 1
    %p229 = scmp.eq.s32.totalorder %s18, 1
    %p230 = scmp.ne.s32.totalorder %s225, %s227
    %p231 = scmp.eq.s32.totalorder %s18, 0
    %p232 = por %p230, %p231
    %p233 = scmp.ne.s32.totalorder %s225, %s227
    %p234 = scmp.eq.s32.totalorder %s23, 1
    %p235 = por %p233, %p234
    %p236 = scmp.ne.s32.totalorder %s227, %s228
    %p237 = scmp.eq.s32.totalorder %s23, 0
    %p238 = por %p236, %p237
    %p239 = scmp.ne.s32.totalorder %s227, %s228
    %p240 = scmp.eq.s32.totalorder %s24, 1
    %p241 = por %p239, %p240
    %p243 = scmp.ne.s32.totalorder %s228, %s242
    %p244 = scmp.eq.s32.totalorder %s24, 0
    %p245 = por %p243, %p244
    %s247 = sadd.s32 %s246, 1
    %p250 = scmp.eq.s32.totalorder %s18, 1
    %p251 = scmp.ne.s32.totalorder %s246, %s248
    %p252 = scmp.eq.s32.totalorder %s18, 0
    %p253 = por %p251, %p252
    %p254 = scmp.ne.s32.totalorder %s246, %s248
    %p255 = scmp.eq.s32.totalorder %s23, 1
    %p256 = por %p254, %p255
    %p257 = scmp.ne.s32.totalorder %s248, %s249
    %p258 = scmp.eq.s32.totalorder %s23, 0
    %p259 = por %p257, %p258
    %p260 = scmp.ne.s32.totalorder %s248, %s249
    %p261 = scmp.eq.s32.totalorder %s24, 1
    %p262 = por %p260, %p261
    %p264 = scmp.ne.s32.totalorder %s249, %s263
    %p265 = scmp.eq.s32.totalorder %s24, 0
    %p266 = por %p264, %p265
    %s268 = sadd.s32 %s267, 1
    %p271 = scmp.eq.s32.totalorder %s18, 1
    %p272 = scmp.ne.s32.totalorder %s267, %s269
    %p273 = scmp.eq.s32.totalorder %s18, 0
    %p274 = por %p272, %p273
    %p275 = scmp.ne.s32.totalorder %s267, %s269
    %p276 = scmp.eq.s32.totalorder %s23, 1
    %p277 = por %p275, %p276
    %p278 = scmp.ne.s32.totalorder %s269, %s270
    %p279 = scmp.eq.s32.totalorder %s23, 0
    %p280 = por %p278, %p279
    %p281 = scmp.ne.s32.totalorder %s269, %s270
    %p282 = scmp.eq.s32.totalorder %s24, 1
    %p283 = por %p281, %p282
    %p285 = scmp.ne.s32.totalorder %s270, %s284
    %p286 = scmp.eq.s32.totalorder %s24, 0
    %p287 = por %p285, %p286
    %s288 = ssub.s32 %s18, %s25
    %p289 = scmp.eq.s32.totalorder %s288, 0
    %s291 = sadd.s32 %s290, 1
    %s292 = scalar_select %p289, %s290, %s291
    %p295 = pneg %p289
    %p296 = scmp.eq.s32.totalorder %s18, 1
    %p297 = por %p295, %p296
    %p298 = scmp.ne.s32.totalorder %s290, %s293
    %p299 = scmp.eq.s32.totalorder %s18, 0
    %p300 = por %p298, %p299
    %p301 = scmp.ne.s32.totalorder %s290, %s293
    %p302 = scmp.eq.s32.totalorder %s23, 1
    %p303 = por %p301, %p302
    %p304 = scmp.ne.s32.totalorder %s293, %s294
    %p305 = scmp.eq.s32.totalorder %s23, 0
    %p306 = por %p304, %p305
    %p307 = scmp.ne.s32.totalorder %s293, %s294
    %p308 = scmp.eq.s32.totalorder %s24, 1
    %p309 = por %p307, %p308
    %p311 = scmp.ne.s32.totalorder %s294, %s310
    %p312 = scmp.eq.s32.totalorder %s24, 0
    %p313 = por %p311, %p312
    %p314 = scmp.le.s32.totalorder 1, %s18
    %p315 = scmp.lt.s32.totalorder %s18, 3
    %p316 = pnand %p314, %p315
    %p317 = pneg %p316
    // Predicated region
    $region9: #{_lambda_.3} parent=5 // pred_check
      _
    $region10: #{_lambda_.3} parent=5 // pred_check_branch
      %319 = sbr.rel (%p316) target = $region12
    $region11: #{_lambda_.3} parent=5 // pred_region
      %s320 = ssub.s32 %s18, 1
      // Predicated region
      $region13: #{_lambda_.3} parent=11 // pred_check
        %p321 = pneg %p91
      $region14: #{_lambda_.3} parent=11 // pred_check_branch
        %323 = sbr.rel (%p321) target = $region16
      $region15: #{_lambda_.3} parent=11 // pred_region
        _
      $region16: #{_lambda_.3} parent=11 // pred_fallthru
        _
      // Predicated region
      $region17: #{_lambda_.3} parent=11 // pred_check
        %p324 = pneg %p112
      $region18: #{_lambda_.3} parent=11 // pred_check_branch
        %326 = sbr.rel (%p324) target = $region20
      $region19: #{_lambda_.3} parent=11 // pred_region
        _
      $region20: #{_lambda_.3} parent=11 // pred_fallthru
        _
      // Predicated region
      $region21: #{_lambda_.3} parent=11 // pred_check
        %p327 = pneg %p133
      $region22: #{_lambda_.3} parent=11 // pred_check_branch
        %329 = sbr.rel (%p327) target = $region24
      $region23: #{_lambda_.3} parent=11 // pred_region
        _
      $region24: #{_lambda_.3} parent=11 // pred_fallthru
        _
      // Predicated region
      $region25: #{_lambda_.3} parent=11 // pred_check
        %p330 = pneg %p154
      $region26: #{_lambda_.3} parent=11 // pred_check_branch
        %332 = sbr.rel (%p330) target = $region28
      $region27: #{_lambda_.3} parent=11 // pred_region
        _
      $region28: #{_lambda_.3} parent=11 // pred_fallthru
        _
      // Predicated region
      $region29: #{_lambda_.3} parent=11 // pred_check
        %p333 = pneg %p175
      $region30: #{_lambda_.3} parent=11 // pred_check_branch
        %335 = sbr.rel (%p333) target = $region32
      $region31: #{_lambda_.3} parent=11 // pred_region
        _
      $region32: #{_lambda_.3} parent=11 // pred_fallthru
        _
      // Predicated region
      $region33: #{_lambda_.3} parent=11 // pred_check
        %p336 = pneg %p196
      $region34: #{_lambda_.3} parent=11 // pred_check_branch
        %338 = sbr.rel (%p336) target = $region36
      $region35: #{_lambda_.3} parent=11 // pred_region
        _
      $region36: #{_lambda_.3} parent=11 // pred_fallthru
        _
      // Predicated region
      $region37: #{_lambda_.3} parent=11 // pred_check
        %p339 = pneg %p217
      $region38: #{_lambda_.3} parent=11 // pred_check_branch
        %341 = sbr.rel (%p339) target = $region40
      $region39: #{_lambda_.3} parent=11 // pred_region
        _
      $region40: #{_lambda_.3} parent=11 // pred_fallthru
        _
      // Predicated region
      $region41: #{_lambda_.3} parent=11 // pred_check
        %p342 = pneg %p238
      $region42: #{_lambda_.3} parent=11 // pred_check_branch
        %344 = sbr.rel (%p342) target = $region44
      $region43: #{_lambda_.3} parent=11 // pred_region
        _
      $region44: #{_lambda_.3} parent=11 // pred_fallthru
        _
      // Predicated region
      $region45: #{_lambda_.3} parent=11 // pred_check
        %p345 = pneg %p259
      $region46: #{_lambda_.3} parent=11 // pred_check_branch
        %347 = sbr.rel (%p345) target = $region48
      $region47: #{_lambda_.3} parent=11 // pred_region
        _
      $region48: #{_lambda_.3} parent=11 // pred_fallthru
        _
      // Predicated region
      $region49: #{_lambda_.3} parent=11 // pred_check
        %p348 = pneg %p280
      $region50: #{_lambda_.3} parent=11 // pred_check_branch
        %350 = sbr.rel (%p348) target = $region52
      $region51: #{_lambda_.3} parent=11 // pred_region
        _
      $region52: #{_lambda_.3} parent=11 // pred_fallthru
        _
    $region12: #{_lambda_.3} parent=5 // pred_fallthru
      _
    %p351 = scmp.lt.s32.totalorder %s18, 2
    // Predicated region
    $region53: #{_lambda_.3} parent=5 // pred_check
      %p352 = pneg %p351
    $region54: #{_lambda_.3} parent=5 // pred_check_branch
      %354 = sbr.rel (%p352) target = $region56
    $region55: #{_lambda_.3} parent=5 // pred_region
      // Predicated region
      $region57: #{_lambda_.3} parent=55 // pred_check
        %p355 = pneg %p38
      $region58: #{_lambda_.3} parent=55 // pred_check_branch
        %357 = sbr.rel (%p355) target = $region60
      $region59: #{_lambda_.3} parent=55 // pred_region
        %p358 = scmp.lt.s32.totalorder %s18, 1
        %s359 = scalar_select %p358, %s18, 1
        %s360 = smul.addr %s359, 8
        %s361 = scalar_lea.vmem %s0, %s360
      $region60: #{_lambda_.3} parent=55 // pred_fallthru
        _
      // Predicated region
      $region61: #{_lambda_.3} parent=55 // pred_check
        %p362 = pneg %p64
      $region62: #{_lambda_.3} parent=55 // pred_check_branch
        %364 = sbr.rel (%p362) target = $region64
      $region63: #{_lambda_.3} parent=55 // pred_region
        %p365 = scmp.lt.s32.totalorder %s18, 1
        %s366 = scalar_select %p365, %s18, 1
        %s367 = smul.addr %s366, 8
        %s368 = scalar_lea.vmem %s1, %s367
      $region64: #{_lambda_.3} parent=55 // pred_fallthru
        _
    $region56: #{_lambda_.3} parent=5 // pred_fallthru
      _
    %p369 = scmp.le.s32.totalorder 1, %s18
    %p370 = scmp.lt.s32.totalorder %s18, 3
    %p371 = pnand %p369, %p370
    %p372 = pneg %p371
    // Predicated region
    $region65: #{_lambda_.3} parent=5 // pred_check
      _
    $region66: #{_lambda_.3} parent=5 // pred_check_branch
      %374 = sbr.rel (%p371) target = $region68
    $region67: #{_lambda_.3} parent=5 // pred_region
      %s375 = ssub.s32 %s18, 1
      %p376 = scmp.lt.s32.totalorder %s23, 1
      %s377 = scalar_select %p376, %s23, 1
      %s378 = smul.addr %s377, 8
      %s379 = scalar_lea.vmem %s0, %s378
      %p380 = pneg %p44
      %p381 = pneg %p41
      %p382 = scmp.lt.s32.totalorder %s23, 1
      %s383 = scalar_select %p382, %s23, 1
      %s384 = smul.addr %s383, 8
      %s385 = scalar_lea.vmem %s1, %s384
      %p386 = pneg %p70
      %p387 = pneg %p67
      %p388 = pneg %p91
      %p389 = pneg %p88
      %p390 = pneg %p112
      %p391 = pneg %p109
      %p392 = pneg %p133
      %p393 = pneg %p130
      %p394 = pneg %p154
      %p395 = pneg %p151
      %p396 = pneg %p175
      %p397 = pneg %p172
      %p398 = pneg %p196
      %p399 = pneg %p193
      %p400 = pneg %p217
      %p401 = pneg %p214
      %p402 = pneg %p238
      %p403 = pneg %p235
      %p404 = pneg %p259
      %p405 = pneg %p256
      %p406 = pneg %p280
      %p407 = pneg %p277
      %p408 = pneg %p306
      %p409 = pneg %p303
      %p410 = scmp.lt.s32.totalorder %s23, 1
      %s411 = scalar_select %p410, %s23, 1
      %s412 = smul.addr %s411, 8
      %s413 = scalar_lea.vmem %s12, %s412
      %p414 = scmp.lt.s32.totalorder %s23, 1
      %s415 = scalar_select %p414, %s23, 1
      %s416 = smul.addr %s415, 8
      %s417 = scalar_lea.vmem %s0, %s416
      %p418 = scmp.lt.s32.totalorder %s23, 1
      %s419 = scalar_select %p418, %s23, 1
      %s420 = smul.addr %s419, 8
      %s421 = scalar_lea.vmem %s1, %s420
      %p422 = scmp.lt.s32.totalorder %s23, 1
      %s423 = scalar_select %p422, %s23, 1
      %s424 = smul.addr %s423, 8
      %s425 = scalar_lea.vmem %s12, %s424
      %v427 = vld [vmem:[%s417] sm:$0xff]
      %v428 = vpack.c.bf16 %v427, %v427
      %v429 = vld [vmem:[%s421] sm:$0xff]
      %v430 = vld [vmem:[%s2] sm:$0xf]
      %v431 = vld [vmem:[%s2 + $0x4] sm:$0xf]
      %v432 = vld [vmem:[%s2 + $0x8] sm:$0xf]
      %v433 = vld [vmem:[%s2 + $0xc] sm:$0xf]
      %v434 = vld [vmem:[%s3] sm:$0x1]
      %v436 = vlaneseq
      %v437 = vshrl.u32 %v436, 7
      %v438 = vsub.s32 0, %v437
      %v439 = vrot.slane %v434, %v438
      %v445 = vunpack.c.l.b16 %v430
      %v446 = vunpack.c.l.b16 %v431
      %v447 = vunpack.c.l.b16 %v432
      %v448 = vunpack.c.l.b16 %v433
      %v449 = vpack.c.b16 %v446, %v445
      %v450 = vpack.c.b16 %v448, %v447
      %vm453 = vcmask 261120
      %v455 = vsel %vm453, %v428, 0
      %457 = vmatprep.subr.bf16.mxu0 0
      %458 = vmatpush1.bf16.msra.mxu0 %v449
      %459 = vmatprep.subr.bf16.mxu0 0
      %460 = vmatpush1.bf16.msra.mxu0 %v450
      %461 = vmatprep.subr.bf16.mxu0 0
      %462 = vmatpush1.bf16.msra.mxu0 0
      %463 = vmatprep.subr.bf16.mxu0 0
      %464 = vmatpush1.bf16.msra.mxu0 0
      %465 = vmatprep.subr.bf16.mxu0 0
      %466 = vmatpush1.bf16.msra.mxu0 0
      %467 = vmatprep.subr.bf16.mxu0 0
      %468 = vmatpush1.bf16.msra.mxu0 0
      %469 = vmatprep.subr.bf16.mxu0 0
      %470 = vmatpush1.bf16.msra.mxu0 0
      %471 = vmatprep.subr.bf16.mxu0 0
      %472 = vmatpush1.bf16.msra.mxu0 0
      %473 = vmatprep.subr.bf16.mxu0 0
      %474 = vmatpush1.bf16.msra.mxu0 0
      %475 = vmatprep.subr.bf16.mxu0 0
      %476 = vmatpush1.bf16.msra.mxu0 0
      %477 = vmatprep.subr.bf16.mxu0 0
      %478 = vmatpush1.bf16.msra.mxu0 0
      %479 = vmatprep.subr.bf16.mxu0 0
      %480 = vmatpush1.bf16.msra.mxu0 0
      %481 = vmatprep.subr.bf16.mxu0 0
      %482 = vmatpush1.bf16.msra.mxu0 0
      %483 = vmatprep.subr.bf16.mxu0 0
      %484 = vmatpush1.bf16.msra.mxu0 0
      %485 = vmatprep.subr.bf16.mxu0 0
      %486 = vmatpush1.bf16.msra.mxu0 0
      %487 = vmatprep.subr.bf16.mxu0 0
      %488 = vmatpush1.bf16.msra.mxu0 0
      %489 = vmatprep.mubr.bf16.mxu0 0
      %490 = vmatmul.mubr.bf16.gmra.mrb[0].mxu0 %v455
      %v491 = vpop.f32.mrb[0].mxu0
      %v492 = vadd.f32 %v439, %v491
      %v493 = vpop.f32.mrb[0].mxu0
      %v494 = vpop.f32.mrb[0].mxu0
      %v495 = vpop.f32.mrb[0].mxu0
      %496 = vdwg.mxu0
      %v497 = vmul.f32 %v492, 0.35355338
      %v498 = vld [vmem:[%s4] sm:$0xf]
      %v499 = vld [vmem:[%s4 + $0x4] sm:$0xf]
      %v500 = vld [vmem:[%s4 + $0x8] sm:$0xf]
      %v501 = vld [vmem:[%s4 + $0xc] sm:$0xf]
      %v502 = vld [vmem:[%s5] sm:$0x1]
      %v504 = vlaneseq
      %v505 = vshrl.u32 %v504, 7
      %v506 = vsub.s32 0, %v505
      %v507 = vrot.slane %v502, %v506
      %v513 = vunpack.c.l.b16 %v498
      %v514 = vunpack.c.l.b16 %v499
      %v515 = vunpack.c.l.b16 %v500
      %v516 = vunpack.c.l.b16 %v501
      %v517 = vpack.c.b16 %v514, %v513
      %v518 = vpack.c.b16 %v516, %v515
      %521 = vmatprep.subr.bf16.mxu0 0
      %522 = vmatpush1.bf16.msra.mxu0 %v517
      %523 = vmatprep.subr.bf16.mxu0 0
      %524 = vmatpush1.bf16.msra.mxu0 %v518
      %525 = vmatprep.subr.bf16.mxu0 0
      %526 = vmatpush1.bf16.msra.mxu0 0
      %527 = vmatprep.subr.bf16.mxu0 0
      %528 = vmatpush1.bf16.msra.mxu0 0
      %529 = vmatprep.subr.bf16.mxu0 0
      %530 = vmatpush1.bf16.msra.mxu0 0
      %531 = vmatprep.subr.bf16.mxu0 0
      %532 = vmatpush1.bf16.msra.mxu0 0
      %533 = vmatprep.subr.bf16.mxu0 0
      %534 = vmatpush1.bf16.msra.mxu0 0
      %535 = vmatprep.subr.bf16.mxu0 0
      %536 = vmatpush1.bf16.msra.mxu0 0
      %537 = vmatprep.subr.bf16.mxu0 0
      %538 = vmatpush1.bf16.msra.mxu0 0
      %539 = vmatprep.subr.bf16.mxu0 0
      %540 = vmatpush1.bf16.msra.mxu0 0
      %541 = vmatprep.subr.bf16.mxu0 0
      %542 = vmatpush1.bf16.msra.mxu0 0
      %543 = vmatprep.subr.bf16.mxu0 0
      %544 = vmatpush1.bf16.msra.mxu0 0
      %545 = vmatprep.subr.bf16.mxu0 0
      %546 = vmatpush1.bf16.msra.mxu0 0
      %547 = vmatprep.subr.bf16.mxu0 0
      %548 = vmatpush1.bf16.msra.mxu0 0
      %549 = vmatprep.subr.bf16.mxu0 0
      %550 = vmatpush1.bf16.msra.mxu0 0
      %551 = vmatprep.subr.bf16.mxu0 0
      %552 = vmatpush1.bf16.msra.mxu0 0
      %553 = vmatprep.mubr.bf16.mxu0 0
      %554 = vmatmul.mubr.bf16.gmra.mrb[0].mxu0 %v455
      %v555 = vpop.f32.mrb[0].mxu0
      %v556 = vadd.f32 %v507, %v555
      %v557 = vpop.f32.mrb[0].mxu0
      %v558 = vpop.f32.mrb[0].mxu0
      %v559 = vpop.f32.mrb[0].mxu0
      %560 = vdwg.mxu0
      %v561 = vld [vmem:[%s6] sm:$0xf]
      %v562 = vld [vmem:[%s6 + $0x4] sm:$0xf]
      %v563 = vld [vmem:[%s6 + $0x8] sm:$0xf]
      %v564 = vld [vmem:[%s6 + $0xc] sm:$0xf]
      %v565 = vld [vmem:[%s7] sm:$0x1]
      %v567 = vlaneseq
      %v568 = vshrl.u32 %v567, 7
      %v569 = vsub.s32 0, %v568
      %v570 = vrot.slane %v565, %v569
      %v576 = vunpack.c.l.b16 %v561
      %v577 = vunpack.c.l.b16 %v562
      %v578 = vunpack.c.l.b16 %v563
      %v579 = vunpack.c.l.b16 %v564
      %v580 = vpack.c.b16 %v577, %v576
      %v581 = vpack.c.b16 %v579, %v578
      %584 = vmatprep.subr.bf16.mxu0 0
      %585 = vmatpush1.bf16.msra.mxu0 %v580
      %586 = vmatprep.subr.bf16.mxu0 0
      %587 = vmatpush1.bf16.msra.mxu0 %v581
      %588 = vmatprep.subr.bf16.mxu0 0
      %589 = vmatpush1.bf16.msra.mxu0 0
      %590 = vmatprep.subr.bf16.mxu0 0
      %591 = vmatpush1.bf16.msra.mxu0 0
      %592 = vmatprep.subr.bf16.mxu0 0
      %593 = vmatpush1.bf16.msra.mxu0 0
      %594 = vmatprep.subr.bf16.mxu0 0
      %595 = vmatpush1.bf16.msra.mxu0 0
      %596 = vmatprep.subr.bf16.mxu0 0
      %597 = vmatpush1.bf16.msra.mxu0 0
      %598 = vmatprep.subr.bf16.mxu0 0
      %599 = vmatpush1.bf16.msra.mxu0 0
      %600 = vmatprep.subr.bf16.mxu0 0
      %601 = vmatpush1.bf16.msra.mxu0 0
      %602 = vmatprep.subr.bf16.mxu0 0
      %603 = vmatpush1.bf16.msra.mxu0 0
      %604 = vmatprep.subr.bf16.mxu0 0
      %605 = vmatpush1.bf16.msra.mxu0 0
      %606 = vmatprep.subr.bf16.mxu0 0
      %607 = vmatpush1.bf16.msra.mxu0 0
      %608 = vmatprep.subr.bf16.mxu0 0
      %609 = vmatpush1.bf16.msra.mxu0 0
      %610 = vmatprep.subr.bf16.mxu0 0
      %611 = vmatpush1.bf16.msra.mxu0 0
      %612 = vmatprep.subr.bf16.mxu0 0
      %613 = vmatpush1.bf16.msra.mxu0 0
      %614 = vmatprep.subr.bf16.mxu0 0
      %615 = vmatpush1.bf16.msra.mxu0 0
      %616 = vmatprep.mubr.bf16.mxu0 0
      %617 = vmatmul.mubr.bf16.gmra.mrb[0].mxu0 %v455
      %v618 = vpop.f32.mrb[0].mxu0
      %v619 = vadd.f32 %v570, %v618
      %v620 = vpop.f32.mrb[0].mxu0
      %v621 = vpop.f32.mrb[0].mxu0
      %v622 = vpop.f32.mrb[0].mxu0
      %623 = vdwg.mxu0
      %v624 = vpack.c.bf16 %v497, %v497
      %v625 = vpack.c.bf16 %v556, %v556
      %vm626 = vcmask 64512
      %v628 = vsel %vm626, %v624, 0
      %v631 = vsel %vm626, %v625, 0
      %633 = vmatprep.subr.bf16.mxu0 0
      %634 = vmatpush1.bf16.xpose.msra.mxu0 %v631
      %635 = vmatprep.subr.bf16.mxu0 0
      %636 = vmatpush1.bf16.xpose.msra.mxu0 0
      %637 = vmatprep.subr.bf16.mxu0 0
      %638 = vmatpush1.bf16.xpose.msra.mxu0 0
      %639 = vmatprep.subr.bf16.mxu0 0
      %640 = vmatpush1.bf16.xpose.msra.mxu0 0
      %641 = vmatprep.subr.bf16.mxu0 0
      %642 = vmatpush1.bf16.xpose.msra.mxu0 0
      %643 = vmatprep.subr.bf16.mxu0 0
      %644 = vmatpush1.bf16.xpose.msra.mxu0 0
      %645 = vmatprep.subr.bf16.mxu0 0
      %646 = vmatpush1.bf16.xpose.msra.mxu0 0
      %647 = vmatprep.subr.bf16.mxu0 0
      %648 = vmatpush1.bf16.xpose.msra.mxu0 0
      %649 = vmatprep.subr.bf16.mxu0 0
      %650 = vmatpush1.bf16.xpose.msra.mxu0 0
      %651 = vmatprep.subr.bf16.mxu0 0
      %652 = vmatpush1.bf16.xpose.msra.mxu0 0
      %653 = vmatprep.subr.bf16.mxu0 0
      %654 = vmatpush1.bf16.xpose.msra.mxu0 0
      %655 = vmatprep.subr.bf16.mxu0 0
      %656 = vmatpush1.bf16.xpose.msra.mxu0 0
      %657 = vmatprep.subr.bf16.mxu0 0
      %658 = vmatpush1.bf16.xpose.msra.mxu0 0
      %659 = vmatprep.subr.bf16.mxu0 0
      %660 = vmatpush1.bf16.xpose.msra.mxu0 0
      %661 = vmatprep.subr.bf16.mxu0 0
      %662 = vmatpush1.bf16.xpose.msra.mxu0 0
      %663 = vmatprep.subr.bf16.mxu0 0
      %664 = vmatpush1.bf16.xpose.msra.mxu0 0
      %665 = vmatprep.mubr.bf16.mxu0 0
      %666 = vmatmul.mubr.bf16.gmra.mrb[0].mxu0 %v628
      %v667 = vpop.f32.mrb[0].mxu0
      %v668 = vadd.f32 %v429, %v667
      %v669 = vpop.f32.mrb[0].mxu0
      %v670 = vpop.f32.mrb[0].mxu0
      %v671 = vpop.f32.mrb[0].mxu0
      %672 = vdwg.mxu0
      %v673 = vsel %vm626, %v668, -inf
      %674 = vmax.xlane.f32.xlu0 %v673
      %v675 = vpop.xlane.xlu0 %674
      %v676 = vsub.f32 %v668, %v675
      %v677 = vmul.f32 %v676, 1.442695
      %v678 = vpow.pop %v677
      %v679 = vsel %vm626, %v678, 0.0
      %680 = vadd.xlane.f32.xlu0 %v679
      %v681 = vpop.xlane.xlu0 %680
      %v682 = vrcp.pop %v681
      %v683 = vmul.f32 %v678, %v682
      %v684 = vpack.c.bf16 %v683, %v683
      %v685 = vpack.c.bf16 %v619, %v619
      %v687 = vsel %vm626, %v684, 0
      %vm689 = vcmask 1043456
      %v691 = vsel %vm689, %v685, 0
      %693 = vmatprep.subr.bf16.mxu0 0
      %694 = vmatpush1.bf16.msra.mxu0 %v691
      %695 = vmatprep.subr.bf16.mxu0 0
      %696 = vmatpush1.bf16.msra.mxu0 0
      %697 = vmatprep.subr.bf16.mxu0 0
      %698 = vmatpush1.bf16.msra.mxu0 0
      %699 = vmatprep.subr.bf16.mxu0 0
      %700 = vmatpush1.bf16.msra.mxu0 0
      %701 = vmatprep.subr.bf16.mxu0 0
      %702 = vmatpush1.bf16.msra.mxu0 0
      %703 = vmatprep.subr.bf16.mxu0 0
      %704 = vmatpush1.bf16.msra.mxu0 0
      %705 = vmatprep.subr.bf16.mxu0 0
      %706 = vmatpush1.bf16.msra.mxu0 0
      %707 = vmatprep.subr.bf16.mxu0 0
      %708 = vmatpush1.bf16.msra.mxu0 0
      %709 = vmatprep.subr.bf16.mxu0 0
      %710 = vmatpush1.bf16.msra.mxu0 0
      %711 = vmatprep.subr.bf16.mxu0 0
      %712 = vmatpush1.bf16.msra.mxu0 0
      %713 = vmatprep.subr.bf16.mxu0 0
      %714 = vmatpush1.bf16.msra.mxu0 0
      %715 = vmatprep.subr.bf16.mxu0 0
      %716 = vmatpush1.bf16.msra.mxu0 0
      %717 = vmatprep.subr.bf16.mxu0 0
      %718 = vmatpush1.bf16.msra.mxu0 0
      %719 = vmatprep.subr.bf16.mxu0 0
      %720 = vmatpush1.bf16.msra.mxu0 0
      %721 = vmatprep.subr.bf16.mxu0 0
      %722 = vmatpush1.bf16.msra.mxu0 0
      %723 = vmatprep.subr.bf16.mxu0 0
      %724 = vmatpush1.bf16.msra.mxu0 0
      %725 = vmatprep.mubr.bf16.mxu0 0
      %726 = vmatmul.mubr.bf16.gmra.mrb[0].mxu0 %v687
      %v727 = vpop.f32.mrb[0].mxu0
      %v728 = vadd.f32 0.0, %v727
      %v729 = vpop.f32.mrb[0].mxu0
      %v730 = vpop.f32.mrb[0].mxu0
      %v731 = vpop.f32.mrb[0].mxu0
      %732 = vdwg.mxu0
      %v733 = vpack.c.bf16 %v728, %v728
      %v734 = vld [vmem:[%s8] sm:$0xf]
      %s735 = scalar_lea.vmem %s2, 16
      %v736 = vld [vmem:[%s735] sm:$0xf]
      %v737 = vld [vmem:[%s735 + $0x4] sm:$0xf]
      %v738 = vld [vmem:[%s735 + $0x8] sm:$0xf]
      %v739 = vld [vmem:[%s735 + $0xc] sm:$0xf]
      %s740 = scalar_lea.vmem %s3, 1
      %v741 = vld [vmem:[%s740] sm:$0x1]
      %v743 = vlaneseq
      %v744 = vshrl.u32 %v743, 7
      %v745 = vsub.s32 0, %v744
      %v746 = vrot.slane %v741, %v745
      %v752 = vunpack.c.l.b16 %v736
      %v753 = vunpack.c.l.b16 %v737
      %v754 = vunpack.c.l.b16 %v738
      %v755 = vunpack.c.l.b16 %v739
      %v756 = vpack.c.b16 %v753, %v752
      %v757 = vpack.c.b16 %v755, %v754
      %760 = vmatprep.subr.bf16.mxu0 0
      %761 = vmatpush1.bf16.msra.mxu0 %v756
      %762 = vmatprep.subr.bf16.mxu0 0
      %763 = vmatpush1.bf16.msra.mxu0 %v757
      %764 = vmatprep.subr.bf16.mxu0 0
      %765 = vmatpush1.bf16.msra.mxu0 0
      %766 = vmatprep.subr.bf16.mxu0 0
      %767 = vmatpush1.bf16.msra.mxu0 0
      %768 = vmatprep.subr.bf16.mxu0 0
      %769 = vmatpush1.bf16.msra.mxu0 0
      %770 = vmatprep.subr.bf16.mxu0 0
      %771 = vmatpush1.bf16.msra.mxu0 0
      %772 = vmatprep.subr.bf16.mxu0 0
      %773 = vmatpush1.bf16.msra.mxu0 0
      %774 = vmatprep.subr.bf16.mxu0 0
      %775 = vmatpush1.bf16.msra.mxu0 0
      %776 = vmatprep.subr.bf16.mxu0 0
      %777 = vmatpush1.bf16.msra.mxu0 0
      %778 = vmatprep.subr.bf16.mxu0 0
      %779 = vmatpush1.bf16.msra.mxu0 0
      %780 = vmatprep.subr.bf16.mxu0 0
      %781 = vmatpush1.bf16.msra.mxu0 0
      %782 = vmatprep.subr.bf16.mxu0 0
      %783 = vmatpush1.bf16.msra.mxu0 0
      %784 = vmatprep.subr.bf16.mxu0 0
      %785 = vmatpush1.bf16.msra.mxu0 0
      %786 = vmatprep.subr.bf16.mxu0 0
      %787 = vmatpush1.bf16.msra.mxu0 0
      %788 = vmatprep.subr.bf16.mxu0 0
      %789 = vmatpush1.bf16.msra.mxu0 0
      %790 = vmatprep.subr.bf16.mxu0 0
      %791 = vmatpush1.bf16.msra.mxu0 0
      %792 = vmatprep.mubr.bf16.mxu0 0
      %793 = vmatmul.mubr.bf16.gmra.mrb[0].mxu0 %v455
      %v794 = vpop.f32.mrb[0].mxu0
      %v795 = vadd.f32 %v746, %v794
      %v796 = vpop.f32.mrb[0].mxu0
      %v797 = vpop.f32.mrb[0].mxu0
      %v798 = vpop.f32.mrb[0].mxu0
      %799 = vdwg.mxu0
      %v800 = vmul.f32 %v795, 0.35355338
      %s801 = scalar_lea.vmem %s4, 16
      %v802 = vld [vmem:[%s801] sm:$0xf]
      %v803 = vld [vmem:[%s801 + $0x4] sm:$0xf]
      %v804 = vld [vmem:[%s801 + $0x8] sm:$0xf]
      %v805 = vld [vmem:[%s801 + $0xc] sm:$0xf]
      %s806 = scalar_lea.vmem %s5, 1
      %v807 = vld [vmem:[%s806] sm:$0x1]
      %v809 = vlaneseq
      %v810 = vshrl.u32 %v809, 7
      %v811 = vsub.s32 0, %v810
      %v812 = vrot.slane %v807, %v811
      %v818 = vunpack.c.l.b16 %v802
      %v819 = vunpack.c.l.b16 %v803
      %v820 = vunpack.c.l.b16 %v804
      %v821 = vunpack.c.l.b16 %v805
      %v822 = vpack.c.b16 %v819, %v818
      %v823 = vpack.c.b16 %v821, %v820
      %826 = vmatprep.subr.bf16.mxu0 0
      %827 = vmatpush1.bf16.msra.mxu0 %v822
      %828 = vmatprep.subr.bf16.mxu0 0
      %829 = vmatpush1.bf16.msra.mxu0 %v823
      %830 = vmatprep.subr.bf16.mxu0 0
      %831 = vmatpush1.bf16.msra.mxu0 0
      %832 = vmatprep.subr.bf16.mxu0 0
      %833 = vmatpush1.bf16.msra.mxu0 0
      %834 = vmatprep.subr.bf16.mxu0 0
      %835 = vmatpush1.bf16.msra.mxu0 0
      %836 = vmatprep.subr.bf16.mxu0 0
      %837 = vmatpush1.bf16.msra.mxu0 0
      %838 = vmatprep.subr.bf16.mxu0 0
      %839 = vmatpush1.bf16.msra.mxu0 0
      %840 = vmatprep.subr.bf16.mxu0 0
      %841 = vmatpush1.bf16.msra.mxu0 0
      %842 = vmatprep.subr.bf16.mxu0 0
      %843 = vmatpush1.bf16.msra.mxu0 0
      %844 = vmatprep.subr.bf16.mxu0 0
      %845 = vmatpush1.bf16.msra.mxu0 0
      %846 = vmatprep.subr.bf16.mxu0 0
      %847 = vmatpush1.bf16.msra.mxu0 0
      %848 = vmatprep.subr.bf16.mxu0 0
      %849 = vmatpush1.bf16.msra.mxu0 0
      %850 = vmatprep.subr.bf16.mxu0 0
      %851 = vmatpush1.bf16.msra.mxu0 0
      %852 = vmatprep.subr.bf16.mxu0 0
      %853 = vmatpush1.bf16.msra.mxu0 0
      %854 = vmatprep.subr.bf16.mxu0 0
      %855 = vmatpush1.bf16.msra.mxu0 0
      %856 = vmatprep.subr.bf16.mxu0 0
      %857 = vmatpush1.bf16.msra.mxu0 0
      %858 = vmatprep.mubr.bf16.mxu0 0
      %859 = vmatmul.mubr.bf16.gmra.mrb[0].mxu0 %v455
      %v860 = vpop.f32.mrb[0].mxu0
      %v861 = vadd.f32 %v812, %v860
      %v862 = vpop.f32.mrb[0].mxu0
      %v863 = vpop.f32.mrb[0].mxu0
      %v864 = vpop.f32.mrb[0].mxu0
      %865 = vdwg.mxu0
      %s866 = scalar_lea.vmem %s6, 16
      %v867 = vld [vmem:[%s866] sm:$0xf]
      %v868 = vld [vmem:[%s866 + $0x4] sm:$0xf]
      %v869 = vld [vmem:[%s866 + $0x8] sm:$0xf]
      %v870 = vld [vmem:[%s866 + $0xc] sm:$0xf]
      %s871 = scalar_lea.vmem %s7, 1
      %v872 = vld [vmem:[%s871] sm:$0x1]
      %v874 = vlaneseq
      %v875 = vshrl.u32 %v874, 7
      %v876 = vsub.s32 0, %v875
      %v877 = vrot.slane %v872, %v876
      %v883 = vunpack.c.l.b16 %v867
      %v884 = vunpack.c.l.b16 %v868
      %v885 = vunpack.c.l.b16 %v869
      %v886 = vunpack.c.l.b16 %v870
      %v887 = vpack.c.b16 %v884, %v883
      %v888 = vpack.c.b16 %v886, %v885
      %891 = vmatprep.subr.bf16.mxu0 0
      %892 = vmatpush1.bf16.msra.mxu0 %v887
      %893 = vmatprep.subr.bf16.mxu0 0
      %894 = vmatpush1.bf16.msra.mxu0 %v888
      %895 = vmatprep.subr.bf16.mxu0 0
      %896 = vmatpush1.bf16.msra.mxu0 0
      %897 = vmatprep.subr.bf16.mxu0 0
      %898 = vmatpush1.bf16.msra.mxu0 0
      %899 = vmatprep.subr.bf16.mxu0 0
      %900 = vmatpush1.bf16.msra.mxu0 0
      %901 = vmatprep.subr.bf16.mxu0 0
      %902 = vmatpush1.bf16.msra.mxu0 0
      %903 = vmatprep.subr.bf16.mxu0 0
      %904 = vmatpush1.bf16.msra.mxu0 0
      %905 = vmatprep.subr.bf16.mxu0 0
      %906 = vmatpush1.bf16.msra.mxu0 0
      %907 = vmatprep.subr.bf16.mxu0 0
      %908 = vmatpush1.bf16.msra.mxu0 0
      %909 = vmatprep.subr.bf16.mxu0 0
      %910 = vmatpush1.bf16.msra.mxu0 0
      %911 = vmatprep.subr.bf16.mxu0 0
      %912 = vmatpush1.bf16.msra.mxu0 0
      %913 = vmatprep.subr.bf16.mxu0 0
      %914 = vmatpush1.bf16.msra.mxu0 0
      %915 = vmatprep.subr.bf16.mxu0 0
      %916 = vmatpush1.bf16.msra.mxu0 0
      %917 = vmatprep.subr.bf16.mxu0 0
      %918 = vmatpush1.bf16.msra.mxu0 0
      %919 = vmatprep.subr.bf16.mxu0 0
      %920 = vmatpush1.bf16.msra.mxu0 0
      %921 = vmatprep.subr.bf16.mxu0 0
      %922 = vmatpush1.bf16.msra.mxu0 0
      %923 = vmatprep.mubr.bf16.mxu0 0
      %924 = vmatmul.mubr.bf16.gmra.mrb[0].mxu0 %v455
      %v925 = vpop.f32.mrb[0].mxu0
      %v926 = vadd.f32 %v877, %v925
      %v927 = vpop.f32.mrb[0].mxu0
      %v928 = vpop.f32.mrb[0].mxu0
      %v929 = vpop.f32.mrb[0].mxu0
      %930 = vdwg.mxu0
      %v931 = vpack.c.bf16 %v800, %v800
      %v932 = vpack.c.bf16 %v861, %v861
      %v934 = vsel %vm626, %v931, 0
      %v937 = vsel %vm626, %v932, 0
      %939 = vmatprep.subr.bf16.mxu0 0
      %940 = vmatpush1.bf16.xpose.msra.mxu0 %v937
      %941 = vmatprep.subr.bf16.mxu0 0
      %942 = vmatpush1.bf16.xpose.msra.mxu0 0
      %943 = vmatprep.subr.bf16.mxu0 0
      %944 = vmatpush1.bf16.xpose.msra.mxu0 0
      %945 = vmatprep.subr.bf16.mxu0 0
      %946 = vmatpush1.bf16.xpose.msra.mxu0 0
      %947 = vmatprep.subr.bf16.mxu0 0
      %948 = vmatpush1.bf16.xpose.msra.mxu0 0
      %949 = vmatprep.subr.bf16.mxu0 0
      %950 = vmatpush1.bf16.xpose.msra.mxu0 0
      %951 = vmatprep.subr.bf16.mxu0 0
      %952 = vmatpush1.bf16.xpose.msra.mxu0 0
      %953 = vmatprep.subr.bf16.mxu0 0
      %954 = vmatpush1.bf16.xpose.msra.mxu0 0
      %955 = vmatprep.subr.bf16.mxu0 0
      %956 = vmatpush1.bf16.xpose.msra.mxu0 0
      %957 = vmatprep.subr.bf16.mxu0 0
      %958 = vmatpush1.bf16.xpose.msra.mxu0 0
      %959 = vmatprep.subr.bf16.mxu0 0
      %960 = vmatpush1.bf16.xpose.msra.mxu0 0
      %961 = vmatprep.subr.bf16.mxu0 0
      %962 = vmatpush1.bf16.xpose.msra.mxu0 0
      %963 = vmatprep.subr.bf16.mxu0 0
      %964 = vmatpush1.bf16.xpose.msra.mxu0 0
      %965 = vmatprep.subr.bf16.mxu0 0
      %966 = vmatpush1.bf16.xpose.msra.mxu0 0
      %967 = vmatprep.subr.bf16.mxu0 0
      %968 = vmatpush1.bf16.xpose.msra.mxu0 0
      %969 = vmatprep.subr.bf16.mxu0 0
      %970 = vmatpush1.bf16.xpose.msra.mxu0 0
      %971 = vmatprep.mubr.bf16.mxu0 0
      %972 = vmatmul.mubr.bf16.gmra.mrb[0].mxu0 %v934
      %v973 = vpop.f32.mrb[0].mxu0
      %v974 = vadd.f32 %v429, %v973
      %v975 = vpop.f32.mrb[0].mxu0
      %v976 = vpop.f32.mrb[0].mxu0
      %v977 = vpop.f32.mrb[0].mxu0
      %978 = vdwg.mxu0
      %v979 = vsel %vm626, %v974, -inf
      %980 = vmax.xlane.f32.xlu0 %v979
      %v981 = vpop.xlane.xlu0 %980
      %v982 = vsub.f32 %v974, %v981
      %v983 = vmul.f32 %v982, 1.442695
      %v984 = vpow.pop %v983
      %v985 = vsel %vm626, %v984, 0.0
      %986 = vadd.xlane.f32.xlu0 %v985
      %v987 = vpop.xlane.xlu0 %986
      %v988 = vrcp.pop %v987
      %v989 = vmul.f32 %v984, %v988
      %v990 = vpack.c.bf16 %v989, %v989
      %v991 = vpack.c.bf16 %v926, %v926
      %v993 = vsel %vm626, %v990, 0
      %v996 = vsel %vm689, %v991, 0
      %998 = vmatprep.subr.bf16.mxu0 0
      %999 = vmatpush1.bf16.msra.mxu0 %v996
      %1000 = vmatprep.subr.bf16.mxu0 0
      %1001 = vmatpush1.bf16.msra.mxu0 0
      %1002 = vmatprep.subr.bf16.mxu0 0
      %1003 = vmatpush1.bf16.msra.mxu0 0
      %1004 = vmatprep.subr.bf16.mxu0 0
      %1005 = vmatpush1.bf16.msra.mxu0 0
      %1006 = vmatprep.subr.bf16.mxu0 0
      %1007 = vmatpush1.bf16.msra.mxu0 0
      %1008 = vmatprep.subr.bf16.mxu0 0
      %1009 = vmatpush1.bf16.msra.mxu0 0
      %1010 = vmatprep.subr.bf16.mxu0 0
      %1011 = vmatpush1.bf16.msra.mxu0 0
      %1012 = vmatprep.subr.bf16.mxu0 0
      %1013 = vmatpush1.bf16.msra.mxu0 0
      %1014 = vmatprep.subr.bf16.mxu0 0
      %1015 = vmatpush1.bf16.msra.mxu0 0
      %1016 = vmatprep.subr.bf16.mxu0 0
      %1017 = vmatpush1.bf16.msra.mxu0 0
      %1018 = vmatprep.subr.bf16.mxu0 0
      %1019 = vmatpush1.bf16.msra.mxu0 0
      %1020 = vmatprep.subr.bf16.mxu0 0
      %1021 = vmatpush1.bf16.msra.mxu0 0
      %1022 = vmatprep.subr.bf16.mxu0 0
      %1023 = vmatpush1.bf16.msra.mxu0 0
      %1024 = vmatprep.subr.bf16.mxu0 0
      %1025 = vmatpush1.bf16.msra.mxu0 0
      %1026 = vmatprep.subr.bf16.mxu0 0
      %1027 = vmatpush1.bf16.msra.mxu0 0
      %1028 = vmatprep.subr.bf16.mxu0 0
      %1029 = vmatpush1.bf16.msra.mxu0 0
      %1030 = vmatprep.mubr.bf16.mxu0 0
      %1031 = vmatmul.mubr.bf16.gmra.mrb[0].mxu0 %v993
      %v1032 = vpop.f32.mrb[0].mxu0
      %v1033 = vadd.f32 0.0, %v1032
      %v1034 = vpop.f32.mrb[0].mxu0
      %v1035 = vpop.f32.mrb[0].mxu0
      %v1036 = vpop.f32.mrb[0].mxu0
      %1037 = vdwg.mxu0
      %v1038 = vpack.c.bf16 %v1033, %v1033
      %s1039 = scalar_lea.vmem %s8, 4
      %v1040 = vld [vmem:[%s1039] sm:$0xf]
      %v1042 = vsel %vm626, %v1038, 0
      %v1045 = vsel %vm689, %v1040, 0
      %1047 = vmatprep.subr.bf16.mxu0 0
      %1048 = vmatpush1.bf16.msra.mxu0 %v1045
      %1049 = vmatprep.subr.bf16.mxu0 0
      %1050 = vmatpush1.bf16.msra.mxu0 0
      %1051 = vmatprep.subr.bf16.mxu0 0
      %1052 = vmatpush1.bf16.msra.mxu0 0
      %1053 = vmatprep.subr.bf16.mxu0 0
      %1054 = vmatpush1.bf16.msra.mxu0 0
      %1055 = vmatprep.subr.bf16.mxu0 0
      %1056 = vmatpush1.bf16.msra.mxu0 0
      %1057 = vmatprep.subr.bf16.mxu0 0
      %1058 = vmatpush1.bf16.msra.mxu0 0
      %1059 = vmatprep.subr.bf16.mxu0 0
      %1060 = vmatpush1.bf16.msra.mxu0 0
      %1061 = vmatprep.subr.bf16.mxu0 0
      %1062 = vmatpush1.bf16.msra.mxu0 0
      %1063 = vmatprep.subr.bf16.mxu0 0
      %1064 = vmatpush1.bf16.msra.mxu0 0
      %1065 = vmatprep.subr.bf16.mxu0 0
      %1066 = vmatpush1.bf16.msra.mxu0 0
      %1067 = vmatprep.subr.bf16.mxu0 0
      %1068 = vmatpush1.bf16.msra.mxu0 0
      %1069 = vmatprep.subr.bf16.mxu0 0
      %1070 = vmatpush1.bf16.msra.mxu0 0
      %1071 = vmatprep.subr.bf16.mxu0 0
      %1072 = vmatpush1.bf16.msra.mxu0 0
      %1073 = vmatprep.subr.bf16.mxu0 0
      %1074 = vmatpush1.bf16.msra.mxu0 0
      %1075 = vmatprep.subr.bf16.mxu0 0
      %1076 = vmatpush1.bf16.msra.mxu0 0
      %1077 = vmatprep.subr.bf16.mxu0 0
      %1078 = vmatpush1.bf16.msra.mxu0 0
      %1079 = vmatprep.mubr.bf16.mxu0 0
      %1080 = vmatmul.mubr.bf16.gmra.mrb[0].mxu0 %v1042
      %v1081 = vpop.f32.mrb[0].mxu0
      %v1082 = vadd.f32 0.0, %v1081
      %v1083 = vpop.f32.mrb[0].mxu0
      %v1084 = vpop.f32.mrb[0].mxu0
      %v1085 = vpop.f32.mrb[0].mxu0
      %1086 = vdwg.mxu0
      %v1088 = vsel %vm626, %v733, 0
      %v1091 = vsel %vm689, %v734, 0
      %1093 = vmatprep.subr.bf16.mxu0 0
      %1094 = vmatpush1.bf16.msra.mxu0 %v1091
      %1095 = vmatprep.subr.bf16.mxu0 0
      %1096 = vmatpush1.bf16.msra.mxu0 0
      %1097 = vmatprep.subr.bf16.mxu0 0
      %1098 = vmatpush1.bf16.msra.mxu0 0
      %1099 = vmatprep.subr.bf16.mxu0 0
      %1100 = vmatpush1.bf16.msra.mxu0 0
      %1101 = vmatprep.subr.bf16.mxu0 0
      %1102 = vmatpush1.bf16.msra.mxu0 0
      %1103 = vmatprep.subr.bf16.mxu0 0
      %1104 = vmatpush1.bf16.msra.mxu0 0
      %1105 = vmatprep.subr.bf16.mxu0 0
      %1106 = vmatpush1.bf16.msra.mxu0 0
      %1107 = vmatprep.subr.bf16.mxu0 0
      %1108 = vmatpush1.bf16.msra.mxu0 0
      %1109 = vmatprep.subr.bf16.mxu0 0
      %1110 = vmatpush1.bf16.msra.mxu0 0
      %1111 = vmatprep.subr.bf16.mxu0 0
      %1112 = vmatpush1.bf16.msra.mxu0 0
      %1113 = vmatprep.subr.bf16.mxu0 0
      %1114 = vmatpush1.bf16.msra.mxu0 0
      %1115 = vmatprep.subr.bf16.mxu0 0
      %1116 = vmatpush1.bf16.msra.mxu0 0
      %1117 = vmatprep.subr.bf16.mxu0 0
      %1118 = vmatpush1.bf16.msra.mxu0 0
      %1119 = vmatprep.subr.bf16.mxu0 0
      %1120 = vmatpush1.bf16.msra.mxu0 0
      %1121 = vmatprep.subr.bf16.mxu0 0
      %1122 = vmatpush1.bf16.msra.mxu0 0
      %1123 = vmatprep.subr.bf16.mxu0 0
      %1124 = vmatpush1.bf16.msra.mxu0 0
      %1125 = vmatprep.mubr.bf16.mxu0 0
      %1126 = vmatmul.mubr.bf16.gmra.mrb[0].mxu0 %v1088
      %v1127 = vpop.f32.mrb[0].mxu0
      %v1128 = vadd.f32 %v1082, %v1127
      %v1129 = vpop.f32.mrb[0].mxu0
      %v1130 = vpop.f32.mrb[0].mxu0
      %v1131 = vpop.f32.mrb[0].mxu0
      %1132 = vdwg.mxu0
      %s1133 = scalar_lea.vmem %s2, 32
      %v1134 = vld [vmem:[%s1133] sm:$0xf]
      %v1135 = vld [vmem:[%s1133 + $0x4] sm:$0xf]
      %v1136 = vld [vmem:[%s1133 + $0x8] sm:$0xf]
      %v1137 = vld [vmem:[%s1133 + $0xc] sm:$0xf]
      %s1138 = scalar_lea.vmem %s3, 2
      %v1139 = vld [vmem:[%s1138] sm:$0x1]
      %v1141 = vlaneseq
      %v1142 = vshrl.u32 %v1141, 7
      %v1143 = vsub.s32 0, %v1142
      %v1144 = vrot.slane %v1139, %v1143
      %v1150 = vunpack.c.l.b16 %v1134
      %v1151 = vunpack.c.l.b16 %v1135
      %v1152 = vunpack.c.l.b16 %v1136
      %v1153 = vunpack.c.l.b16 %v1137
      %v1154 = vpack.c.b16 %v1151, %v1150
      %v1155 = vpack.c.b16 %v1153, %v1152
      %1158 = vmatprep.subr.bf16.mxu0 0
      %1159 = vmatpush1.bf16.msra.mxu0 %v1154
      %1160 = vmatprep.subr.bf16.mxu0 0
      %1161 = vmatpush1.bf16.msra.mxu0 %v1155
      %1162 = vmatprep.subr.bf16.mxu0 0
      %1163 = vmatpush1.bf16.msra.mxu0 0
      %1164 = vmatprep.subr.bf16.mxu0 0
      %1165 = vmatpush1.bf16.msra.mxu0 0
      %1166 = vmatprep.subr.bf16.mxu0 0
      %1167 = vmatpush1.bf16.msra.mxu0 0
      %1168 = vmatprep.subr.bf16.mxu0 0
      %1169 = vmatpush1.bf16.msra.mxu0 0
      %1170 = vmatprep.subr.bf16.mxu0 0
      %1171 = vmatpush1.bf16.msra.mxu0 0
      %1172 = vmatprep.subr.bf16.mxu0 0
      %1173 = vmatpush1.bf16.msra.mxu0 0
      %1174 = vmatprep.subr.bf16.mxu0 0
      %1175 = vmatpush1.bf16.msra.mxu0 0
      %1176 = vmatprep.subr.bf16.mxu0 0
      %1177 = vmatpush1.bf16.msra.mxu0 0
      %1178 = vmatprep.subr.bf16.mxu0 0
      %1179 = vmatpush1.bf16.msra.mxu0 0
      %1180 = vmatprep.subr.bf16.mxu0 0
      %1181 = vmatpush1.bf16.msra.mxu0 0
      %1182 = vmatprep.subr.bf16.mxu0 0
      %1183 = vmatpush1.bf16.msra.mxu0 0
      %1184 = vmatprep.subr.bf16.mxu0 0
      %1185 = vmatpush1.bf16.msra.mxu0 0
      %1186 = vmatprep.subr.bf16.mxu0 0
      %1187 = vmatpush1.bf16.msra.mxu0 0
      %1188 = vmatprep.subr.bf16.mxu0 0
      %1189 = vmatpush1.bf16.msra.mxu0 0
      %1190 = vmatprep.mubr.bf16.mxu0 0
      %1191 = vmatmul.mubr.bf16.gmra.mrb[0].mxu0 %v455
      %v1192 = vpop.f32.mrb[0].mxu0
      %v1193 = vadd.f32 %v1144, %v1192
      %v1194 = vpop.f32.mrb[0].mxu0
      %v1195 = vpop.f32.mrb[0].mxu0
      %v1196 = vpop.f32.mrb[0].mxu0
      %1197 = vdwg.mxu0
      %v1198 = vmul.f32 %v1193, 0.35355338
      %s1199 = scalar_lea.vmem %s4, 32
      %v1200 = vld [vmem:[%s1199] sm:$0xf]
      %v1201 = vld [vmem:[%s1199 + $0x4] sm:$0xf]
      %v1202 = vld [vmem:[%s1199 + $0x8] sm:$0xf]
      %v1203 = vld [vmem:[%s1199 + $0xc] sm:$0xf]
      %s1204 = scalar_lea.vmem %s5, 2
      %v1205 = vld [vmem:[%s1204] sm:$0x1]
      %v1207 = vlaneseq
      %v1208 = vshrl.u32 %v1207, 7
      %v1209 = vsub.s32 0, %v1208
      %v1210 = vrot.slane %v1205, %v1209
      %v1216 = vunpack.c.l.b16 %v1200
      %v1217 = vunpack.c.l.b16 %v1201
      %v1218 = vunpack.c.l.b16 %v1202
      %v1219 = vunpack.c.l.b16 %v1203
      %v1220 = vpack.c.b16 %v1217, %v1216
      %v1221 = vpack.c.b16 %v1219, %v1218
      %1224 = vmatprep.subr.bf16.mxu0 0
      %1225 = vmatpush1.bf16.msra.mxu0 %v1220
      %1226 = vmatprep.subr.bf16.mxu0 0
      %1227 = vmatpush1.bf16.msra.mxu0 %v1221
      %1228 = vmatprep.subr.bf16.mxu0 0
      %1229 = vmatpush1.bf16.msra.mxu0 0
      %1230 = vmatprep.subr.bf16.mxu0 0
      %1231 = vmatpush1.bf16.msra.mxu0 0
      %1232 = vmatprep.subr.bf16.mxu0 0
      %1233 = vmatpush1.bf16.msra.mxu0 0
      %1234 = vmatprep.subr.bf16.mxu0 0
      %1235 = vmatpush1.bf16.msra.mxu0 0
      %1236 = vmatprep.subr.bf16.mxu0 0
      %1237 = vmatpush1.bf16.msra.mxu0 0
      %1238 = vmatprep.subr.bf16.mxu0 0
      %1239 = vmatpush1.bf16.msra.mxu0 0
      %1240 = vmatprep.subr.bf16.mxu0 0
      %1241 = vmatpush1.bf16.msra.mxu0 0
      %1242 = vmatprep.subr.bf16.mxu0 0
      %1243 = vmatpush1.bf16.msra.mxu0 0
      %1244 = vmatprep.subr.bf16.mxu0 0
      %1245 = vmatpush1.bf16.msra.mxu0 0
      %1246 = vmatprep.subr.bf16.mxu0 0
      %1247 = vmatpush1.bf16.msra.mxu0 0
      %1248 = vmatprep.subr.bf16.mxu0 0
      %1249 = vmatpush1.bf16.msra.mxu0 0
      %1250 = vmatprep.subr.bf16.mxu0 0
      %1251 = vmatpush1.bf16.msra.mxu0 0
      %1252 = vmatprep.subr.bf16.mxu0 0
      %1253 = vmatpush1.bf16.msra.mxu0 0
      %1254 = vmatprep.subr.bf16.mxu0 0
      %1255 = vmatpush1.bf16.msra.mxu0 0
      %1256 = vmatprep.mubr.bf16.mxu0 0
      %1257 = vmatmul.mubr.bf16.gmra.mrb[0].mxu0 %v455
      %v1258 = vpop.f32.mrb[0].mxu0
      %v1259 = vadd.f32 %v1210, %v1258
      %v1260 = vpop.f32.mrb[0].mxu0
      %v1261 = vpop.f32.mrb[0].mxu0
      %v1262 = vpop.f32.mrb[0].mxu0
      %1263 = vdwg.mxu0
      %s1264 = scalar_lea.vmem %s6, 32
      %v1265 = vld [vmem:[%s1264] sm:$0xf]
      %v1266 = vld [vmem:[%s1264 + $0x4] sm:$0xf]
      %v1267 = vld [vmem:[%s1264 + $0x8] sm:$0xf]
      %v1268 = vld [vmem:[%s1264 + $0xc] sm:$0xf]
      %s1269 = scalar_lea.vmem %s7, 2
      %v1270 = vld [vmem:[%s1269] sm:$0x1]
      %v1272 = vlaneseq
      %v1273 = vshrl.u32 %v1272, 7
      %v1274 = vsub.s32 0, %v1273
      %v1275 = vrot.slane %v1270, %v1274
      %v1281 = vunpack.c.l.b16 %v1265
      %v1282 = vunpack.c.l.b16 %v1266
      %v1283 = vunpack.c.l.b16 %v1267
      %v1284 = vunpack.c.l.b16 %v1268
      %v1285 = vpack.c.b16 %v1282, %v1281
      %v1286 = vpack.c.b16 %v1284, %v1283
      %1289 = vmatprep.subr.bf16.mxu0 0
      %1290 = vmatpush1.bf16.msra.mxu0 %v1285
      %1291 = vmatprep.subr.bf16.mxu0 0
      %1292 = vmatpush1.bf16.msra.mxu0 %v1286
      %1293 = vmatprep.subr.bf16.mxu0 0
      %1294 = vmatpush1.bf16.msra.mxu0 0
      %1295 = vmatprep.subr.bf16.mxu0 0
      %1296 = vmatpush1.bf16.msra.mxu0 0
      %1297 = vmatprep.subr.bf16.mxu0 0
      %1298 = vmatpush1.bf16.msra.mxu0 0
      %1299 = vmatprep.subr.bf16.mxu0 0
      %1300 = vmatpush1.bf16.msra.mxu0 0
      %1301 = vmatprep.subr.bf16.mxu0 0
      %1302 = vmatpush1.bf16.msra.mxu0 0
      %1303 = vmatprep.subr.bf16.mxu0 0
      %1304 = vmatpush1.bf16.msra.mxu0 0
      %1305 = vmatprep.subr.bf16.mxu0 0
      %1306 = vmatpush1.bf16.msra.mxu0 0
      %1307 = vmatprep.subr.bf16.mxu0 0
      %1308 = vmatpush1.bf16.msra.mxu0 0
      %1309 = vmatprep.subr.bf16.mxu0 0
      %1310 = vmatpush1.bf16.msra.mxu0 0
      %1311 = vmatprep.subr.bf16.mxu0 0
      %1312 = vmatpush1.bf16.msra.mxu0 0
      %1313 = vmatprep.subr.bf16.mxu0 0
      %1314 = vmatpush1.bf16.msra.mxu0 0
      %1315 = vmatprep.subr.bf16.mxu0 0
      %1316 = vmatpush1.bf16.msra.mxu0 0
      %1317 = vmatprep.subr.bf16.mxu0 0
      %1318 = vmatpush1.bf16.msra.mxu0 0
      %1319 = vmatprep.subr.bf16.mxu0 0
      %1320 = vmatpush1.bf16.msra.mxu0 0
      %1321 = vmatprep.mubr.bf16.mxu0 0
      %1322 = vmatmul.mubr.bf16.gmra.mrb[0].mxu0 %v455
      %v1323 = vpop.f32.mrb[0].mxu0
      %v1324 = vadd.f32 %v1275, %v1323
      %v1325 = vpop.f32.mrb[0].mxu0
      %v1326 = vpop.f32.mrb[0].mxu0
      %v1327 = vpop.f32.mrb[0].mxu0
      %1328 = vdwg.mxu0
      %v1329 = vpack.c.bf16 %v1198, %v1198
      %v1330 = vpack.c.bf16 %v1259, %v1259
      %v1332 = vsel %vm626, %v1329, 0
      %v1335 = vsel %vm626, %v1330, 0
      %1337 = vmatprep.subr.bf16.mxu0 0
      %1338 = vmatpush1.bf16.xpose.msra.mxu0 %v1335
      %1339 = vmatprep.subr.bf16.mxu0 0
      %1340 = vmatpush1.bf16.xpose.msra.mxu0 0
      %1341 = vmatprep.subr.bf16.mxu0 0
      %1342 = vmatpush1.bf16.xpose.msra.mxu0 0
      %1343 = vmatprep.subr.bf16.mxu0 0
      %1344 = vmatpush1.bf16.xpose.msra.mxu0 0
      %1345 = vmatprep.subr.bf16.mxu0 0
      %1346 = vmatpush1.bf16.xpose.msra.mxu0 0
      %1347 = vmatprep.subr.bf16.mxu0 0
      %1348 = vmatpush1.bf16.xpose.msra.mxu0 0
      %1349 = vmatprep.subr.bf16.mxu0 0
      %1350 = vmatpush1.bf16.xpose.msra.mxu0 0
      %1351 = vmatprep.subr.bf16.mxu0 0
      %1352 = vmatpush1.bf16.xpose.msra.mxu0 0
      %1353 = vmatprep.subr.bf16.mxu0 0
      %1354 = vmatpush1.bf16.xpose.msra.mxu0 0
      %1355 = vmatprep.subr.bf16.mxu0 0
      %1356 = vmatpush1.bf16.xpose.msra.mxu0 0
      %1357 = vmatprep.subr.bf16.mxu0 0
      %1358 = vmatpush1.bf16.xpose.msra.mxu0 0
      %1359 = vmatprep.subr.bf16.mxu0 0
      %1360 = vmatpush1.bf16.xpose.msra.mxu0 0
      %1361 = vmatprep.subr.bf16.mxu0 0
      %1362 = vmatpush1.bf16.xpose.msra.mxu0 0
      %1363 = vmatprep.subr.bf16.mxu0 0
      %1364 = vmatpush1.bf16.xpose.msra.mxu0 0
      %1365 = vmatprep.subr.bf16.mxu0 0
      %1366 = vmatpush1.bf16.xpose.msra.mxu0 0
      %1367 = vmatprep.subr.bf16.mxu0 0
      %1368 = vmatpush1.bf16.xpose.msra.mxu0 0
      %1369 = vmatprep.mubr.bf16.mxu0 0
      %1370 = vmatmul.mubr.bf16.gmra.mrb[0].mxu0 %v1332
      %v1371 = vpop.f32.mrb[0].mxu0
      %v1372 = vadd.f32 %v429, %v1371
      %v1373 = vpop.f32.mrb[0].mxu0
      %v1374 = vpop.f32.mrb[0].mxu0
      %v1375 = vpop.f32.mrb[0].mxu0
      %1376 = vdwg.mxu0
      %v1377 = vsel %vm626, %v1372, -inf
      %1378 = vmax.xlane.f32.xlu0 %v1377
      %v1379 = vpop.xlane.xlu0 %1378
      %v1380 = vsub.f32 %v1372, %v1379
      %v1381 = vmul.f32 %v1380, 1.442695
      %v1382 = vpow.pop %v1381
      %v1383 = vsel %vm626, %v1382, 0.0
      %1384 = vadd.xlane.f32.xlu0 %v1383
      %v1385 = vpop.xlane.xlu0 %1384
      %v1386 = vrcp.pop %v1385
      %v1387 = vmul.f32 %v1382, %v1386
      %v1388 = vpack.c.bf16 %v1387, %v1387
      %v1389 = vpack.c.bf16 %v1324, %v1324
      %v1391 = vsel %vm626, %v1388, 0
      %v1394 = vsel %vm689, %v1389, 0
      %1396 = vmatprep.subr.bf16.mxu0 0
      %1397 = vmatpush1.bf16.msra.mxu0 %v1394
      %1398 = vmatprep.subr.bf16.mxu0 0
      %1399 = vmatpush1.bf16.msra.mxu0 0
      %1400 = vmatprep.subr.bf16.mxu0 0
      %1401 = vmatpush1.bf16.msra.mxu0 0
      %1402 = vmatprep.subr.bf16.mxu0 0
      %1403 = vmatpush1.bf16.msra.mxu0 0
      %1404 = vmatprep.subr.bf16.mxu0 0
      %1405 = vmatpush1.bf16.msra.mxu0 0
      %1406 = vmatprep.subr.bf16.mxu0 0
      %1407 = vmatpush1.bf16.msra.mxu0 0
      %1408 = vmatprep.subr.bf16.mxu0 0
      %1409 = vmatpush1.bf16.msra.mxu0 0
      %1410 = vmatprep.subr.bf16.mxu0 0
      %1411 = vmatpush1.bf16.msra.mxu0 0
      %1412 = vmatprep.subr.bf16.mxu0 0
      %1413 = vmatpush1.bf16.msra.mxu0 0
      %1414 = vmatprep.subr.bf16.mxu0 0
      %1415 = vmatpush1.bf16.msra.mxu0 0
      %1416 = vmatprep.subr.bf16.mxu0 0
      %1417 = vmatpush1.bf16.msra.mxu0 0
      %1418 = vmatprep.subr.bf16.mxu0 0
      %1419 = vmatpush1.bf16.msra.mxu0 0
      %1420 = vmatprep.subr.bf16.mxu0 0
      %1421 = vmatpush1.bf16.msra.mxu0 0
      %1422 = vmatprep.subr.bf16.mxu0 0
      %1423 = vmatpush1.bf16.msra.mxu0 0
      %1424 = vmatprep.subr.bf16.mxu0 0
      %1425 = vmatpush1.bf16.msra.mxu0 0
      %1426 = vmatprep.subr.bf16.mxu0 0
      %1427 = vmatpush1.bf16.msra.mxu0 0
      %1428 = vmatprep.mubr.bf16.mxu0 0
      %1429 = vmatmul.mubr.bf16.gmra.mrb[0].mxu0 %v1391
      %v1430 = vpop.f32.mrb[0].mxu0
      %v1431 = vadd.f32 0.0, %v1430
      %v1432 = vpop.f32.mrb[0].mxu0
      %v1433 = vpop.f32.mrb[0].mxu0
      %v1434 = vpop.f32.mrb[0].mxu0
      %1435 = vdwg.mxu0
      %v1436 = vpack.c.bf16 %v1431, %v1431
      %s1437 = scalar_lea.vmem %s8, 8
      %v1438 = vld [vmem:[%s1437] sm:$0xf]
      %v1440 = vsel %vm626, %v1436, 0
      %v1443 = vsel %vm689, %v1438, 0
      %1445 = vmatprep.subr.bf16.mxu0 0
      %1446 = vmatpush1.bf16.msra.mxu0 %v1443
      %1447 = vmatprep.subr.bf16.mxu0 0
      %1448 = vmatpush1.bf16.msra.mxu0 0
      %1449 = vmatprep.subr.bf16.mxu0 0
      %1450 = vmatpush1.bf16.msra.mxu0 0
      %1451 = vmatprep.subr.bf16.mxu0 0
      %1452 = vmatpush1.bf16.msra.mxu0 0
      %1453 = vmatprep.subr.bf16.mxu0 0
      %1454 = vmatpush1.bf16.msra.mxu0 0
      %1455 = vmatprep.subr.bf16.mxu0 0
      %1456 = vmatpush1.bf16.msra.mxu0 0
      %1457 = vmatprep.subr.bf16.mxu0 0
      %1458 = vmatpush1.bf16.msra.mxu0 0
      %1459 = vmatprep.subr.bf16.mxu0 0
      %1460 = vmatpush1.bf16.msra.mxu0 0
      %1461 = vmatprep.subr.bf16.mxu0 0
      %1462 = vmatpush1.bf16.msra.mxu0 0
      %1463 = vmatprep.subr.bf16.mxu0 0
      %1464 = vmatpush1.bf16.msra.mxu0 0
      %1465 = vmatprep.subr.bf16.mxu0 0
      %1466 = vmatpush1.bf16.msra.mxu0 0
      %1467 = vmatprep.subr.bf16.mxu0 0
      %1468 = vmatpush1.bf16.msra.mxu0 0
      %1469 = vmatprep.subr.bf16.mxu0 0
      %1470 = vmatpush1.bf16.msra.mxu0 0
      %1471 = vmatprep.subr.bf16.mxu0 0
      %1472 = vmatpush1.bf16.msra.mxu0 0
      %1473 = vmatprep.subr.bf16.mxu0 0
      %1474 = vmatpush1.bf16.msra.mxu0 0
      %1475 = vmatprep.subr.bf16.mxu0 0
      %1476 = vmatpush1.bf16.msra.mxu0 0
      %1477 = vmatprep.mubr.bf16.mxu0 0
      %1478 = vmatmul.mubr.bf16.gmra.mrb[0].mxu0 %v1440
      %v1479 = vpop.f32.mrb[0].mxu0
      %v1480 = vadd.f32 0.0, %v1479
      %v1481 = vpop.f32.mrb[0].mxu0
      %v1482 = vpop.f32.mrb[0].mxu0
      %v1483 = vpop.f32.mrb[0].mxu0
      %1484 = vdwg.mxu0
      %v1485 = vadd.f32 %v1128, %v1480
      %s1486 = scalar_lea.vmem %s2, 48
      %v1487 = vld [vmem:[%s1486] sm:$0xf]
      %v1488 = vld [vmem:[%s1486 + $0x4] sm:$0xf]
      %v1489 = vld [vmem:[%s1486 + $0x8] sm:$0xf]
      %v1490 = vld [vmem:[%s1486 + $0xc] sm:$0xf]
      %s1491 = scalar_lea.vmem %s3, 3
      %v1492 = vld [vmem:[%s1491] sm:$0x1]
      %v1494 = vlaneseq
      %v1495 = vshrl.u32 %v1494, 7
      %v1496 = vsub.s32 0, %v1495
      %v1497 = vrot.slane %v1492, %v1496
      %v1503 = vunpack.c.l.b16 %v1487
      %v1504 = vunpack.c.l.b16 %v1488
      %v1505 = vunpack.c.l.b16 %v1489
      %v1506 = vunpack.c.l.b16 %v1490
      %v1507 = vpack.c.b16 %v1504, %v1503
      %v1508 = vpack.c.b16 %v1506, %v1505
      %1511 = vmatprep.subr.bf16.mxu0 0
      %1512 = vmatpush1.bf16.msra.mxu0 %v1507
      %1513 = vmatprep.subr.bf16.mxu0 0
      %1514 = vmatpush1.bf16.msra.mxu0 %v1508
      %1515 = vmatprep.subr.bf16.mxu0 0
      %1516 = vmatpush1.bf16.msra.mxu0 0
      %1517 = vmatprep.subr.bf16.mxu0 0
      %1518 = vmatpush1.bf16.msra.mxu0 0
      %1519 = vmatprep.subr.bf16.mxu0 0
      %1520 = vmatpush1.bf16.msra.mxu0 0
      %1521 = vmatprep.subr.bf16.mxu0 0
      %1522 = vmatpush1.bf16.msra.mxu0 0
      %1523 = vmatprep.subr.bf16.mxu0 0
      %1524 = vmatpush1.bf16.msra.mxu0 0
      %1525 = vmatprep.subr.bf16.mxu0 0
      %1526 = vmatpush1.bf16.msra.mxu0 0
      %1527 = vmatprep.subr.bf16.mxu0 0
      %1528 = vmatpush1.bf16.msra.mxu0 0
      %1529 = vmatprep.subr.bf16.mxu0 0
      %1530 = vmatpush1.bf16.msra.mxu0 0
      %1531 = vmatprep.subr.bf16.mxu0 0
      %1532 = vmatpush1.bf16.msra.mxu0 0
      %1533 = vmatprep.subr.bf16.mxu0 0
      %1534 = vmatpush1.bf16.msra.mxu0 0
      %1535 = vmatprep.subr.bf16.mxu0 0
      %1536 = vmatpush1.bf16.msra.mxu0 0
      %1537 = vmatprep.subr.bf16.mxu0 0
      %1538 = vmatpush1.bf16.msra.mxu0 0
      %1539 = vmatprep.subr.bf16.mxu0 0
      %1540 = vmatpush1.bf16.msra.mxu0 0
      %1541 = vmatprep.subr.bf16.mxu0 0
      %1542 = vmatpush1.bf16.msra.mxu0 0
      %1543 = vmatprep.mubr.bf16.mxu0 0
      %1544 = vmatmul.mubr.bf16.gmra.mrb[0].mxu0 %v455
      %v1545 = vpop.f32.mrb[0].mxu0
      %v1546 = vadd.f32 %v1497, %v1545
      %v1547 = vpop.f32.mrb[0].mxu0
      %v1548 = vpop.f32.mrb[0].mxu0
      %v1549 = vpop.f32.mrb[0].mxu0
      %1550 = vdwg.mxu0
      %v1551 = vmul.f32 %v1546, 0.35355338
      %s1552 = scalar_lea.vmem %s4, 48
      %v1553 = vld [vmem:[%s1552] sm:$0xf]
      %v1554 = vld [vmem:[%s1552 + $0x4] sm:$0xf]
      %v1555 = vld [vmem:[%s1552 + $0x8] sm:$0xf]
      %v1556 = vld [vmem:[%s1552 + $0xc] sm:$0xf]
      %s1557 = scalar_lea.vmem %s5, 3
      %v1558 = vld [vmem:[%s1557] sm:$0x1]
      %v1560 = vlaneseq
      %v1561 = vshrl.u32 %v1560, 7
      %v1562 = vsub.s32 0, %v1561
      %v1563 = vrot.slane %v1558, %v1562
      %v1569 = vunpack.c.l.b16 %v1553
      %v1570 = vunpack.c.l.b16 %v1554
      %v1571 = vunpack.c.l.b16 %v1555
      %v1572 = vunpack.c.l.b16 %v1556
      %v1573 = vpack.c.b16 %v1570, %v1569
      %v1574 = vpack.c.b16 %v1572, %v1571
      %1577 = vmatprep.subr.bf16.mxu0 0
      %1578 = vmatpush1.bf16.msra.mxu0 %v1573
      %1579 = vmatprep.subr.bf16.mxu0 0
      %1580 = vmatpush1.bf16.msra.mxu0 %v1574
      %1581 = vmatprep.subr.bf16.mxu0 0
      %1582 = vmatpush1.bf16.msra.mxu0 0
      %1583 = vmatprep.subr.bf16.mxu0 0
      %1584 = vmatpush1.bf16.msra.mxu0 0
      %1585 = vmatprep.subr.bf16.mxu0 0
      %1586 = vmatpush1.bf16.msra.mxu0 0
      %1587 = vmatprep.subr.bf16.mxu0 0
      %1588 = vmatpush1.bf16.msra.mxu0 0
      %1589 = vmatprep.subr.bf16.mxu0 0
      %1590 = vmatpush1.bf16.msra.mxu0 0
      %1591 = vmatprep.subr.bf16.mxu0 0
      %1592 = vmatpush1.bf16.msra.mxu0 0
      %1593 = vmatprep.subr.bf16.mxu0 0
      %1594 = vmatpush1.bf16.msra.mxu0 0
      %1595 = vmatprep.subr.bf16.mxu0 0
      %1596 = vmatpush1.bf16.msra.mxu0 0
      %1597 = vmatprep.subr.bf16.mxu0 0
      %1598 = vmatpush1.bf16.msra.mxu0 0
      %1599 = vmatprep.subr.bf16.mxu0 0
      %1600 = vmatpush1.bf16.msra.mxu0 0
      %1601 = vmatprep.subr.bf16.mxu0 0
      %1602 = vmatpush1.bf16.msra.mxu0 0
      %1603 = vmatprep.subr.bf16.mxu0 0
      %1604 = vmatpush1.bf16.msra.mxu0 0
      %1605 = vmatprep.subr.bf16.mxu0 0
      %1606 = vmatpush1.bf16.msra.mxu0 0
      %1607 = vmatprep.subr.bf16.mxu0 0
      %1608 = vmatpush1.bf16.msra.mxu0 0
      %1609 = vmatprep.mubr.bf16.mxu0 0
      %1610 = vmatmul.mubr.bf16.gmra.mrb[0].mxu0 %v455
      %v1611 = vpop.f32.mrb[0].mxu0
      %v1612 = vadd.f32 %v1563, %v1611
      %v1613 = vpop.f32.mrb[0].mxu0
      %v1614 = vpop.f32.mrb[0].mxu0
      %v1615 = vpop.f32.mrb[0].mxu0
      %1616 = vdwg.mxu0
      %s1617 = scalar_lea.vmem %s6, 48
      %v1618 = vld [vmem:[%s1617] sm:$0xf]
      %v1619 = vld [vmem:[%s1617 + $0x4] sm:$0xf]
      %v1620 = vld [vmem:[%s1617 + $0x8] sm:$0xf]
      %v1621 = vld [vmem:[%s1617 + $0xc] sm:$0xf]
      %s1622 = scalar_lea.vmem %s7, 3
      %v1623 = vld [vmem:[%s1622] sm:$0x1]
      %v1625 = vlaneseq
      %v1626 = vshrl.u32 %v1625, 7
      %v1627 = vsub.s32 0, %v1626
      %v1628 = vrot.slane %v1623, %v1627
      %v1634 = vunpack.c.l.b16 %v1618
      %v1635 = vunpack.c.l.b16 %v1619
      %v1636 = vunpack.c.l.b16 %v1620
      %v1637 = vunpack.c.l.b16 %v1621
      %v1638 = vpack.c.b16 %v1635, %v1634
      %v1639 = vpack.c.b16 %v1637, %v1636
      %1642 = vmatprep.subr.bf16.mxu0 0
      %1643 = vmatpush1.bf16.msra.mxu0 %v1638
      %1644 = vmatprep.subr.bf16.mxu0 0
      %1645 = vmatpush1.bf16.msra.mxu0 %v1639
      %1646 = vmatprep.subr.bf16.mxu0 0
      %1647 = vmatpush1.bf16.msra.mxu0 0
      %1648 = vmatprep.subr.bf16.mxu0 0
      %1649 = vmatpush1.bf16.msra.mxu0 0
      %1650 = vmatprep.subr.bf16.mxu0 0
      %1651 = vmatpush1.bf16.msra.mxu0 0
      %1652 = vmatprep.subr.bf16.mxu0 0
      %1653 = vmatpush1.bf16.msra.mxu0 0
      %1654 = vmatprep.subr.bf16.mxu0 0
      %1655 = vmatpush1.bf16.msra.mxu0 0
      %1656 = vmatprep.subr.bf16.mxu0 0
      %1657 = vmatpush1.bf16.msra.mxu0 0
      %1658 = vmatprep.subr.bf16.mxu0 0
      %1659 = vmatpush1.bf16.msra.mxu0 0
      %1660 = vmatprep.subr.bf16.mxu0 0
      %1661 = vmatpush1.bf16.msra.mxu0 0
      %1662 = vmatprep.subr.bf16.mxu0 0
      %1663 = vmatpush1.bf16.msra.mxu0 0
      %1664 = vmatprep.subr.bf16.mxu0 0
      %1665 = vmatpush1.bf16.msra.mxu0 0
      %1666 = vmatprep.subr.bf16.mxu0 0
      %1667 = vmatpush1.bf16.msra.mxu0 0
      %1668 = vmatprep.subr.bf16.mxu0 0
      %1669 = vmatpush1.bf16.msra.mxu0 0
      %1670 = vmatprep.subr.bf16.mxu0 0
      %1671 = vmatpush1.bf16.msra.mxu0 0
      %1672 = vmatprep.subr.bf16.mxu0 0
      %1673 = vmatpush1.bf16.msra.mxu0 0
      %1674 = vmatprep.mubr.bf16.mxu0 0
      %1675 = vmatmul.mubr.bf16.gmra.mrb[0].mxu0 %v455
      %v1676 = vpop.f32.mrb[0].mxu0
      %v1677 = vadd.f32 %v1628, %v1676
      %v1678 = vpop.f32.mrb[0].mxu0
      %v1679 = vpop.f32.mrb[0].mxu0
      %v1680 = vpop.f32.mrb[0].mxu0
      %1681 = vdwg.mxu0
      %v1682 = vpack.c.bf16 %v1551, %v1551
      %v1683 = vpack.c.bf16 %v1612, %v1612
      %v1685 = vsel %vm626, %v1682, 0
      %v1688 = vsel %vm626, %v1683, 0
      %1690 = vmatprep.subr.bf16.mxu0 0
      %1691 = vmatpush1.bf16.xpose.msra.mxu0 %v1688
      %1692 = vmatprep.subr.bf16.mxu0 0
      %1693 = vmatpush1.bf16.xpose.msra.mxu0 0
      %1694 = vmatprep.subr.bf16.mxu0 0
      %1695 = vmatpush1.bf16.xpose.msra.mxu0 0
      %1696 = vmatprep.subr.bf16.mxu0 0
      %1697 = vmatpush1.bf16.xpose.msra.mxu0 0
      %1698 = vmatprep.subr.bf16.mxu0 0
      %1699 = vmatpush1.bf16.xpose.msra.mxu0 0
      %1700 = vmatprep.subr.bf16.mxu0 0
      %1701 = vmatpush1.bf16.xpose.msra.mxu0 0
      %1702 = vmatprep.subr.bf16.mxu0 0
      %1703 = vmatpush1.bf16.xpose.msra.mxu0 0
      %1704 = vmatprep.subr.bf16.mxu0 0
      %1705 = vmatpush1.bf16.xpose.msra.mxu0 0
      %1706 = vmatprep.subr.bf16.mxu0 0
      %1707 = vmatpush1.bf16.xpose.msra.mxu0 0
      %1708 = vmatprep.subr.bf16.mxu0 0
      %1709 = vmatpush1.bf16.xpose.msra.mxu0 0
      %1710 = vmatprep.subr.bf16.mxu0 0
      %1711 = vmatpush1.bf16.xpose.msra.mxu0 0
      %1712 = vmatprep.subr.bf16.mxu0 0
      %1713 = vmatpush1.bf16.xpose.msra.mxu0 0
      %1714 = vmatprep.subr.bf16.mxu0 0
      %1715 = vmatpush1.bf16.xpose.msra.mxu0 0
      %1716 = vmatprep.subr.bf16.mxu0 0
      %1717 = vmatpush1.bf16.xpose.msra.mxu0 0
      %1718 = vmatprep.subr.bf16.mxu0 0
      %1719 = vmatpush1.bf16.xpose.msra.mxu0 0
      %1720 = vmatprep.subr.bf16.mxu0 0
      %1721 = vmatpush1.bf16.xpose.msra.mxu0 0
      %1722 = vmatprep.mubr.bf16.mxu0 0
      %1723 = vmatmul.mubr.bf16.gmra.mrb[0].mxu0 %v1685
      %v1724 = vpop.f32.mrb[0].mxu0
      %v1725 = vadd.f32 %v429, %v1724
      %v1726 = vpop.f32.mrb[0].mxu0
      %v1727 = vpop.f32.mrb[0].mxu0
      %v1728 = vpop.f32.mrb[0].mxu0
      %1729 = vdwg.mxu0
      %v1730 = vsel %vm626, %v1725, -inf
      %1731 = vmax.xlane.f32.xlu0 %v1730
      %v1732 = vpop.xlane.xlu0 %1731
      %v1733 = vsub.f32 %v1725, %v1732
      %v1734 = vmul.f32 %v1733, 1.442695
      %v1735 = vpow.pop %v1734
      %v1736 = vsel %vm626, %v1735, 0.0
      %1737 = vadd.xlane.f32.xlu0 %v1736
      %v1738 = vpop.xlane.xlu0 %1737
      %v1739 = vrcp.pop %v1738
      %v1740 = vmul.f32 %v1735, %v1739
      %v1741 = vpack.c.bf16 %v1740, %v1740
      %v1742 = vpack.c.bf16 %v1677, %v1677
      %v1744 = vsel %vm626, %v1741, 0
      %v1747 = vsel %vm689, %v1742, 0
      %1749 = vmatprep.subr.bf16.mxu0 0
      %1750 = vmatpush1.bf16.msra.mxu0 %v1747
      %1751 = vmatprep.subr.bf16.mxu0 0
      %1752 = vmatpush1.bf16.msra.mxu0 0
      %1753 = vmatprep.subr.bf16.mxu0 0
      %1754 = vmatpush1.bf16.msra.mxu0 0
      %1755 = vmatprep.subr.bf16.mxu0 0
      %1756 = vmatpush1.bf16.msra.mxu0 0
      %1757 = vmatprep.subr.bf16.mxu0 0
      %1758 = vmatpush1.bf16.msra.mxu0 0
      %1759 = vmatprep.subr.bf16.mxu0 0
      %1760 = vmatpush1.bf16.msra.mxu0 0
      %1761 = vmatprep.subr.bf16.mxu0 0
      %1762 = vmatpush1.bf16.msra.mxu0 0
      %1763 = vmatprep.subr.bf16.mxu0 0
      %1764 = vmatpush1.bf16.msra.mxu0 0
      %1765 = vmatprep.subr.bf16.mxu0 0
      %1766 = vmatpush1.bf16.msra.mxu0 0
      %1767 = vmatprep.subr.bf16.mxu0 0
      %1768 = vmatpush1.bf16.msra.mxu0 0
      %1769 = vmatprep.subr.bf16.mxu0 0
      %1770 = vmatpush1.bf16.msra.mxu0 0
      %1771 = vmatprep.subr.bf16.mxu0 0
      %1772 = vmatpush1.bf16.msra.mxu0 0
      %1773 = vmatprep.subr.bf16.mxu0 0
      %1774 = vmatpush1.bf16.msra.mxu0 0
      %1775 = vmatprep.subr.bf16.mxu0 0
      %1776 = vmatpush1.bf16.msra.mxu0 0
      %1777 = vmatprep.subr.bf16.mxu0 0
      %1778 = vmatpush1.bf16.msra.mxu0 0
      %1779 = vmatprep.subr.bf16.mxu0 0
      %1780 = vmatpush1.bf16.msra.mxu0 0
      %1781 = vmatprep.mubr.bf16.mxu0 0
      %1782 = vmatmul.mubr.bf16.gmra.mrb[0].mxu0 %v1744
      %v1783 = vpop.f32.mrb[0].mxu0
      %v1784 = vadd.f32 0.0, %v1783
      %v1785 = vpop.f32.mrb[0].mxu0
      %v1786 = vpop.f32.mrb[0].mxu0
      %v1787 = vpop.f32.mrb[0].mxu0
      %1788 = vdwg.mxu0
      %v1789 = vpack.c.bf16 %v1784, %v1784
      %s1790 = scalar_lea.vmem %s8, 12
      %v1791 = vld [vmem:[%s1790] sm:$0xf]
      %v1793 = vsel %vm626, %v1789, 0
      %v1796 = vsel %vm689, %v1791, 0
      %1798 = vmatprep.subr.bf16.mxu0 0
      %1799 = vmatpush1.bf16.msra.mxu0 %v1796
      %1800 = vmatprep.subr.bf16.mxu0 0
      %1801 = vmatpush1.bf16.msra.mxu0 0
      %1802 = vmatprep.subr.bf16.mxu0 0
      %1803 = vmatpush1.bf16.msra.mxu0 0
      %1804 = vmatprep.subr.bf16.mxu0 0
      %1805 = vmatpush1.bf16.msra.mxu0 0
      %1806 = vmatprep.subr.bf16.mxu0 0
      %1807 = vmatpush1.bf16.msra.mxu0 0
      %1808 = vmatprep.subr.bf16.mxu0 0
      %1809 = vmatpush1.bf16.msra.mxu0 0
      %1810 = vmatprep.subr.bf16.mxu0 0
      %1811 = vmatpush1.bf16.msra.mxu0 0
      %1812 = vmatprep.subr.bf16.mxu0 0
      %1813 = vmatpush1.bf16.msra.mxu0 0
      %1814 = vmatprep.subr.bf16.mxu0 0
      %1815 = vmatpush1.bf16.msra.mxu0 0
      %1816 = vmatprep.subr.bf16.mxu0 0
      %1817 = vmatpush1.bf16.msra.mxu0 0
      %1818 = vmatprep.subr.bf16.mxu0 0
      %1819 = vmatpush1.bf16.msra.mxu0 0
      %1820 = vmatprep.subr.bf16.mxu0 0
      %1821 = vmatpush1.bf16.msra.mxu0 0
      %1822 = vmatprep.subr.bf16.mxu0 0
      %1823 = vmatpush1.bf16.msra.mxu0 0
      %1824 = vmatprep.subr.bf16.mxu0 0
      %1825 = vmatpush1.bf16.msra.mxu0 0
      %1826 = vmatprep.subr.bf16.mxu0 0
      %1827 = vmatpush1.bf16.msra.mxu0 0
      %1828 = vmatprep.subr.bf16.mxu0 0
      %1829 = vmatpush1.bf16.msra.mxu0 0
      %1830 = vmatprep.mubr.bf16.mxu0 0
      %1831 = vmatmul.mubr.bf16.gmra.mrb[0].mxu0 %v1793
      %v1832 = vpop.f32.mrb[0].mxu0
      %v1833 = vadd.f32 0.0, %v1832
      %v1834 = vpop.f32.mrb[0].mxu0
      %v1835 = vpop.f32.mrb[0].mxu0
      %v1836 = vpop.f32.mrb[0].mxu0
      %1837 = vdwg.mxu0
      %v1838 = vadd.f32 %v1485, %v1833
      %v1839 = vld [vmem:[%s9] sm:$0x1]
      %v1841 = vlaneseq
      %v1842 = vshrl.u32 %v1841, 7
      %v1843 = vsub.s32 0, %v1842
      %v1844 = vrot.slane %v1839, %v1843
      %v1846 = vadd.f32 %v1838, %v1844
      %v1847 = vadd.f32 %v1846, %v427
      %v1848 = vld [vmem:[%s10] sm:$0x1]
      %v1849 = vld [vmem:[%s11] sm:$0x1]
      %v1850 = vsel %vm453, %v1847, 0.0
      %1851 = vadd.xlane.f32.xlu0 %v1850
      %v1852 = vpop.xlane.xlu0 %1851
      %v1853 = vrcp.pop 32.0
      %v1854 = vmul.f32 %v1852, %v1853
      %v1855 = vsub.f32 %v1847, %v1854
      %v1856 = vmul.f32 %v1855, %v1855
      %v1857 = vsel %vm453, %v1856, 0.0
      %1858 = vadd.xlane.f32.xlu0 %v1857
      %v1859 = vpop.xlane.xlu0 %1858
      %v1860 = vmul.f32 %v1859, %v1853
      %v1861 = vadd.f32 %v1860, 1e-06
      %v1862 = vrsqrt.pop %v1861
      %v1863 = vmul.f32 %v1855, %v1862
      %v1865 = vlaneseq
      %v1866 = vshrl.u32 %v1865, 7
      %v1867 = vsub.s32 0, %v1866
      %v1868 = vrot.slane %v1848, %v1867
      %v1870 = vmul.f32 %v1863, %v1868
      %v1872 = vlaneseq
      %v1873 = vshrl.u32 %v1872, 7
      %v1874 = vsub.s32 0, %v1873
      %v1875 = vrot.slane %v1849, %v1874
      %v1877 = vadd.f32 %v1870, %v1875
      %1878 = vst.msk [vmem:[%s425] sm:$0xff] %vm453, %v1877
      %p1879 = scmp.lt.s32.totalorder %s23, 1
      %s1880 = scalar_select %p1879, %s23, 1
      %s1881 = smul.addr %s1880, 8
      %s1882 = scalar_lea.vmem %s12, %s1881
      // Predicated region
      $region69: #{_lambda_.3} parent=67 // pred_check
        %p1883 = pneg %p303
      $region70: #{_lambda_.3} parent=67 // pred_check_branch
        %1885 = sbr.rel (%p1883) target = $region72
      $region71: #{_lambda_.3} parent=67 // pred_region
        _
      $region72: #{_lambda_.3} parent=67 // pred_fallthru
        _
    $region68: #{_lambda_.3} parent=5 // pred_fallthru
      _
    %p1886 = scmp.le.s32.totalorder 2, %s18
    // Predicated region
    $region73: #{_lambda_.3} parent=5 // pred_check
      %p1887 = pneg %p1886
    $region74: #{_lambda_.3} parent=5 // pred_check_branch
      %1889 = sbr.rel (%p1887) target = $region76
    $region75: #{_lambda_.3} parent=5 // pred_region
      %s1890 = ssub.s32 %s18, 2
      // Predicated region
      $region77: #{_lambda_.3} parent=75 // pred_check
        %p1891 = pneg %p309
      $region78: #{_lambda_.3} parent=75 // pred_check_branch
        %1893 = sbr.rel (%p1891) target = $region80
      $region79: #{_lambda_.3} parent=75 // pred_region
        %p1894 = scmp.lt.s32.totalorder %s24, 1
        %s1895 = scalar_select %p1894, %s24, 1
        %s1896 = smul.addr %s1895, 8
        %s1897 = scalar_lea.vmem %s12, %s1896
      $region80: #{_lambda_.3} parent=75 // pred_fallthru
        _
    $region76: #{_lambda_.3} parent=5 // pred_fallthru
      _
  $region6: #{_lambda_.3} parent=0 // loop_footer
    %s22 = sadd.s32 1, %s18
  $region7: #{_lambda_.3} parent=0 // loop_footer_branch
    %17 = sbr.rel target = $region3
  $region8: #{_lambda_.3} parent=0 // loop_exit
    _

// kernel: _lambda_.4
$region0: #{_lambda_.4}
  #allocation0 [shape = 'u32[]', space=smem, size = 0x4, offset = 0x4, fixed_abs, tag = 'smem constant byte address 0x4 - core index']
  #allocation1 [shape = 'u32[144,128]{1,0:T(1,128)}', space=vmem, size = 0x12000, scoped, tag = 'internal scratch']
  %s0 = inlined_call_operand.vmem [shape: f32[2,8,32], index: 0, kind: input, shape index: {}]
  %s1 = inlined_call_operand.vmem [shape: f32[2,12,32], index: 1, kind: input, shape index: {}]
  %s2 = inlined_call_operand.vmem [shape: f32[2,1,12], index: 2, kind: input, shape index: {}]
  %s3 = inlined_call_operand.vmem [shape: bf16[4,32,8], index: 3, kind: input, shape index: {}]
  %s4 = inlined_call_operand.vmem [shape: f32[4,1,8], index: 4, kind: input, shape index: {}]
  %s5 = inlined_call_operand.vmem [shape: bf16[4,32,8], index: 5, kind: input, shape index: {}]
  %s6 = inlined_call_operand.vmem [shape: f32[4,1,8], index: 6, kind: input, shape index: {}]
  %s7 = inlined_call_operand.vmem [shape: bf16[4,32,8], index: 7, kind: input, shape index: {}]
  %s8 = inlined_call_operand.vmem [shape: f32[4,1,8], index: 8, kind: input, shape index: {}]
  %s9 = inlined_call_operand.vmem [shape: bf16[4,8,32], index: 9, kind: input, shape index: {}]
  %s10 = inlined_call_operand.vmem [shape: f32[1,32], index: 10, kind: input, shape index: {}]
  %s11 = inlined_call_operand.vmem [shape: f32[1,32], index: 11, kind: input, shape index: {}]
  %s12 = inlined_call_operand.vmem [shape: f32[1,32], index: 12, kind: input, shape index: {}]
  %s13 = inlined_call_operand.vmem [shape: f32[2,8,32], index: 13, kind: output, shape index: {0}]
  %s14 = inlined_call_operand.hbm [shape: f32[2,8,12], index: 14, kind: output, shape index: {1}]
  %15 = xla_tuple %s13, %s14
  %s16 = sld [smem:[#allocation0]]
  $region93: #{_lambda_.4} parent=0
    _
  %s18 = ssub.s32 1, %s16
  %s19 = scalar_select 0, %s18, %s16
  $region1: #{_lambda_.4} parent=0
    #allocation2 [shape = 'u8[8192]{0}', space=vmem, size = 0x2000, scoped, tag = 'output window, operand 1']
    #allocation3 [shape = 's32[2]{0}', space=sflag, size = 0x8, scoped, tag = 'scoped memory for _lambda_.4']
    %20 = vsyncpa [#allocation3], 0
    %s21 = scalar_lea.sflag [#allocation3], 1
    %22 = vsyncpa %s21, 0
    loop: start=0, step=1, limit=4
    $region2: #{_lambda_.4} parent=1 // loop_pre_header
      _
    $region3: #{_lambda_.4} parent=1 // loop_header
      %s24 = sphi 0, %s28
      %p25 = scmp.ge.s32.totalorder %s24, 4
      %s34 = sphi 0, %s36
      %s37 = sphi 0, %s34
      %s38 = sphi 0, %s37
      %s54 = sphi 0, %s38
      %s60 = sphi 0, %s62
      %s63 = sphi 0, %s60
      %s64 = sphi 0, %s63
      %s80 = sphi 0, %s64
      %s86 = sphi 0, %s88
      %s89 = sphi 0, %s86
      %s90 = sphi 0, %s89
      %s106 = sphi 0, %s90
      %s110 = sphi 0, %s110
      %s112 = sphi 0, %s110
      %s113 = sphi 0, %s112
      %s127 = sphi 0, %s113
      %s131 = sphi 0, %s131
      %s133 = sphi 0, %s131
      %s134 = sphi 0, %s133
      %s148 = sphi 0, %s134
      %s152 = sphi 0, %s152
      %s154 = sphi 0, %s152
      %s155 = sphi 0, %s154
      %s169 = sphi 0, %s155
      %s173 = sphi 0, %s173
      %s175 = sphi 0, %s173
      %s176 = sphi 0, %s175
      %s190 = sphi 0, %s176
      %s194 = sphi 0, %s194
      %s196 = sphi 0, %s194
      %s197 = sphi 0, %s196
      %s211 = sphi 0, %s197
      %s215 = sphi 0, %s215
      %s217 = sphi 0, %s215
      %s218 = sphi 0, %s217
      %s232 = sphi 0, %s218
      %s236 = sphi 0, %s236
      %s238 = sphi 0, %s236
      %s239 = sphi 0, %s238
      %s253 = sphi 0, %s239
      %s257 = sphi 0, %s257
      %s259 = sphi 0, %s257
      %s260 = sphi 0, %s259
      %s274 = sphi 0, %s260
      %s278 = sphi 0, %s278
      %s280 = sphi 0, %s278
      %s281 = sphi 0, %s280
      %s295 = sphi 0, %s281
      %s299 = sphi 0, %s299
      %s301 = sphi 0, %s299
      %s302 = sphi 0, %s301
      %s316 = sphi 0, %s302
      %s322 = sphi 0, %s324
      %s325 = sphi 0, %s322
      %s326 = sphi 0, %s325
      %s342 = sphi 0, %s326
      %s348 = sphi 0, %s350
      %s351 = sphi 0, %s348
      %s352 = sphi 0, %s351
      %s368 = sphi 0, %s352
    $region4: #{_lambda_.4} parent=1 // loop_header_branch
      %27 = sbr.rel (%p25) target = $region8
    $region5: #{_lambda_.4} parent=1 // loop_body
      %s29 = ssub.s32 %s24, 1
      %s30 = ssub.s32 %s24, 2
      %s31 = sadd.s32 %s24, 1
      %s32 = ssub.s32 %s24, %s31
      %p33 = scmp.eq.s32.totalorder %s32, 0
      %s35 = sadd.s32 %s34, 1
      %s36 = scalar_select %p33, %s34, %s35
      %p39 = pneg %p33
      %p40 = scmp.eq.s32.totalorder %s24, 1
      %p41 = por %p39, %p40
      %p42 = scmp.ne.s32.totalorder %s34, %s37
      %p43 = scmp.eq.s32.totalorder %s24, 0
      %p44 = por %p42, %p43
      %p45 = scmp.ne.s32.totalorder %s34, %s37
      %p46 = scmp.eq.s32.totalorder %s29, 1
      %p47 = por %p45, %p46
      %p48 = scmp.ne.s32.totalorder %s37, %s38
      %p49 = scmp.eq.s32.totalorder %s29, 0
      %p50 = por %p48, %p49
      %p51 = scmp.ne.s32.totalorder %s37, %s38
      %p52 = scmp.eq.s32.totalorder %s30, 1
      %p53 = por %p51, %p52
      %p55 = scmp.ne.s32.totalorder %s38, %s54
      %p56 = scmp.eq.s32.totalorder %s30, 0
      %p57 = por %p55, %p56
      %s58 = ssub.s32 %s24, %s31
      %p59 = scmp.eq.s32.totalorder %s58, 0
      %s61 = sadd.s32 %s60, 1
      %s62 = scalar_select %p59, %s60, %s61
      %p65 = pneg %p59
      %p66 = scmp.eq.s32.totalorder %s24, 1
      %p67 = por %p65, %p66
      %p68 = scmp.ne.s32.totalorder %s60, %s63
      %p69 = scmp.eq.s32.totalorder %s24, 0
      %p70 = por %p68, %p69
      %p71 = scmp.ne.s32.totalorder %s60, %s63
      %p72 = scmp.eq.s32.totalorder %s29, 1
      %p73 = por %p71, %p72
      %p74 = scmp.ne.s32.totalorder %s63, %s64
      %p75 = scmp.eq.s32.totalorder %s29, 0
      %p76 = por %p74, %p75
      %p77 = scmp.ne.s32.totalorder %s63, %s64
      %p78 = scmp.eq.s32.totalorder %s30, 1
      %p79 = por %p77, %p78
      %p81 = scmp.ne.s32.totalorder %s64, %s80
      %p82 = scmp.eq.s32.totalorder %s30, 0
      %p83 = por %p81, %p82
      %s84 = ssub.s32 %s24, %s31
      %p85 = scmp.eq.s32.totalorder %s84, 0
      %s87 = sadd.s32 %s86, 1
      %s88 = scalar_select %p85, %s86, %s87
      %p91 = pneg %p85
      %p92 = scmp.eq.s32.totalorder %s24, 1
      %p93 = por %p91, %p92
      %p94 = scmp.ne.s32.totalorder %s86, %s89
      %p95 = scmp.eq.s32.totalorder %s24, 0
      %p96 = por %p94, %p95
      %p97 = scmp.ne.s32.totalorder %s86, %s89
      %p98 = scmp.eq.s32.totalorder %s29, 1
      %p99 = por %p97, %p98
      %p100 = scmp.ne.s32.totalorder %s89, %s90
      %p101 = scmp.eq.s32.totalorder %s29, 0
      %p102 = por %p100, %p101
      %p103 = scmp.ne.s32.totalorder %s89, %s90
      %p104 = scmp.eq.s32.totalorder %s30, 1
      %p105 = por %p103, %p104
      %p107 = scmp.ne.s32.totalorder %s90, %s106
      %p108 = scmp.eq.s32.totalorder %s30, 0
      %p109 = por %p107, %p108
      %s111 = sadd.s32 %s110, 1
      %p114 = scmp.eq.s32.totalorder %s24, 1
      %p115 = scmp.ne.s32.totalorder %s110, %s112
      %p116 = scmp.eq.s32.totalorder %s24, 0
      %p117 = por %p115, %p116
      %p118 = scmp.ne.s32.totalorder %s110, %s112
      %p119 = scmp.eq.s32.totalorder %s29, 1
      %p120 = por %p118, %p119
      %p121 = scmp.ne.s32.totalorder %s112, %s113
      %p122 = scmp.eq.s32.totalorder %s29, 0
      %p123 = por %p121, %p122
      %p124 = scmp.ne.s32.totalorder %s112, %s113
      %p125 = scmp.eq.s32.totalorder %s30, 1
      %p126 = por %p124, %p125
      %p128 = scmp.ne.s32.totalorder %s113, %s127
      %p129 = scmp.eq.s32.totalorder %s30, 0
      %p130 = por %p128, %p129
      %s132 = sadd.s32 %s131, 1
      %p135 = scmp.eq.s32.totalorder %s24, 1
      %p136 = scmp.ne.s32.totalorder %s131, %s133
      %p137 = scmp.eq.s32.totalorder %s24, 0
      %p138 = por %p136, %p137
      %p139 = scmp.ne.s32.totalorder %s131, %s133
      %p140 = scmp.eq.s32.totalorder %s29, 1
      %p141 = por %p139, %p140
      %p142 = scmp.ne.s32.totalorder %s133, %s134
      %p143 = scmp.eq.s32.totalorder %s29, 0
      %p144 = por %p142, %p143
      %p145 = scmp.ne.s32.totalorder %s133, %s134
      %p146 = scmp.eq.s32.totalorder %s30, 1
      %p147 = por %p145, %p146
      %p149 = scmp.ne.s32.totalorder %s134, %s148
      %p150 = scmp.eq.s32.totalorder %s30, 0
      %p151 = por %p149, %p150
      %s153 = sadd.s32 %s152, 1
      %p156 = scmp.eq.s32.totalorder %s24, 1
      %p157 = scmp.ne.s32.totalorder %s152, %s154
      %p158 = scmp.eq.s32.totalorder %s24, 0
      %p159 = por %p157, %p158
      %p160 = scmp.ne.s32.totalorder %s152, %s154
      %p161 = scmp.eq.s32.totalorder %s29, 1
      %p162 = por %p160, %p161
      %p163 = scmp.ne.s32.totalorder %s154, %s155
      %p164 = scmp.eq.s32.totalorder %s29, 0
      %p165 = por %p163, %p164
      %p166 = scmp.ne.s32.totalorder %s154, %s155
      %p167 = scmp.eq.s32.totalorder %s30, 1
      %p168 = por %p166, %p167
      %p170 = scmp.ne.s32.totalorder %s155, %s169
      %p171 = scmp.eq.s32.totalorder %s30, 0
      %p172 = por %p170, %p171
      %s174 = sadd.s32 %s173, 1
      %p177 = scmp.eq.s32.totalorder %s24, 1
      %p178 = scmp.ne.s32.totalorder %s173, %s175
      %p179 = scmp.eq.s32.totalorder %s24, 0
      %p180 = por %p178, %p179
      %p181 = scmp.ne.s32.totalorder %s173, %s175
      %p182 = scmp.eq.s32.totalorder %s29, 1
      %p183 = por %p181, %p182
      %p184 = scmp.ne.s32.totalorder %s175, %s176
      %p185 = scmp.eq.s32.totalorder %s29, 0
      %p186 = por %p184, %p185
      %p187 = scmp.ne.s32.totalorder %s175, %s176
      %p188 = scmp.eq.s32.totalorder %s30, 1
      %p189 = por %p187, %p188
      %p191 = scmp.ne.s32.totalorder %s176, %s190
      %p192 = scmp.eq.s32.totalorder %s30, 0
      %p193 = por %p191, %p192
      %s195 = sadd.s32 %s194, 1
      %p198 = scmp.eq.s32.totalorder %s24, 1
      %p199 = scmp.ne.s32.totalorder %s194, %s196
      %p200 = scmp.eq.s32.totalorder %s24, 0
      %p201 = por %p199, %p200
      %p202 = scmp.ne.s32.totalorder %s194, %s196
      %p203 = scmp.eq.s32.totalorder %s29, 1
      %p204 = por %p202, %p203
      %p205 = scmp.ne.s32.totalorder %s196, %s197
      %p206 = scmp.eq.s32.totalorder %s29, 0
      %p207 = por %p205, %p206
      %p208 = scmp.ne.s32.totalorder %s196, %s197
      %p209 = scmp.eq.s32.totalorder %s30, 1
      %p210 = por %p208, %p209
      %p212 = scmp.ne.s32.totalorder %s197, %s211
      %p213 = scmp.eq.s32.totalorder %s30, 0
      %p214 = por %p212, %p213
      %s216 = sadd.s32 %s215, 1
      %p219 = scmp.eq.s32.totalorder %s24, 1
      %p220 = scmp.ne.s32.totalorder %s215, %s217
      %p221 = scmp.eq.s32.totalorder %s24, 0
      %p222 = por %p220, %p221
      %p223 = scmp.ne.s32.totalorder %s215, %s217
      %p224 = scmp.eq.s32.totalorder %s29, 1
      %p225 = por %p223, %p224
      %p226 = scmp.ne.s32.totalorder %s217, %s218
      %p227 = scmp.eq.s32.totalorder %s29, 0
      %p228 = por %p226, %p227
      %p229 = scmp.ne.s32.totalorder %s217, %s218
      %p230 = scmp.eq.s32.totalorder %s30, 1
      %p231 = por %p229, %p230
      %p233 = scmp.ne.s32.totalorder %s218, %s232
      %p234 = scmp.eq.s32.totalorder %s30, 0
      %p235 = por %p233, %p234
      %s237 = sadd.s32 %s236, 1
      %p240 = scmp.eq.s32.totalorder %s24, 1
      %p241 = scmp.ne.s32.totalorder %s236, %s238
      %p242 = scmp.eq.s32.totalorder %s24, 0
      %p243 = por %p241, %p242
      %p244 = scmp.ne.s32.totalorder %s236, %s238
      %p245 = scmp.eq.s32.totalorder %s29, 1
      %p246 = por %p244, %p245
      %p247 = scmp.ne.s32.totalorder %s238, %s239
      %p248 = scmp.eq.s32.totalorder %s29, 0
      %p249 = por %p247, %p248
      %p250 = scmp.ne.s32.totalorder %s238, %s239
      %p251 = scmp.eq.s32.totalorder %s30, 1
      %p252 = por %p250, %p251
      %p254 = scmp.ne.s32.totalorder %s239, %s253
      %p255 = scmp.eq.s32.totalorder %s30, 0
      %p256 = por %p254, %p255
      %s258 = sadd.s32 %s257, 1
      %p261 = scmp.eq.s32.totalorder %s24, 1
      %p262 = scmp.ne.s32.totalorder %s257, %s259
      %p263 = scmp.eq.s32.totalorder %s24, 0
      %p264 = por %p262, %p263
      %p265 = scmp.ne.s32.totalorder %s257, %s259
      %p266 = scmp.eq.s32.totalorder %s29, 1
      %p267 = por %p265, %p266
      %p268 = scmp.ne.s32.totalorder %s259, %s260
      %p269 = scmp.eq.s32.totalorder %s29, 0
      %p270 = por %p268, %p269
      %p271 = scmp.ne.s32.totalorder %s259, %s260
      %p272 = scmp.eq.s32.totalorder %s30, 1
      %p273 = por %p271, %p272
      %p275 = scmp.ne.s32.totalorder %s260, %s274
      %p276 = scmp.eq.s32.totalorder %s30, 0
      %p277 = por %p275, %p276
      %s279 = sadd.s32 %s278, 1
      %p282 = scmp.eq.s32.totalorder %s24, 1
      %p283 = scmp.ne.s32.totalorder %s278, %s280
      %p284 = scmp.eq.s32.totalorder %s24, 0
      %p285 = por %p283, %p284
      %p286 = scmp.ne.s32.totalorder %s278, %s280
      %p287 = scmp.eq.s32.totalorder %s29, 1
      %p288 = por %p286, %p287
      %p289 = scmp.ne.s32.totalorder %s280, %s281
      %p290 = scmp.eq.s32.totalorder %s29, 0
      %p291 = por %p289, %p290
      %p292 = scmp.ne.s32.totalorder %s280, %s281
      %p293 = scmp.eq.s32.totalorder %s30, 1
      %p294 = por %p292, %p293
      %p296 = scmp.ne.s32.totalorder %s281, %s295
      %p297 = scmp.eq.s32.totalorder %s30, 0
      %p298 = por %p296, %p297
      %s300 = sadd.s32 %s299, 1
      %p303 = scmp.eq.s32.totalorder %s24, 1
      %p304 = scmp.ne.s32.totalorder %s299, %s301
      %p305 = scmp.eq.s32.totalorder %s24, 0
      %p306 = por %p304, %p305
      %p307 = scmp.ne.s32.totalorder %s299, %s301
      %p308 = scmp.eq.s32.totalorder %s29, 1
      %p309 = por %p307, %p308
      %p310 = scmp.ne.s32.totalorder %s301, %s302
      %p311 = scmp.eq.s32.totalorder %s29, 0
      %p312 = por %p310, %p311
      %p313 = scmp.ne.s32.totalorder %s301, %s302
      %p314 = scmp.eq.s32.totalorder %s30, 1
      %p315 = por %p313, %p314
      %p317 = scmp.ne.s32.totalorder %s302, %s316
      %p318 = scmp.eq.s32.totalorder %s30, 0
      %p319 = por %p317, %p318
      %s320 = ssub.s32 %s24, %s31
      %p321 = scmp.eq.s32.totalorder %s320, 0
      %s323 = sadd.s32 %s322, 1
      %s324 = scalar_select %p321, %s322, %s323
      %p327 = pneg %p321
      %p328 = scmp.eq.s32.totalorder %s24, 1
      %p329 = por %p327, %p328
      %p330 = scmp.ne.s32.totalorder %s322, %s325
      %p331 = scmp.eq.s32.totalorder %s24, 0
      %p332 = por %p330, %p331
      %p333 = scmp.ne.s32.totalorder %s322, %s325
      %p334 = scmp.eq.s32.totalorder %s29, 1
      %p335 = por %p333, %p334
      %p336 = scmp.ne.s32.totalorder %s325, %s326
      %p337 = scmp.eq.s32.totalorder %s29, 0
      %p338 = por %p336, %p337
      %p339 = scmp.ne.s32.totalorder %s325, %s326
      %p340 = scmp.eq.s32.totalorder %s30, 1
      %p341 = por %p339, %p340
      %p343 = scmp.ne.s32.totalorder %s326, %s342
      %p344 = scmp.eq.s32.totalorder %s30, 0
      %p345 = por %p343, %p344
      %s346 = ssub.s32 %s24, %s31
      %p347 = scmp.eq.s32.totalorder %s346, 0
      %s349 = sadd.s32 %s348, 1
      %s350 = scalar_select %p347, %s348, %s349
      %p353 = pneg %p347
      %p354 = scmp.eq.s32.totalorder %s24, 1
      %p355 = por %p353, %p354
      %p356 = scmp.ne.s32.totalorder %s348, %s351
      %p357 = scmp.eq.s32.totalorder %s24, 0
      %p358 = por %p356, %p357
      %p359 = scmp.ne.s32.totalorder %s348, %s351
      %p360 = scmp.eq.s32.totalorder %s29, 1
      %p361 = por %p359, %p360
      %p362 = scmp.ne.s32.totalorder %s351, %s352
      %p363 = scmp.eq.s32.totalorder %s29, 0
      %p364 = por %p362, %p363
      %p365 = scmp.ne.s32.totalorder %s351, %s352
      %p366 = scmp.eq.s32.totalorder %s30, 1
      %p367 = por %p365, %p366
      %p369 = scmp.ne.s32.totalorder %s352, %s368
      %p370 = scmp.eq.s32.totalorder %s30, 0
      %p371 = por %p369, %p370
      %p372 = scmp.le.s32.totalorder 1, %s24
      %p373 = scmp.lt.s32.totalorder %s24, 3
      %p374 = pnand %p372, %p373
      %p375 = pneg %p374
      // Predicated region
      $region9: #{_lambda_.4} parent=5 // pred_check
        _
      $region10: #{_lambda_.4} parent=5 // pred_check_branch
        %377 = sbr.rel (%p374) target = $region12
      $region11: #{_lambda_.4} parent=5 // pred_region
        %s378 = ssub.s32 %s24, 1
        // Predicated region
        $region13: #{_lambda_.4} parent=11 // pred_check
          %p379 = pneg %p123
        $region14: #{_lambda_.4} parent=11 // pred_check_branch
          %381 = sbr.rel (%p379) target = $region16
        $region15: #{_lambda_.4} parent=11 // pred_region
          _
        $region16: #{_lambda_.4} parent=11 // pred_fallthru
          _
        // Predicated region
        $region17: #{_lambda_.4} parent=11 // pred_check
          %p382 = pneg %p144
        $region18: #{_lambda_.4} parent=11 // pred_check_branch
          %384 = sbr.rel (%p382) target = $region20
        $region19: #{_lambda_.4} parent=11 // pred_region
          _
        $region20: #{_lambda_.4} parent=11 // pred_fallthru
          _
        // Predicated region
        $region21: #{_lambda_.4} parent=11 // pred_check
          %p385 = pneg %p165
        $region22: #{_lambda_.4} parent=11 // pred_check_branch
          %387 = sbr.rel (%p385) target = $region24
        $region23: #{_lambda_.4} parent=11 // pred_region
          _
        $region24: #{_lambda_.4} parent=11 // pred_fallthru
          _
        // Predicated region
        $region25: #{_lambda_.4} parent=11 // pred_check
          %p388 = pneg %p186
        $region26: #{_lambda_.4} parent=11 // pred_check_branch
          %390 = sbr.rel (%p388) target = $region28
        $region27: #{_lambda_.4} parent=11 // pred_region
          _
        $region28: #{_lambda_.4} parent=11 // pred_fallthru
          _
        // Predicated region
        $region29: #{_lambda_.4} parent=11 // pred_check
          %p391 = pneg %p207
        $region30: #{_lambda_.4} parent=11 // pred_check_branch
          %393 = sbr.rel (%p391) target = $region32
        $region31: #{_lambda_.4} parent=11 // pred_region
          _
        $region32: #{_lambda_.4} parent=11 // pred_fallthru
          _
        // Predicated region
        $region33: #{_lambda_.4} parent=11 // pred_check
          %p394 = pneg %p228
        $region34: #{_lambda_.4} parent=11 // pred_check_branch
          %396 = sbr.rel (%p394) target = $region36
        $region35: #{_lambda_.4} parent=11 // pred_region
          _
        $region36: #{_lambda_.4} parent=11 // pred_fallthru
          _
        // Predicated region
        $region37: #{_lambda_.4} parent=11 // pred_check
          %p397 = pneg %p249
        $region38: #{_lambda_.4} parent=11 // pred_check_branch
          %399 = sbr.rel (%p397) target = $region40
        $region39: #{_lambda_.4} parent=11 // pred_region
          _
        $region40: #{_lambda_.4} parent=11 // pred_fallthru
          _
        // Predicated region
        $region41: #{_lambda_.4} parent=11 // pred_check
          %p400 = pneg %p270
        $region42: #{_lambda_.4} parent=11 // pred_check_branch
          %402 = sbr.rel (%p400) target = $region44
        $region43: #{_lambda_.4} parent=11 // pred_region
          _
        $region44: #{_lambda_.4} parent=11 // pred_fallthru
          _
        // Predicated region
        $region45: #{_lambda_.4} parent=11 // pred_check
          %p403 = pneg %p291
        $region46: #{_lambda_.4} parent=11 // pred_check_branch
          %405 = sbr.rel (%p403) target = $region48
        $region47: #{_lambda_.4} parent=11 // pred_region
          _
        $region48: #{_lambda_.4} parent=11 // pred_fallthru
          _
        // Predicated region
        $region49: #{_lambda_.4} parent=11 // pred_check
          %p406 = pneg %p312
        $region50: #{_lambda_.4} parent=11 // pred_check_branch
          %408 = sbr.rel (%p406) target = $region52
        $region51: #{_lambda_.4} parent=11 // pred_region
          _
        $region52: #{_lambda_.4} parent=11 // pred_fallthru
          _
      $region12: #{_lambda_.4} parent=5 // pred_fallthru
        _
      %p409 = scmp.lt.s32.totalorder %s24, 2
      // Predicated region
      $region53: #{_lambda_.4} parent=5 // pred_check
        %p410 = pneg %p409
      $region54: #{_lambda_.4} parent=5 // pred_check_branch
        %412 = sbr.rel (%p410) target = $region56
      $region55: #{_lambda_.4} parent=5 // pred_region
        // Predicated region
        $region57: #{_lambda_.4} parent=55 // pred_check
          %p413 = pneg %p44
        $region58: #{_lambda_.4} parent=55 // pred_check_branch
          %415 = sbr.rel (%p413) target = $region60
        $region59: #{_lambda_.4} parent=55 // pred_region
          %p416 = scmp.lt.s32.totalorder %s24, 1
          %s417 = scalar_select %p416, %s24, 1
          %s418 = smul.addr %s417, 8
          %s419 = scalar_lea.vmem %s0, %s418
        $region60: #{_lambda_.4} parent=55 // pred_fallthru
          _
        // Predicated region
        $region61: #{_lambda_.4} parent=55 // pred_check
          %p420 = pneg %p70
        $region62: #{_lambda_.4} parent=55 // pred_check_branch
          %422 = sbr.rel (%p420) target = $region64
        $region63: #{_lambda_.4} parent=55 // pred_region
          %p423 = scmp.lt.s32.totalorder %s24, 1
          %s424 = scalar_select %p423, %s24, 1
          %s425 = smul.addr %s424, 2
          %s426 = smul.addr %s425, 8
          %s427 = scalar_lea.vmem %s1, %s426
        $region64: #{_lambda_.4} parent=55 // pred_fallthru
          _
        // Predicated region
        $region65: #{_lambda_.4} parent=55 // pred_check
          %p428 = pneg %p96
        $region66: #{_lambda_.4} parent=55 // pred_check_branch
          %430 = sbr.rel (%p428) target = $region68
        $region67: #{_lambda_.4} parent=55 // pred_region
          %p431 = scmp.lt.s32.totalorder %s24, 1
          %s432 = scalar_select %p431, %s24, 1
          %s433 = scalar_lea.vmem %s2, %s432
        $region68: #{_lambda_.4} parent=55 // pred_fallthru
          _
      $region56: #{_lambda_.4} parent=5 // pred_fallthru
        _
      %p434 = scmp.le.s32.totalorder 1, %s24
      %p435 = scmp.lt.s32.totalorder %s24, 3
      %p436 = pnand %p434, %p435
      %p437 = pneg %p436
      // Predicated region
      $region69: #{_lambda_.4} parent=5 // pred_check
        _
      $region70: #{_lambda_.4} parent=5 // pred_check_branch
        %439 = sbr.rel (%p436) target = $region72
      $region71: #{_lambda_.4} parent=5 // pred_region
        %s440 = ssub.s32 %s24, 1
        %p441 = scmp.lt.s32.totalorder %s29, 1
        %s442 = scalar_select %p441, %s29, 1
        %s443 = smul.addr %s442, 8
        %s444 = scalar_lea.vmem %s0, %s443
        %p445 = pneg %p50
        %p446 = pneg %p47
        %p447 = scmp.lt.s32.totalorder %s29, 1
        %s448 = scalar_select %p447, %s29, 1
        %s449 = smul.addr %s448, 2
        %s450 = smul.addr %s449, 8
        %s451 = scalar_lea.vmem %s1, %s450
        %p452 = pneg %p76
        %p453 = pneg %p73
        %p454 = scmp.lt.s32.totalorder %s29, 1
        %s455 = scalar_select %p454, %s29, 1
        %s456 = scalar_lea.vmem %s2, %s455
        %p457 = pneg %p102
        %p458 = pneg %p99
        %p459 = pneg %p123
        %p460 = pneg %p120
        %p461 = pneg %p144
        %p462 = pneg %p141
        %p463 = pneg %p165
        %p464 = pneg %p162
        %p465 = pneg %p186
        %p466 = pneg %p183
        %p467 = pneg %p207
        %p468 = pneg %p204
        %p469 = pneg %p228
        %p470 = pneg %p225
        %p471 = pneg %p249
        %p472 = pneg %p246
        %p473 = pneg %p270
        %p474 = pneg %p267
        %p475 = pneg %p291
        %p476 = pneg %p288
        %p477 = pneg %p312
        %p478 = pneg %p309
        %p479 = pneg %p338
        %p480 = pneg %p335
        %p481 = scmp.lt.s32.totalorder %s29, 1
        %s482 = scalar_select %p481, %s29, 1
        %s483 = smul.addr %s482, 8
        %s484 = scalar_lea.vmem %s13, %s483
        %p485 = pneg %p364
        %p486 = pneg %p361
        %s487 = sand.u32 %s351, 1
        %s488 = scalar_lea.sflag [#allocation3], %s487
        %s489 = sand.u32 %s351, 1
        %s490 = smul.addr %s489, 8
        %s491 = scalar_lea.vmem [#allocation2], %s490
        %p492 = scmp.lt.s32.totalorder %s29, 1
        %s493 = scalar_select %p492, %s29, 1
        %s494 = smul.addr %s493, 8
        %s495 = scalar_lea.vmem %s0, %s494
        %p496 = scmp.lt.s32.totalorder %s29, 1
        %s497 = scalar_select %p496, %s29, 1
        %s498 = smul.addr %s497, 2
        %s499 = smul.addr %s498, 8
        %s500 = scalar_lea.vmem %s1, %s499
        %p501 = scmp.lt.s32.totalorder %s29, 1
        %s502 = scalar_select %p501, %s29, 1
        %s503 = scalar_lea.vmem %s2, %s502
        %p504 = scmp.lt.s32.totalorder %s29, 1
        %s505 = scalar_select %p504, %s29, 1
        %s506 = smul.addr %s505, 8
        %s507 = scalar_lea.vmem %s13, %s506
        %v509 = vld [vmem:[%s495] sm:$0xff]
        %v510 = vld [vmem:[%s500] sm:$0xff]
        %v511 = vld [vmem:[%s500 + $0x8] sm:$0xf]
        %v512 = vpack.c.bf16 %v509, %v509
        %v513 = vpack.c.bf16 %v511, %v510
        %v514 = vld [vmem:[%s503] sm:$0x1]
        %v515 = vld [vmem:[%s3] sm:$0xf]
        %v516 = vld [vmem:[%s3 + $0x4] sm:$0xf]
        %v517 = vld [vmem:[%s3 + $0x8] sm:$0xf]
        %v518 = vld [vmem:[%s3 + $0xc] sm:$0xf]
        %v519 = vld [vmem:[%s4] sm:$0x1]
        %v521 = vlaneseq
        %v522 = vshrl.u32 %v521, 7
        %v523 = vsub.s32 0, %v522
        %v524 = vrot.slane %v519, %v523
        %v530 = vunpack.c.l.b16 %v515
        %v531 = vunpack.c.l.b16 %v516
        %v532 = vunpack.c.l.b16 %v517
        %v533 = vunpack.c.l.b16 %v518
        %v534 = vpack.c.b16 %v531, %v530
        %v535 = vpack.c.b16 %v533, %v532
        %vm538 = vcmask 261120
        %v540 = vsel %vm538, %v512, 0
        %542 = vmatprep.subr.bf16.mxu0 0
        %543 = vmatpush1.bf16.msra.mxu0 %v534
        %544 = vmatprep.subr.bf16.mxu0 0
        %545 = vmatpush1.bf16.msra.mxu0 %v535
        %546 = vmatprep.subr.bf16.mxu0 0
        %547 = vmatpush1.bf16.msra.mxu0 0
        %548 = vmatprep.subr.bf16.mxu0 0
        %549 = vmatpush1.bf16.msra.mxu0 0
        %550 = vmatprep.subr.bf16.mxu0 0
        %551 = vmatpush1.bf16.msra.mxu0 0
        %552 = vmatprep.subr.bf16.mxu0 0
        %553 = vmatpush1.bf16.msra.mxu0 0
        %554 = vmatprep.subr.bf16.mxu0 0
        %555 = vmatpush1.bf16.msra.mxu0 0
        %556 = vmatprep.subr.bf16.mxu0 0
        %557 = vmatpush1.bf16.msra.mxu0 0
        %558 = vmatprep.subr.bf16.mxu0 0
        %559 = vmatpush1.bf16.msra.mxu0 0
        %560 = vmatprep.subr.bf16.mxu0 0
        %561 = vmatpush1.bf16.msra.mxu0 0
        %562 = vmatprep.subr.bf16.mxu0 0
        %563 = vmatpush1.bf16.msra.mxu0 0
        %564 = vmatprep.subr.bf16.mxu0 0
        %565 = vmatpush1.bf16.msra.mxu0 0
        %566 = vmatprep.subr.bf16.mxu0 0
        %567 = vmatpush1.bf16.msra.mxu0 0
        %568 = vmatprep.subr.bf16.mxu0 0
        %569 = vmatpush1.bf16.msra.mxu0 0
        %570 = vmatprep.subr.bf16.mxu0 0
        %571 = vmatpush1.bf16.msra.mxu0 0
        %572 = vmatprep.subr.bf16.mxu0 0
        %573 = vmatpush1.bf16.msra.mxu0 0
        %574 = vmatprep.mubr.bf16.mxu0 0
        %575 = vmatmul.mubr.bf16.gmra.mrb[0].mxu0 %v540
        %v576 = vpop.f32.mrb[0].mxu0
        %v577 = vadd.f32 %v524, %v576
        %v578 = vpop.f32.mrb[0].mxu0
        %v579 = vpop.f32.mrb[0].mxu0
        %v580 = vpop.f32.mrb[0].mxu0
        %581 = vdwg.mxu0
        %v582 = vmul.f32 %v577, 0.35355338
        %v583 = vld [vmem:[%s5] sm:$0xf]
        %v584 = vld [vmem:[%s5 + $0x4] sm:$0xf]
        %v585 = vld [vmem:[%s5 + $0x8] sm:$0xf]
        %v586 = vld [vmem:[%s5 + $0xc] sm:$0xf]
        %v587 = vld [vmem:[%s6] sm:$0x1]
        %v589 = vlaneseq
        %v590 = vshrl.u32 %v589, 7
        %v591 = vsub.s32 0, %v590
        %v592 = vrot.slane %v587, %v591
        %v598 = vunpack.c.l.b16 %v583
        %v599 = vunpack.c.l.b16 %v584
        %v600 = vunpack.c.l.b16 %v585
        %v601 = vunpack.c.l.b16 %v586
        %v602 = vpack.c.b16 %v599, %v598
        %v603 = vpack.c.b16 %v601, %v600
        %v607 = vsel %vm538, %v513, 0
        %609 = vmatprep.subr.bf16.mxu0 0
        %610 = vmatpush1.bf16.msra.mxu0 %v602
        %611 = vmatprep.subr.bf16.mxu0 0
        %612 = vmatpush1.bf16.msra.mxu0 %v603
        %613 = vmatprep.subr.bf16.mxu0 0
        %614 = vmatpush1.bf16.msra.mxu0 0
        %615 = vmatprep.subr.bf16.mxu0 0
        %616 = vmatpush1.bf16.msra.mxu0 0
        %617 = vmatprep.subr.bf16.mxu0 0
        %618 = vmatpush1.bf16.msra.mxu0 0
        %619 = vmatprep.subr.bf16.mxu0 0
        %620 = vmatpush1.bf16.msra.mxu0 0
        %621 = vmatprep.subr.bf16.mxu0 0
        %622 = vmatpush1.bf16.msra.mxu0 0
        %623 = vmatprep.subr.bf16.mxu0 0
        %624 = vmatpush1.bf16.msra.mxu0 0
        %625 = vmatprep.subr.bf16.mxu0 0
        %626 = vmatpush1.bf16.msra.mxu0 0
        %627 = vmatprep.subr.bf16.mxu0 0
        %628 = vmatpush1.bf16.msra.mxu0 0
        %629 = vmatprep.subr.bf16.mxu0 0
        %630 = vmatpush1.bf16.msra.mxu0 0
        %631 = vmatprep.subr.bf16.mxu0 0
        %632 = vmatpush1.bf16.msra.mxu0 0
        %633 = vmatprep.subr.bf16.mxu0 0
        %634 = vmatpush1.bf16.msra.mxu0 0
        %635 = vmatprep.subr.bf16.mxu0 0
        %636 = vmatpush1.bf16.msra.mxu0 0
        %637 = vmatprep.subr.bf16.mxu0 0
        %638 = vmatpush1.bf16.msra.mxu0 0
        %639 = vmatprep.subr.bf16.mxu0 0
        %640 = vmatpush1.bf16.msra.mxu0 0
        %641 = vmatprep.mubr.bf16.mxu0 0
        %642 = vmatmul.mubr.bf16.gmra.mrb[0].mxu0 %v607
        %v643 = vpop.f32.mrb[0].mxu0
        %v644 = vadd.f32 %v592, %v643
        %v645 = vpop.f32.mrb[0].mxu0
        %v646 = vpop.f32.mrb[0].mxu0
        %v647 = vadd.f32 %v592, %v646
        %v648 = vpop.f32.mrb[0].mxu0
        %649 = vdwg.mxu0
        %v650 = vld [vmem:[%s7] sm:$0xf]
        %v651 = vld [vmem:[%s7 + $0x4] sm:$0xf]
        %v652 = vld [vmem:[%s7 + $0x8] sm:$0xf]
        %v653 = vld [vmem:[%s7 + $0xc] sm:$0xf]
        %v654 = vld [vmem:[%s8] sm:$0x1]
        %v656 = vlaneseq
        %v657 = vshrl.u32 %v656, 7
        %v658 = vsub.s32 0, %v657
        %v659 = vrot.slane %v654, %v658
        %v665 = vunpack.c.l.b16 %v650
        %v666 = vunpack.c.l.b16 %v651
        %v667 = vunpack.c.l.b16 %v652
        %v668 = vunpack.c.l.b16 %v653
        %v669 = vpack.c.b16 %v666, %v665
        %v670 = vpack.c.b16 %v668, %v667
        %673 = vmatprep.subr.bf16.mxu0 0
        %674 = vmatpush1.bf16.msra.mxu0 %v669
        %675 = vmatprep.subr.bf16.mxu0 0
        %676 = vmatpush1.bf16.msra.mxu0 %v670
        %677 = vmatprep.subr.bf16.mxu0 0
        %678 = vmatpush1.bf16.msra.mxu0 0
        %679 = vmatprep.subr.bf16.mxu0 0
        %680 = vmatpush1.bf16.msra.mxu0 0
        %681 = vmatprep.subr.bf16.mxu0 0
        %682 = vmatpush1.bf16.msra.mxu0 0
        %683 = vmatprep.subr.bf16.mxu0 0
        %684 = vmatpush1.bf16.msra.mxu0 0
        %685 = vmatprep.subr.bf16.mxu0 0
        %686 = vmatpush1.bf16.msra.mxu0 0
        %687 = vmatprep.subr.bf16.mxu0 0
        %688 = vmatpush1.bf16.msra.mxu0 0
        %689 = vmatprep.subr.bf16.mxu0 0
        %690 = vmatpush1.bf16.msra.mxu0 0
        %691 = vmatprep.subr.bf16.mxu0 0
        %692 = vmatpush1.bf16.msra.mxu0 0
        %693 = vmatprep.subr.bf16.mxu0 0
        %694 = vmatpush1.bf16.msra.mxu0 0
        %695 = vmatprep.subr.bf16.mxu0 0
        %696 = vmatpush1.bf16.msra.mxu0 0
        %697 = vmatprep.subr.bf16.mxu0 0
        %698 = vmatpush1.bf16.msra.mxu0 0
        %699 = vmatprep.subr.bf16.mxu0 0
        %700 = vmatpush1.bf16.msra.mxu0 0
        %701 = vmatprep.subr.bf16.mxu0 0
        %702 = vmatpush1.bf16.msra.mxu0 0
        %703 = vmatprep.subr.bf16.mxu0 0
        %704 = vmatpush1.bf16.msra.mxu0 0
        %705 = vmatprep.mubr.bf16.mxu0 0
        %706 = vmatmul.mubr.bf16.gmra.mrb[0].mxu0 %v607
        %v707 = vpop.f32.mrb[0].mxu0
        %v708 = vadd.f32 %v659, %v707
        %v709 = vpop.f32.mrb[0].mxu0
        %v710 = vpop.f32.mrb[0].mxu0
        %v711 = vadd.f32 %v659, %v710
        %v712 = vpop.f32.mrb[0].mxu0
        %713 = vdwg.mxu0
        %v714 = vpack.c.bf16 %v582, %v582
        %v715 = vpack.c.bf16 %v647, %v644
        %v717 = vlaneseq
        %v718 = vshrl.u32 %v717, 7
        %v719 = vsub.s32 0, %v718
        %v720 = vrot.slane %v514, %v719
        %vm722 = vcmask 64512
        %v724 = vsel %vm722, %v714, 0
        %v727 = vsel %vm722, %v715, 0
        %729 = vmatprep.subr.bf16.mxu0 0
        %730 = vmatpush1.bf16.xpose.msra.mxu0 %v727
        %731 = vmatprep.subr.bf16.mxu0 0
        %732 = vmatpush1.bf16.xpose.msra.mxu0 0
        %733 = vmatprep.subr.bf16.mxu0 0
        %734 = vmatpush1.bf16.xpose.msra.mxu0 0
        %735 = vmatprep.subr.bf16.mxu0 0
        %736 = vmatpush1.bf16.xpose.msra.mxu0 0
        %737 = vmatprep.subr.bf16.mxu0 0
        %738 = vmatpush1.bf16.xpose.msra.mxu0 0
        %739 = vmatprep.subr.bf16.mxu0 0
        %740 = vmatpush1.bf16.xpose.msra.mxu0 0
        %741 = vmatprep.subr.bf16.mxu0 0
        %742 = vmatpush1.bf16.xpose.msra.mxu0 0
        %743 = vmatprep.subr.bf16.mxu0 0
        %744 = vmatpush1.bf16.xpose.msra.mxu0 0
        %745 = vmatprep.subr.bf16.mxu0 0
        %746 = vmatpush1.bf16.xpose.msra.mxu0 0
        %747 = vmatprep.subr.bf16.mxu0 0
        %748 = vmatpush1.bf16.xpose.msra.mxu0 0
        %749 = vmatprep.subr.bf16.mxu0 0
        %750 = vmatpush1.bf16.xpose.msra.mxu0 0
        %751 = vmatprep.subr.bf16.mxu0 0
        %752 = vmatpush1.bf16.xpose.msra.mxu0 0
        %753 = vmatprep.subr.bf16.mxu0 0
        %754 = vmatpush1.bf16.xpose.msra.mxu0 0
        %755 = vmatprep.subr.bf16.mxu0 0
        %756 = vmatpush1.bf16.xpose.msra.mxu0 0
        %757 = vmatprep.subr.bf16.mxu0 0
        %758 = vmatpush1.bf16.xpose.msra.mxu0 0
        %759 = vmatprep.subr.bf16.mxu0 0
        %760 = vmatpush1.bf16.xpose.msra.mxu0 0
        %761 = vmatprep.mubr.bf16.mxu0 0
        %762 = vmatmul.mubr.bf16.gmra.mrb[0].mxu0 %v724
        %v763 = vpop.f32.mrb[0].mxu0
        %v764 = vadd.f32 %v720, %v763
        %v765 = vpop.f32.mrb[0].mxu0
        %v766 = vpop.f32.mrb[0].mxu0
        %v767 = vpop.f32.mrb[0].mxu0
        %768 = vdwg.mxu0
        %vm769 = vcmask 97280
        %v770 = vsel %vm769, %v764, -inf
        %771 = vmax.xlane.f32.xlu0 %v770
        %v772 = vpop.xlane.xlu0 %771
        %v773 = vsub.f32 %v764, %v772
        %v774 = vmul.f32 %v773, 1.442695
        %v775 = vpow.pop %v774
        %v776 = vsel %vm769, %v775, 0.0
        %777 = vadd.xlane.f32.xlu0 %v776
        %v778 = vpop.xlane.xlu0 %777
        %v779 = vrcp.pop %v778
        %v780 = vmul.f32 %v775, %v779
        %v781 = vpack.c.bf16 %v780, %v780
        %v782 = vpack.c.bf16 %v711, %v708
        %v784 = vsel %vm769, %v781, 0
        %vm786 = vcmask 1045504
        %v788 = vsel %vm786, %v782, 0
        %790 = vmatprep.subr.bf16.mxu0 0
        %791 = vmatpush1.bf16.msra.mxu0 %v788
        %792 = vmatprep.subr.bf16.mxu0 0
        %793 = vmatpush1.bf16.msra.mxu0 0
        %794 = vmatprep.subr.bf16.mxu0 0
        %795 = vmatpush1.bf16.msra.mxu0 0
        %796 = vmatprep.subr.bf16.mxu0 0
        %797 = vmatpush1.bf16.msra.mxu0 0
        %798 = vmatprep.subr.bf16.mxu0 0
        %799 = vmatpush1.bf16.msra.mxu0 0
        %800 = vmatprep.subr.bf16.mxu0 0
        %801 = vmatpush1.bf16.msra.mxu0 0
        %802 = vmatprep.subr.bf16.mxu0 0
        %803 = vmatpush1.bf16.msra.mxu0 0
        %804 = vmatprep.subr.bf16.mxu0 0
        %805 = vmatpush1.bf16.msra.mxu0 0
        %806 = vmatprep.subr.bf16.mxu0 0
        %807 = vmatpush1.bf16.msra.mxu0 0
        %808 = vmatprep.subr.bf16.mxu0 0
        %809 = vmatpush1.bf16.msra.mxu0 0
        %810 = vmatprep.subr.bf16.mxu0 0
        %811 = vmatpush1.bf16.msra.mxu0 0
        %812 = vmatprep.subr.bf16.mxu0 0
        %813 = vmatpush1.bf16.msra.mxu0 0
        %814 = vmatprep.subr.bf16.mxu0 0
        %815 = vmatpush1.bf16.msra.mxu0 0
        %816 = vmatprep.subr.bf16.mxu0 0
        %817 = vmatpush1.bf16.msra.mxu0 0
        %818 = vmatprep.subr.bf16.mxu0 0
        %819 = vmatpush1.bf16.msra.mxu0 0
        %820 = vmatprep.subr.bf16.mxu0 0
        %821 = vmatpush1.bf16.msra.mxu0 0
        %822 = vmatprep.mubr.bf16.mxu0 0
        %823 = vmatmul.mubr.bf16.gmra.mrb[0].mxu0 %v784
        %v824 = vpop.f32.mrb[0].mxu0
        %v825 = vadd.f32 0.0, %v824
        %v826 = vpop.f32.mrb[0].mxu0
        %v827 = vpop.f32.mrb[0].mxu0
        %v828 = vpop.f32.mrb[0].mxu0
        %829 = vdwg.mxu0
        %830 = vst.msk [vmem:[%s491] sm:$0xff] %vm769, %v780
        %v831 = vpack.c.bf16 %v825, %v825
        %v832 = vld [vmem:[%s9] sm:$0xf]
        %s833 = scalar_lea.vmem %s3, 16
        %v834 = vld [vmem:[%s833] sm:$0xf]
        %v835 = vld [vmem:[%s833 + $0x4] sm:$0xf]
        %v836 = vld [vmem:[%s833 + $0x8] sm:$0xf]
        %v837 = vld [vmem:[%s833 + $0xc] sm:$0xf]
        %s838 = scalar_lea.vmem %s4, 1
        %v839 = vld [vmem:[%s838] sm:$0x1]
        %v841 = vlaneseq
        %v842 = vshrl.u32 %v841, 7
        %v843 = vsub.s32 0, %v842
        %v844 = vrot.slane %v839, %v843
        %v850 = vunpack.c.l.b16 %v834
        %v851 = vunpack.c.l.b16 %v835
        %v852 = vunpack.c.l.b16 %v836
        %v853 = vunpack.c.l.b16 %v837
        %v854 = vpack.c.b16 %v851, %v850
        %v855 = vpack.c.b16 %v853, %v852
        %858 = vmatprep.subr.bf16.mxu0 0
        %859 = vmatpush1.bf16.msra.mxu0 %v854
        %860 = vmatprep.subr.bf16.mxu0 0
        %861 = vmatpush1.bf16.msra.mxu0 %v855
        %862 = vmatprep.subr.bf16.mxu0 0
        %863 = vmatpush1.bf16.msra.mxu0 0
        %864 = vmatprep.subr.bf16.mxu0 0
        %865 = vmatpush1.bf16.msra.mxu0 0
        %866 = vmatprep.subr.bf16.mxu0 0
        %867 = vmatpush1.bf16.msra.mxu0 0
        %868 = vmatprep.subr.bf16.mxu0 0
        %869 = vmatpush1.bf16.msra.mxu0 0
        %870 = vmatprep.subr.bf16.mxu0 0
        %871 = vmatpush1.bf16.msra.mxu0 0
        %872 = vmatprep.subr.bf16.mxu0 0
        %873 = vmatpush1.bf16.msra.mxu0 0
        %874 = vmatprep.subr.bf16.mxu0 0
        %875 = vmatpush1.bf16.msra.mxu0 0
        %876 = vmatprep.subr.bf16.mxu0 0
        %877 = vmatpush1.bf16.msra.mxu0 0
        %878 = vmatprep.subr.bf16.mxu0 0
        %879 = vmatpush1.bf16.msra.mxu0 0
        %880 = vmatprep.subr.bf16.mxu0 0
        %881 = vmatpush1.bf16.msra.mxu0 0
        %882 = vmatprep.subr.bf16.mxu0 0
        %883 = vmatpush1.bf16.msra.mxu0 0
        %884 = vmatprep.subr.bf16.mxu0 0
        %885 = vmatpush1.bf16.msra.mxu0 0
        %886 = vmatprep.subr.bf16.mxu0 0
        %887 = vmatpush1.bf16.msra.mxu0 0
        %888 = vmatprep.subr.bf16.mxu0 0
        %889 = vmatpush1.bf16.msra.mxu0 0
        %890 = vmatprep.mubr.bf16.mxu0 0
        %891 = vmatmul.mubr.bf16.gmra.mrb[0].mxu0 %v540
        %v892 = vpop.f32.mrb[0].mxu0
        %v893 = vadd.f32 %v844, %v892
        %v894 = vpop.f32.mrb[0].mxu0
        %v895 = vpop.f32.mrb[0].mxu0
        %v896 = vpop.f32.mrb[0].mxu0
        %897 = vdwg.mxu0
        %v898 = vmul.f32 %v893, 0.35355338
        %s899 = scalar_lea.vmem %s5, 16
        %v900 = vld [vmem:[%s899] sm:$0xf]
        %v901 = vld [vmem:[%s899 + $0x4] sm:$0xf]
        %v902 = vld [vmem:[%s899 + $0x8] sm:$0xf]
        %v903 = vld [vmem:[%s899 + $0xc] sm:$0xf]
        %s904 = scalar_lea.vmem %s6, 1
        %v905 = vld [vmem:[%s904] sm:$0x1]
        %v907 = vlaneseq
        %v908 = vshrl.u32 %v907, 7
        %v909 = vsub.s32 0, %v908
        %v910 = vrot.slane %v905, %v909
        %v916 = vunpack.c.l.b16 %v900
        %v917 = vunpack.c.l.b16 %v901
        %v918 = vunpack.c.l.b16 %v902
        %v919 = vunpack.c.l.b16 %v903
        %v920 = vpack.c.b16 %v917, %v916
        %v921 = vpack.c.b16 %v919, %v918
        %924 = vmatprep.subr.bf16.mxu0 0
        %925 = vmatpush1.bf16.msra.mxu0 %v920
        %926 = vmatprep.subr.bf16.mxu0 0
        %927 = vmatpush1.bf16.msra.mxu0 %v921
        %928 = vmatprep.subr.bf16.mxu0 0
        %929 = vmatpush1.bf16.msra.mxu0 0
        %930 = vmatprep.subr.bf16.mxu0 0
        %931 = vmatpush1.bf16.msra.mxu0 0
        %932 = vmatprep.subr.bf16.mxu0 0
        %933 = vmatpush1.bf16.msra.mxu0 0
        %934 = vmatprep.subr.bf16.mxu0 0
        %935 = vmatpush1.bf16.msra.mxu0 0
        %936 = vmatprep.subr.bf16.mxu0 0
        %937 = vmatpush1.bf16.msra.mxu0 0
        %938 = vmatprep.subr.bf16.mxu0 0
        %939 = vmatpush1.bf16.msra.mxu0 0
        %940 = vmatprep.subr.bf16.mxu0 0
        %941 = vmatpush1.bf16.msra.mxu0 0
        %942 = vmatprep.subr.bf16.mxu0 0
        %943 = vmatpush1.bf16.msra.mxu0 0
        %944 = vmatprep.subr.bf16.mxu0 0
        %945 = vmatpush1.bf16.msra.mxu0 0
        %946 = vmatprep.subr.bf16.mxu0 0
        %947 = vmatpush1.bf16.msra.mxu0 0
        %948 = vmatprep.subr.bf16.mxu0 0
        %949 = vmatpush1.bf16.msra.mxu0 0
        %950 = vmatprep.subr.bf16.mxu0 0
        %951 = vmatpush1.bf16.msra.mxu0 0
        %952 = vmatprep.subr.bf16.mxu0 0
        %953 = vmatpush1.bf16.msra.mxu0 0
        %954 = vmatprep.subr.bf16.mxu0 0
        %955 = vmatpush1.bf16.msra.mxu0 0
        %956 = vmatprep.mubr.bf16.mxu0 0
        %957 = vmatmul.mubr.bf16.gmra.mrb[0].mxu0 %v607
        %v958 = vpop.f32.mrb[0].mxu0
        %v959 = vadd.f32 %v910, %v958
        %v960 = vpop.f32.mrb[0].mxu0
        %v961 = vpop.f32.mrb[0].mxu0
        %v962 = vadd.f32 %v910, %v961
        %v963 = vpop.f32.mrb[0].mxu0
        %964 = vdwg.mxu0
        %s965 = scalar_lea.vmem %s7, 16
        %v966 = vld [vmem:[%s965] sm:$0xf]
        %v967 = vld [vmem:[%s965 + $0x4] sm:$0xf]
        %v968 = vld [vmem:[%s965 + $0x8] sm:$0xf]
        %v969 = vld [vmem:[%s965 + $0xc] sm:$0xf]
        %s970 = scalar_lea.vmem %s8, 1
        %v971 = vld [vmem:[%s970] sm:$0x1]
        %v973 = vlaneseq
        %v974 = vshrl.u32 %v973, 7
        %v975 = vsub.s32 0, %v974
        %v976 = vrot.slane %v971, %v975
        %v982 = vunpack.c.l.b16 %v966
        %v983 = vunpack.c.l.b16 %v967
        %v984 = vunpack.c.l.b16 %v968
        %v985 = vunpack.c.l.b16 %v969
        %v986 = vpack.c.b16 %v983, %v982
        %v987 = vpack.c.b16 %v985, %v984
        %990 = vmatprep.subr.bf16.mxu0 0
        %991 = vmatpush1.bf16.msra.mxu0 %v986
        %992 = vmatprep.subr.bf16.mxu0 0
        %993 = vmatpush1.bf16.msra.mxu0 %v987
        %994 = vmatprep.subr.bf16.mxu0 0
        %995 = vmatpush1.bf16.msra.mxu0 0
        %996 = vmatprep.subr.bf16.mxu0 0
        %997 = vmatpush1.bf16.msra.mxu0 0
        %998 = vmatprep.subr.bf16.mxu0 0
        %999 = vmatpush1.bf16.msra.mxu0 0
        %1000 = vmatprep.subr.bf16.mxu0 0
        %1001 = vmatpush1.bf16.msra.mxu0 0
        %1002 = vmatprep.subr.bf16.mxu0 0
        %1003 = vmatpush1.bf16.msra.mxu0 0
        %1004 = vmatprep.subr.bf16.mxu0 0
        %1005 = vmatpush1.bf16.msra.mxu0 0
        %1006 = vmatprep.subr.bf16.mxu0 0
        %1007 = vmatpush1.bf16.msra.mxu0 0
        %1008 = vmatprep.subr.bf16.mxu0 0
        %1009 = vmatpush1.bf16.msra.mxu0 0
        %1010 = vmatprep.subr.bf16.mxu0 0
        %1011 = vmatpush1.bf16.msra.mxu0 0
        %1012 = vmatprep.subr.bf16.mxu0 0
        %1013 = vmatpush1.bf16.msra.mxu0 0
        %1014 = vmatprep.subr.bf16.mxu0 0
        %1015 = vmatpush1.bf16.msra.mxu0 0
        %1016 = vmatprep.subr.bf16.mxu0 0
        %1017 = vmatpush1.bf16.msra.mxu0 0
        %1018 = vmatprep.subr.bf16.mxu0 0
        %1019 = vmatpush1.bf16.msra.mxu0 0
        %1020 = vmatprep.subr.bf16.mxu0 0
        %1021 = vmatpush1.bf16.msra.mxu0 0
        %1022 = vmatprep.mubr.bf16.mxu0 0
        %1023 = vmatmul.mubr.bf16.gmra.mrb[0].mxu0 %v607
        %v1024 = vpop.f32.mrb[0].mxu0
        %v1025 = vadd.f32 %v976, %v1024
        %v1026 = vpop.f32.mrb[0].mxu0
        %v1027 = vpop.f32.mrb[0].mxu0
        %v1028 = vadd.f32 %v976, %v1027
        %v1029 = vpop.f32.mrb[0].mxu0
        %1030 = vdwg.mxu0
        %v1031 = vpack.c.bf16 %v898, %v898
        %v1032 = vpack.c.bf16 %v962, %v959
        %v1034 = vsel %vm722, %v1031, 0
        %v1037 = vsel %vm722, %v1032, 0
        %1039 = vmatprep.subr.bf16.mxu0 0
        %1040 = vmatpush1.bf16.xpose.msra.mxu0 %v1037
        %1041 = vmatprep.subr.bf16.mxu0 0
        %1042 = vmatpush1.bf16.xpose.msra.mxu0 0
        %1043 = vmatprep.subr.bf16.mxu0 0
        %1044 = vmatpush1.bf16.xpose.msra.mxu0 0
        %1045 = vmatprep.subr.bf16.mxu0 0
        %1046 = vmatpush1.bf16.xpose.msra.mxu0 0
        %1047 = vmatprep.subr.bf16.mxu0 0
        %1048 = vmatpush1.bf16.xpose.msra.mxu0 0
        %1049 = vmatprep.subr.bf16.mxu0 0
        %1050 = vmatpush1.bf16.xpose.msra.mxu0 0
        %1051 = vmatprep.subr.bf16.mxu0 0
        %1052 = vmatpush1.bf16.xpose.msra.mxu0 0
        %1053 = vmatprep.subr.bf16.mxu0 0
        %1054 = vmatpush1.bf16.xpose.msra.mxu0 0
        %1055 = vmatprep.subr.bf16.mxu0 0
        %1056 = vmatpush1.bf16.xpose.msra.mxu0 0
        %1057 = vmatprep.subr.bf16.mxu0 0
        %1058 = vmatpush1.bf16.xpose.msra.mxu0 0
        %1059 = vmatprep.subr.bf16.mxu0 0
        %1060 = vmatpush1.bf16.xpose.msra.mxu0 0
        %1061 = vmatprep.subr.bf16.mxu0 0
        %1062 = vmatpush1.bf16.xpose.msra.mxu0 0
        %1063 = vmatprep.subr.bf16.mxu0 0
        %1064 = vmatpush1.bf16.xpose.msra.mxu0 0
        %1065 = vmatprep.subr.bf16.mxu0 0
        %1066 = vmatpush1.bf16.xpose.msra.mxu0 0
        %1067 = vmatprep.subr.bf16.mxu0 0
        %1068 = vmatpush1.bf16.xpose.msra.mxu0 0
        %1069 = vmatprep.subr.bf16.mxu0 0
        %1070 = vmatpush1.bf16.xpose.msra.mxu0 0
        %1071 = vmatprep.mubr.bf16.mxu0 0
        %1072 = vmatmul.mubr.bf16.gmra.mrb[0].mxu0 %v1034
        %v1073 = vpop.f32.mrb[0].mxu0
        %v1074 = vadd.f32 %v720, %v1073
        %v1075 = vpop.f32.mrb[0].mxu0
        %v1076 = vpop.f32.mrb[0].mxu0
        %v1077 = vpop.f32.mrb[0].mxu0
        %1078 = vdwg.mxu0
        %v1079 = vsel %vm769, %v1074, -inf
        %1080 = vmax.xlane.f32.xlu0 %v1079
        %v1081 = vpop.xlane.xlu0 %1080
        %v1082 = vsub.f32 %v1074, %v1081
        %v1083 = vmul.f32 %v1082, 1.442695
        %v1084 = vpow.pop %v1083
        %v1085 = vsel %vm769, %v1084, 0.0
        %1086 = vadd.xlane.f32.xlu0 %v1085
        %v1087 = vpop.xlane.xlu0 %1086
        %v1088 = vrcp.pop %v1087
        %v1089 = vmul.f32 %v1084, %v1088
        %v1090 = vpack.c.bf16 %v1089, %v1089
        %v1091 = vpack.c.bf16 %v1028, %v1025
        %v1093 = vsel %vm769, %v1090, 0
        %v1096 = vsel %vm786, %v1091, 0
        %1098 = vmatprep.subr.bf16.mxu0 0
        %1099 = vmatpush1.bf16.msra.mxu0 %v1096
        %1100 = vmatprep.subr.bf16.mxu0 0
        %1101 = vmatpush1.bf16.msra.mxu0 0
        %1102 = vmatprep.subr.bf16.mxu0 0
        %1103 = vmatpush1.bf16.msra.mxu0 0
        %1104 = vmatprep.subr.bf16.mxu0 0
        %1105 = vmatpush1.bf16.msra.mxu0 0
        %1106 = vmatprep.subr.bf16.mxu0 0
        %1107 = vmatpush1.bf16.msra.mxu0 0
        %1108 = vmatprep.subr.bf16.mxu0 0
        %1109 = vmatpush1.bf16.msra.mxu0 0
        %1110 = vmatprep.subr.bf16.mxu0 0
        %1111 = vmatpush1.bf16.msra.mxu0 0
        %1112 = vmatprep.subr.bf16.mxu0 0
        %1113 = vmatpush1.bf16.msra.mxu0 0
        %1114 = vmatprep.subr.bf16.mxu0 0
        %1115 = vmatpush1.bf16.msra.mxu0 0
        %1116 = vmatprep.subr.bf16.mxu0 0
        %1117 = vmatpush1.bf16.msra.mxu0 0
        %1118 = vmatprep.subr.bf16.mxu0 0
        %1119 = vmatpush1.bf16.msra.mxu0 0
        %1120 = vmatprep.subr.bf16.mxu0 0
        %1121 = vmatpush1.bf16.msra.mxu0 0
        %1122 = vmatprep.subr.bf16.mxu0 0
        %1123 = vmatpush1.bf16.msra.mxu0 0
        %1124 = vmatprep.subr.bf16.mxu0 0
        %1125 = vmatpush1.bf16.msra.mxu0 0
        %1126 = vmatprep.subr.bf16.mxu0 0
        %1127 = vmatpush1.bf16.msra.mxu0 0
        %1128 = vmatprep.subr.bf16.mxu0 0
        %1129 = vmatpush1.bf16.msra.mxu0 0
        %1130 = vmatprep.mubr.bf16.mxu0 0
        %1131 = vmatmul.mubr.bf16.gmra.mrb[0].mxu0 %v1093
        %v1132 = vpop.f32.mrb[0].mxu0
        %v1133 = vadd.f32 0.0, %v1132
        %v1134 = vpop.f32.mrb[0].mxu0
        %v1135 = vpop.f32.mrb[0].mxu0
        %v1136 = vpop.f32.mrb[0].mxu0
        %1137 = vdwg.mxu0
        %v1138 = vpack.c.bf16 %v1133, %v1133
        %s1139 = scalar_lea.vmem %s9, 4
        %v1140 = vld [vmem:[%s1139] sm:$0xf]
        %v1142 = vsel %vm722, %v1138, 0
        %vm1144 = vcmask 1043456
        %v1146 = vsel %vm1144, %v1140, 0
        %1148 = vmatprep.subr.bf16.mxu0 0
        %1149 = vmatpush1.bf16.msra.mxu0 %v1146
        %1150 = vmatprep.subr.bf16.mxu0 0
        %1151 = vmatpush1.bf16.msra.mxu0 0
        %1152 = vmatprep.subr.bf16.mxu0 0
        %1153 = vmatpush1.bf16.msra.mxu0 0
        %1154 = vmatprep.subr.bf16.mxu0 0
        %1155 = vmatpush1.bf16.msra.mxu0 0
        %1156 = vmatprep.subr.bf16.mxu0 0
        %1157 = vmatpush1.bf16.msra.mxu0 0
        %1158 = vmatprep.subr.bf16.mxu0 0
        %1159 = vmatpush1.bf16.msra.mxu0 0
        %1160 = vmatprep.subr.bf16.mxu0 0
        %1161 = vmatpush1.bf16.msra.mxu0 0
        %1162 = vmatprep.subr.bf16.mxu0 0
        %1163 = vmatpush1.bf16.msra.mxu0 0
        %1164 = vmatprep.subr.bf16.mxu0 0
        %1165 = vmatpush1.bf16.msra.mxu0 0
        %1166 = vmatprep.subr.bf16.mxu0 0
        %1167 = vmatpush1.bf16.msra.mxu0 0
        %1168 = vmatprep.subr.bf16.mxu0 0
        %1169 = vmatpush1.bf16.msra.mxu0 0
        %1170 = vmatprep.subr.bf16.mxu0 0
        %1171 = vmatpush1.bf16.msra.mxu0 0
        %1172 = vmatprep.subr.bf16.mxu0 0
        %1173 = vmatpush1.bf16.msra.mxu0 0
        %1174 = vmatprep.subr.bf16.mxu0 0
        %1175 = vmatpush1.bf16.msra.mxu0 0
        %1176 = vmatprep.subr.bf16.mxu0 0
        %1177 = vmatpush1.bf16.msra.mxu0 0
        %1178 = vmatprep.subr.bf16.mxu0 0
        %1179 = vmatpush1.bf16.msra.mxu0 0
        %1180 = vmatprep.mubr.bf16.mxu0 0
        %1181 = vmatmul.mubr.bf16.gmra.mrb[0].mxu0 %v1142
        %v1182 = vpop.f32.mrb[0].mxu0
        %v1183 = vadd.f32 0.0, %v1182
        %v1184 = vpop.f32.mrb[0].mxu0
        %v1185 = vpop.f32.mrb[0].mxu0
        %v1186 = vpop.f32.mrb[0].mxu0
        %1187 = vdwg.mxu0
        %v1189 = vsel %vm722, %v831, 0
        %v1192 = vsel %vm1144, %v832, 0
        %1194 = vmatprep.subr.bf16.mxu0 0
        %1195 = vmatpush1.bf16.msra.mxu0 %v1192
        %1196 = vmatprep.subr.bf16.mxu0 0
        %1197 = vmatpush1.bf16.msra.mxu0 0
        %1198 = vmatprep.subr.bf16.mxu0 0
        %1199 = vmatpush1.bf16.msra.mxu0 0
        %1200 = vmatprep.subr.bf16.mxu0 0
        %1201 = vmatpush1.bf16.msra.mxu0 0
        %1202 = vmatprep.subr.bf16.mxu0 0
        %1203 = vmatpush1.bf16.msra.mxu0 0
        %1204 = vmatprep.subr.bf16.mxu0 0
        %1205 = vmatpush1.bf16.msra.mxu0 0
        %1206 = vmatprep.subr.bf16.mxu0 0
        %1207 = vmatpush1.bf16.msra.mxu0 0
        %1208 = vmatprep.subr.bf16.mxu0 0
        %1209 = vmatpush1.bf16.msra.mxu0 0
        %1210 = vmatprep.subr.bf16.mxu0 0
        %1211 = vmatpush1.bf16.msra.mxu0 0
        %1212 = vmatprep.subr.bf16.mxu0 0
        %1213 = vmatpush1.bf16.msra.mxu0 0
        %1214 = vmatprep.subr.bf16.mxu0 0
        %1215 = vmatpush1.bf16.msra.mxu0 0
        %1216 = vmatprep.subr.bf16.mxu0 0
        %1217 = vmatpush1.bf16.msra.mxu0 0
        %1218 = vmatprep.subr.bf16.mxu0 0
        %1219 = vmatpush1.bf16.msra.mxu0 0
        %1220 = vmatprep.subr.bf16.mxu0 0
        %1221 = vmatpush1.bf16.msra.mxu0 0
        %1222 = vmatprep.subr.bf16.mxu0 0
        %1223 = vmatpush1.bf16.msra.mxu0 0
        %1224 = vmatprep.subr.bf16.mxu0 0
        %1225 = vmatpush1.bf16.msra.mxu0 0
        %1226 = vmatprep.mubr.bf16.mxu0 0
        %1227 = vmatmul.mubr.bf16.gmra.mrb[0].mxu0 %v1189
        %v1228 = vpop.f32.mrb[0].mxu0
        %v1229 = vadd.f32 %v1183, %v1228
        %v1230 = vpop.f32.mrb[0].mxu0
        %v1231 = vpop.f32.mrb[0].mxu0
        %v1232 = vpop.f32.mrb[0].mxu0
        %1233 = vdwg.mxu0
        %s1234 = scalar_lea.vmem %s3, 32
        %v1235 = vld [vmem:[%s1234] sm:$0xf]
        %v1236 = vld [vmem:[%s1234 + $0x4] sm:$0xf]
        %v1237 = vld [vmem:[%s1234 + $0x8] sm:$0xf]
        %v1238 = vld [vmem:[%s1234 + $0xc] sm:$0xf]
        %s1239 = scalar_lea.vmem %s4, 2
        %v1240 = vld [vmem:[%s1239] sm:$0x1]
        %v1242 = vlaneseq
        %v1243 = vshrl.u32 %v1242, 7
        %v1244 = vsub.s32 0, %v1243
        %v1245 = vrot.slane %v1240, %v1244
        %v1251 = vunpack.c.l.b16 %v1235
        %v1252 = vunpack.c.l.b16 %v1236
        %v1253 = vunpack.c.l.b16 %v1237
        %v1254 = vunpack.c.l.b16 %v1238
        %v1255 = vpack.c.b16 %v1252, %v1251
        %v1256 = vpack.c.b16 %v1254, %v1253
        %1259 = vmatprep.subr.bf16.mxu0 0
        %1260 = vmatpush1.bf16.msra.mxu0 %v1255
        %1261 = vmatprep.subr.bf16.mxu0 0
        %1262 = vmatpush1.bf16.msra.mxu0 %v1256
        %1263 = vmatprep.subr.bf16.mxu0 0
        %1264 = vmatpush1.bf16.msra.mxu0 0
        %1265 = vmatprep.subr.bf16.mxu0 0
        %1266 = vmatpush1.bf16.msra.mxu0 0
        %1267 = vmatprep.subr.bf16.mxu0 0
        %1268 = vmatpush1.bf16.msra.mxu0 0
        %1269 = vmatprep.subr.bf16.mxu0 0
        %1270 = vmatpush1.bf16.msra.mxu0 0
        %1271 = vmatprep.subr.bf16.mxu0 0
        %1272 = vmatpush1.bf16.msra.mxu0 0
        %1273 = vmatprep.subr.bf16.mxu0 0
        %1274 = vmatpush1.bf16.msra.mxu0 0
        %1275 = vmatprep.subr.bf16.mxu0 0
        %1276 = vmatpush1.bf16.msra.mxu0 0
        %1277 = vmatprep.subr.bf16.mxu0 0
        %1278 = vmatpush1.bf16.msra.mxu0 0
        %1279 = vmatprep.subr.bf16.mxu0 0
        %1280 = vmatpush1.bf16.msra.mxu0 0
        %1281 = vmatprep.subr.bf16.mxu0 0
        %1282 = vmatpush1.bf16.msra.mxu0 0
        %1283 = vmatprep.subr.bf16.mxu0 0
        %1284 = vmatpush1.bf16.msra.mxu0 0
        %1285 = vmatprep.subr.bf16.mxu0 0
        %1286 = vmatpush1.bf16.msra.mxu0 0
        %1287 = vmatprep.subr.bf16.mxu0 0
        %1288 = vmatpush1.bf16.msra.mxu0 0
        %1289 = vmatprep.subr.bf16.mxu0 0
        %1290 = vmatpush1.bf16.msra.mxu0 0
        %1291 = vmatprep.mubr.bf16.mxu0 0
        %1292 = vmatmul.mubr.bf16.gmra.mrb[0].mxu0 %v540
        %v1293 = vpop.f32.mrb[0].mxu0
        %v1294 = vadd.f32 %v1245, %v1293
        %v1295 = vpop.f32.mrb[0].mxu0
        %v1296 = vpop.f32.mrb[0].mxu0
        %v1297 = vpop.f32.mrb[0].mxu0
        %1298 = vdwg.mxu0
        %v1299 = vmul.f32 %v1294, 0.35355338
        %s1300 = scalar_lea.vmem %s5, 32
        %v1301 = vld [vmem:[%s1300] sm:$0xf]
        %v1302 = vld [vmem:[%s1300 + $0x4] sm:$0xf]
        %v1303 = vld [vmem:[%s1300 + $0x8] sm:$0xf]
        %v1304 = vld [vmem:[%s1300 + $0xc] sm:$0xf]
        %s1305 = scalar_lea.vmem %s6, 2
        %v1306 = vld [vmem:[%s1305] sm:$0x1]
        %v1308 = vlaneseq
        %v1309 = vshrl.u32 %v1308, 7
        %v1310 = vsub.s32 0, %v1309
        %v1311 = vrot.slane %v1306, %v1310
        %v1317 = vunpack.c.l.b16 %v1301
        %v1318 = vunpack.c.l.b16 %v1302
        %v1319 = vunpack.c.l.b16 %v1303
        %v1320 = vunpack.c.l.b16 %v1304
        %v1321 = vpack.c.b16 %v1318, %v1317
        %v1322 = vpack.c.b16 %v1320, %v1319
        %1325 = vmatprep.subr.bf16.mxu0 0
        %1326 = vmatpush1.bf16.msra.mxu0 %v1321
        %1327 = vmatprep.subr.bf16.mxu0 0
        %1328 = vmatpush1.bf16.msra.mxu0 %v1322
        %1329 = vmatprep.subr.bf16.mxu0 0
        %1330 = vmatpush1.bf16.msra.mxu0 0
        %1331 = vmatprep.subr.bf16.mxu0 0
        %1332 = vmatpush1.bf16.msra.mxu0 0
        %1333 = vmatprep.subr.bf16.mxu0 0
        %1334 = vmatpush1.bf16.msra.mxu0 0
        %1335 = vmatprep.subr.bf16.mxu0 0
        %1336 = vmatpush1.bf16.msra.mxu0 0
        %1337 = vmatprep.subr.bf16.mxu0 0
        %1338 = vmatpush1.bf16.msra.mxu0 0
        %1339 = vmatprep.subr.bf16.mxu0 0
        %1340 = vmatpush1.bf16.msra.mxu0 0
        %1341 = vmatprep.subr.bf16.mxu0 0
        %1342 = vmatpush1.bf16.msra.mxu0 0
        %1343 = vmatprep.subr.bf16.mxu0 0
        %1344 = vmatpush1.bf16.msra.mxu0 0
        %1345 = vmatprep.subr.bf16.mxu0 0
        %1346 = vmatpush1.bf16.msra.mxu0 0
        %1347 = vmatprep.subr.bf16.mxu0 0
        %1348 = vmatpush1.bf16.msra.mxu0 0
        %1349 = vmatprep.subr.bf16.mxu0 0
        %1350 = vmatpush1.bf16.msra.mxu0 0
        %1351 = vmatprep.subr.bf16.mxu0 0
        %1352 = vmatpush1.bf16.msra.mxu0 0
        %1353 = vmatprep.subr.bf16.mxu0 0
        %1354 = vmatpush1.bf16.msra.mxu0 0
        %1355 = vmatprep.subr.bf16.mxu0 0
        %1356 = vmatpush1.bf16.msra.mxu0 0
        %1357 = vmatprep.mubr.bf16.mxu0 0
        %1358 = vmatmul.mubr.bf16.gmra.mrb[0].mxu0 %v607
        %v1359 = vpop.f32.mrb[0].mxu0
        %v1360 = vadd.f32 %v1311, %v1359
        %v1361 = vpop.f32.mrb[0].mxu0
        %v1362 = vpop.f32.mrb[0].mxu0
        %v1363 = vadd.f32 %v1311, %v1362
        %v1364 = vpop.f32.mrb[0].mxu0
        %1365 = vdwg.mxu0
        %s1366 = scalar_lea.vmem %s7, 32
        %v1367 = vld [vmem:[%s1366] sm:$0xf]
        %v1368 = vld [vmem:[%s1366 + $0x4] sm:$0xf]
        %v1369 = vld [vmem:[%s1366 + $0x8] sm:$0xf]
        %v1370 = vld [vmem:[%s1366 + $0xc] sm:$0xf]
        %s1371 = scalar_lea.vmem %s8, 2
        %v1372 = vld [vmem:[%s1371] sm:$0x1]
        %v1374 = vlaneseq
        %v1375 = vshrl.u32 %v1374, 7
        %v1376 = vsub.s32 0, %v1375
        %v1377 = vrot.slane %v1372, %v1376
        %v1383 = vunpack.c.l.b16 %v1367
        %v1384 = vunpack.c.l.b16 %v1368
        %v1385 = vunpack.c.l.b16 %v1369
        %v1386 = vunpack.c.l.b16 %v1370
        %v1387 = vpack.c.b16 %v1384, %v1383
        %v1388 = vpack.c.b16 %v1386, %v1385
        %1391 = vmatprep.subr.bf16.mxu0 0
        %1392 = vmatpush1.bf16.msra.mxu0 %v1387
        %1393 = vmatprep.subr.bf16.mxu0 0
        %1394 = vmatpush1.bf16.msra.mxu0 %v1388
        %1395 = vmatprep.subr.bf16.mxu0 0
        %1396 = vmatpush1.bf16.msra.mxu0 0
        %1397 = vmatprep.subr.bf16.mxu0 0
        %1398 = vmatpush1.bf16.msra.mxu0 0
        %1399 = vmatprep.subr.bf16.mxu0 0
        %1400 = vmatpush1.bf16.msra.mxu0 0
        %1401 = vmatprep.subr.bf16.mxu0 0
        %1402 = vmatpush1.bf16.msra.mxu0 0
        %1403 = vmatprep.subr.bf16.mxu0 0
        %1404 = vmatpush1.bf16.msra.mxu0 0
        %1405 = vmatprep.subr.bf16.mxu0 0
        %1406 = vmatpush1.bf16.msra.mxu0 0
        %1407 = vmatprep.subr.bf16.mxu0 0
        %1408 = vmatpush1.bf16.msra.mxu0 0
        %1409 = vmatprep.subr.bf16.mxu0 0
        %1410 = vmatpush1.bf16.msra.mxu0 0
        %1411 = vmatprep.subr.bf16.mxu0 0
        %1412 = vmatpush1.bf16.msra.mxu0 0
        %1413 = vmatprep.subr.bf16.mxu0 0
        %1414 = vmatpush1.bf16.msra.mxu0 0
        %1415 = vmatprep.subr.bf16.mxu0 0
        %1416 = vmatpush1.bf16.msra.mxu0 0
        %1417 = vmatprep.subr.bf16.mxu0 0
        %1418 = vmatpush1.bf16.msra.mxu0 0
        %1419 = vmatprep.subr.bf16.mxu0 0
        %1420 = vmatpush1.bf16.msra.mxu0 0
        %1421 = vmatprep.subr.bf16.mxu0 0
        %1422 = vmatpush1.bf16.msra.mxu0 0
        %1423 = vmatprep.mubr.bf16.mxu0 0
        %1424 = vmatmul.mubr.bf16.gmra.mrb[0].mxu0 %v607
        %v1425 = vpop.f32.mrb[0].mxu0
        %v1426 = vadd.f32 %v1377, %v1425
        %v1427 = vpop.f32.mrb[0].mxu0
        %v1428 = vpop.f32.mrb[0].mxu0
        %v1429 = vadd.f32 %v1377, %v1428
        %v1430 = vpop.f32.mrb[0].mxu0
        %1431 = vdwg.mxu0
        %v1432 = vpack.c.bf16 %v1299, %v1299
        %v1433 = vpack.c.bf16 %v1363, %v1360
        %v1435 = vsel %vm722, %v1432, 0
        %v1438 = vsel %vm722, %v1433, 0
        %1440 = vmatprep.subr.bf16.mxu0 0
        %1441 = vmatpush1.bf16.xpose.msra.mxu0 %v1438
        %1442 = vmatprep.subr.bf16.mxu0 0
        %1443 = vmatpush1.bf16.xpose.msra.mxu0 0
        %1444 = vmatprep.subr.bf16.mxu0 0
        %1445 = vmatpush1.bf16.xpose.msra.mxu0 0
        %1446 = vmatprep.subr.bf16.mxu0 0
        %1447 = vmatpush1.bf16.xpose.msra.mxu0 0
        %1448 = vmatprep.subr.bf16.mxu0 0
        %1449 = vmatpush1.bf16.xpose.msra.mxu0 0
        %1450 = vmatprep.subr.bf16.mxu0 0
        %1451 = vmatpush1.bf16.xpose.msra.mxu0 0
        %1452 = vmatprep.subr.bf16.mxu0 0
        %1453 = vmatpush1.bf16.xpose.msra.mxu0 0
        %1454 = vmatprep.subr.bf16.mxu0 0
        %1455 = vmatpush1.bf16.xpose.msra.mxu0 0
        %1456 = vmatprep.subr.bf16.mxu0 0
        %1457 = vmatpush1.bf16.xpose.msra.mxu0 0
        %1458 = vmatprep.subr.bf16.mxu0 0
        %1459 = vmatpush1.bf16.xpose.msra.mxu0 0
        %1460 = vmatprep.subr.bf16.mxu0 0
        %1461 = vmatpush1.bf16.xpose.msra.mxu0 0
        %1462 = vmatprep.subr.bf16.mxu0 0
        %1463 = vmatpush1.bf16.xpose.msra.mxu0 0
        %1464 = vmatprep.subr.bf16.mxu0 0
        %1465 = vmatpush1.bf16.xpose.msra.mxu0 0
        %1466 = vmatprep.subr.bf16.mxu0 0
        %1467 = vmatpush1.bf16.xpose.msra.mxu0 0
        %1468 = vmatprep.subr.bf16.mxu0 0
        %1469 = vmatpush1.bf16.xpose.msra.mxu0 0
        %1470 = vmatprep.subr.bf16.mxu0 0
        %1471 = vmatpush1.bf16.xpose.msra.mxu0 0
        %1472 = vmatprep.mubr.bf16.mxu0 0
        %1473 = vmatmul.mubr.bf16.gmra.mrb[0].mxu0 %v1435
        %v1474 = vpop.f32.mrb[0].mxu0
        %v1475 = vadd.f32 %v720, %v1474
        %v1476 = vpop.f32.mrb[0].mxu0
        %v1477 = vpop.f32.mrb[0].mxu0
        %v1478 = vpop.f32.mrb[0].mxu0
        %1479 = vdwg.mxu0
        %v1480 = vsel %vm769, %v1475, -inf
        %1481 = vmax.xlane.f32.xlu0 %v1480
        %v1482 = vpop.xlane.xlu0 %1481
        %v1483 = vsub.f32 %v1475, %v1482
        %v1484 = vmul.f32 %v1483, 1.442695
        %v1485 = vpow.pop %v1484
        %v1486 = vsel %vm769, %v1485, 0.0
        %1487 = vadd.xlane.f32.xlu0 %v1486
        %v1488 = vpop.xlane.xlu0 %1487
        %v1489 = vrcp.pop %v1488
        %v1490 = vmul.f32 %v1485, %v1489
        %v1491 = vpack.c.bf16 %v1490, %v1490
        %v1492 = vpack.c.bf16 %v1429, %v1426
        %v1494 = vsel %vm769, %v1491, 0
        %v1497 = vsel %vm786, %v1492, 0
        %1499 = vmatprep.subr.bf16.mxu0 0
        %1500 = vmatpush1.bf16.msra.mxu0 %v1497
        %1501 = vmatprep.subr.bf16.mxu0 0
        %1502 = vmatpush1.bf16.msra.mxu0 0
        %1503 = vmatprep.subr.bf16.mxu0 0
        %1504 = vmatpush1.bf16.msra.mxu0 0
        %1505 = vmatprep.subr.bf16.mxu0 0
        %1506 = vmatpush1.bf16.msra.mxu0 0
        %1507 = vmatprep.subr.bf16.mxu0 0
        %1508 = vmatpush1.bf16.msra.mxu0 0
        %1509 = vmatprep.subr.bf16.mxu0 0
        %1510 = vmatpush1.bf16.msra.mxu0 0
        %1511 = vmatprep.subr.bf16.mxu0 0
        %1512 = vmatpush1.bf16.msra.mxu0 0
        %1513 = vmatprep.subr.bf16.mxu0 0
        %1514 = vmatpush1.bf16.msra.mxu0 0
        %1515 = vmatprep.subr.bf16.mxu0 0
        %1516 = vmatpush1.bf16.msra.mxu0 0
        %1517 = vmatprep.subr.bf16.mxu0 0
        %1518 = vmatpush1.bf16.msra.mxu0 0
        %1519 = vmatprep.subr.bf16.mxu0 0
        %1520 = vmatpush1.bf16.msra.mxu0 0
        %1521 = vmatprep.subr.bf16.mxu0 0
        %1522 = vmatpush1.bf16.msra.mxu0 0
        %1523 = vmatprep.subr.bf16.mxu0 0
        %1524 = vmatpush1.bf16.msra.mxu0 0
        %1525 = vmatprep.subr.bf16.mxu0 0
        %1526 = vmatpush1.bf16.msra.mxu0 0
        %1527 = vmatprep.subr.bf16.mxu0 0
        %1528 = vmatpush1.bf16.msra.mxu0 0
        %1529 = vmatprep.subr.bf16.mxu0 0
        %1530 = vmatpush1.bf16.msra.mxu0 0
        %1531 = vmatprep.mubr.bf16.mxu0 0
        %1532 = vmatmul.mubr.bf16.gmra.mrb[0].mxu0 %v1494
        %v1533 = vpop.f32.mrb[0].mxu0
        %v1534 = vadd.f32 0.0, %v1533
        %v1535 = vpop.f32.mrb[0].mxu0
        %v1536 = vpop.f32.mrb[0].mxu0
        %v1537 = vpop.f32.mrb[0].mxu0
        %1538 = vdwg.mxu0
        %v1539 = vpack.c.bf16 %v1534, %v1534
        %s1540 = scalar_lea.vmem %s9, 8
        %v1541 = vld [vmem:[%s1540] sm:$0xf]
        %v1543 = vsel %vm722, %v1539, 0
        %v1546 = vsel %vm1144, %v1541, 0
        %1548 = vmatprep.subr.bf16.mxu0 0
        %1549 = vmatpush1.bf16.msra.mxu0 %v1546
        %1550 = vmatprep.subr.bf16.mxu0 0
        %1551 = vmatpush1.bf16.msra.mxu0 0
        %1552 = vmatprep.subr.bf16.mxu0 0
        %1553 = vmatpush1.bf16.msra.mxu0 0
        %1554 = vmatprep.subr.bf16.mxu0 0
        %1555 = vmatpush1.bf16.msra.mxu0 0
        %1556 = vmatprep.subr.bf16.mxu0 0
        %1557 = vmatpush1.bf16.msra.mxu0 0
        %1558 = vmatprep.subr.bf16.mxu0 0
        %1559 = vmatpush1.bf16.msra.mxu0 0
        %1560 = vmatprep.subr.bf16.mxu0 0
        %1561 = vmatpush1.bf16.msra.mxu0 0
        %1562 = vmatprep.subr.bf16.mxu0 0
        %1563 = vmatpush1.bf16.msra.mxu0 0
        %1564 = vmatprep.subr.bf16.mxu0 0
        %1565 = vmatpush1.bf16.msra.mxu0 0
        %1566 = vmatprep.subr.bf16.mxu0 0
        %1567 = vmatpush1.bf16.msra.mxu0 0
        %1568 = vmatprep.subr.bf16.mxu0 0
        %1569 = vmatpush1.bf16.msra.mxu0 0
        %1570 = vmatprep.subr.bf16.mxu0 0
        %1571 = vmatpush1.bf16.msra.mxu0 0
        %1572 = vmatprep.subr.bf16.mxu0 0
        %1573 = vmatpush1.bf16.msra.mxu0 0
        %1574 = vmatprep.subr.bf16.mxu0 0
        %1575 = vmatpush1.bf16.msra.mxu0 0
        %1576 = vmatprep.subr.bf16.mxu0 0
        %1577 = vmatpush1.bf16.msra.mxu0 0
        %1578 = vmatprep.subr.bf16.mxu0 0
        %1579 = vmatpush1.bf16.msra.mxu0 0
        %1580 = vmatprep.mubr.bf16.mxu0 0
        %1581 = vmatmul.mubr.bf16.gmra.mrb[0].mxu0 %v1543
        %v1582 = vpop.f32.mrb[0].mxu0
        %v1583 = vadd.f32 0.0, %v1582
        %v1584 = vpop.f32.mrb[0].mxu0
        %v1585 = vpop.f32.mrb[0].mxu0
        %v1586 = vpop.f32.mrb[0].mxu0
        %1587 = vdwg.mxu0
        %v1588 = vadd.f32 %v1229, %v1583
        %s1589 = scalar_lea.vmem %s3, 48
        %v1590 = vld [vmem:[%s1589] sm:$0xf]
        %v1591 = vld [vmem:[%s1589 + $0x4] sm:$0xf]
        %v1592 = vld [vmem:[%s1589 + $0x8] sm:$0xf]
        %v1593 = vld [vmem:[%s1589 + $0xc] sm:$0xf]
        %s1594 = scalar_lea.vmem %s4, 3
        %v1595 = vld [vmem:[%s1594] sm:$0x1]
        %v1597 = vlaneseq
        %v1598 = vshrl.u32 %v1597, 7
        %v1599 = vsub.s32 0, %v1598
        %v1600 = vrot.slane %v1595, %v1599
        %v1606 = vunpack.c.l.b16 %v1590
        %v1607 = vunpack.c.l.b16 %v1591
        %v1608 = vunpack.c.l.b16 %v1592
        %v1609 = vunpack.c.l.b16 %v1593
        %v1610 = vpack.c.b16 %v1607, %v1606
        %v1611 = vpack.c.b16 %v1609, %v1608
        %1614 = vmatprep.subr.bf16.mxu0 0
        %1615 = vmatpush1.bf16.msra.mxu0 %v1610
        %1616 = vmatprep.subr.bf16.mxu0 0
        %1617 = vmatpush1.bf16.msra.mxu0 %v1611
        %1618 = vmatprep.subr.bf16.mxu0 0
        %1619 = vmatpush1.bf16.msra.mxu0 0
        %1620 = vmatprep.subr.bf16.mxu0 0
        %1621 = vmatpush1.bf16.msra.mxu0 0
        %1622 = vmatprep.subr.bf16.mxu0 0
        %1623 = vmatpush1.bf16.msra.mxu0 0
        %1624 = vmatprep.subr.bf16.mxu0 0
        %1625 = vmatpush1.bf16.msra.mxu0 0
        %1626 = vmatprep.subr.bf16.mxu0 0
        %1627 = vmatpush1.bf16.msra.mxu0 0
        %1628 = vmatprep.subr.bf16.mxu0 0
        %1629 = vmatpush1.bf16.msra.mxu0 0
        %1630 = vmatprep.subr.bf16.mxu0 0
        %1631 = vmatpush1.bf16.msra.mxu0 0
        %1632 = vmatprep.subr.bf16.mxu0 0
        %1633 = vmatpush1.bf16.msra.mxu0 0
        %1634 = vmatprep.subr.bf16.mxu0 0
        %1635 = vmatpush1.bf16.msra.mxu0 0
        %1636 = vmatprep.subr.bf16.mxu0 0
        %1637 = vmatpush1.bf16.msra.mxu0 0
        %1638 = vmatprep.subr.bf16.mxu0 0
        %1639 = vmatpush1.bf16.msra.mxu0 0
        %1640 = vmatprep.subr.bf16.mxu0 0
        %1641 = vmatpush1.bf16.msra.mxu0 0
        %1642 = vmatprep.subr.bf16.mxu0 0
        %1643 = vmatpush1.bf16.msra.mxu0 0
        %1644 = vmatprep.subr.bf16.mxu0 0
        %1645 = vmatpush1.bf16.msra.mxu0 0
        %1646 = vmatprep.mubr.bf16.mxu0 0
        %1647 = vmatmul.mubr.bf16.gmra.mrb[0].mxu0 %v540
        %v1648 = vpop.f32.mrb[0].mxu0
        %v1649 = vadd.f32 %v1600, %v1648
        %v1650 = vpop.f32.mrb[0].mxu0
        %v1651 = vpop.f32.mrb[0].mxu0
        %v1652 = vpop.f32.mrb[0].mxu0
        %1653 = vdwg.mxu0
        %v1654 = vmul.f32 %v1649, 0.35355338
        %s1655 = scalar_lea.vmem %s5, 48
        %v1656 = vld [vmem:[%s1655] sm:$0xf]
        %v1657 = vld [vmem:[%s1655 + $0x4] sm:$0xf]
        %v1658 = vld [vmem:[%s1655 + $0x8] sm:$0xf]
        %v1659 = vld [vmem:[%s1655 + $0xc] sm:$0xf]
        %s1660 = scalar_lea.vmem %s6, 3
        %v1661 = vld [vmem:[%s1660] sm:$0x1]
        %v1663 = vlaneseq
        %v1664 = vshrl.u32 %v1663, 7
        %v1665 = vsub.s32 0, %v1664
        %v1666 = vrot.slane %v1661, %v1665
        %v1672 = vunpack.c.l.b16 %v1656
        %v1673 = vunpack.c.l.b16 %v1657
        %v1674 = vunpack.c.l.b16 %v1658
        %v1675 = vunpack.c.l.b16 %v1659
        %v1676 = vpack.c.b16 %v1673, %v1672
        %v1677 = vpack.c.b16 %v1675, %v1674
        %1680 = vmatprep.subr.bf16.mxu0 0
        %1681 = vmatpush1.bf16.msra.mxu0 %v1676
        %1682 = vmatprep.subr.bf16.mxu0 0
        %1683 = vmatpush1.bf16.msra.mxu0 %v1677
        %1684 = vmatprep.subr.bf16.mxu0 0
        %1685 = vmatpush1.bf16.msra.mxu0 0
        %1686 = vmatprep.subr.bf16.mxu0 0
        %1687 = vmatpush1.bf16.msra.mxu0 0
        %1688 = vmatprep.subr.bf16.mxu0 0
        %1689 = vmatpush1.bf16.msra.mxu0 0
        %1690 = vmatprep.subr.bf16.mxu0 0
        %1691 = vmatpush1.bf16.msra.mxu0 0
        %1692 = vmatprep.subr.bf16.mxu0 0
        %1693 = vmatpush1.bf16.msra.mxu0 0
        %1694 = vmatprep.subr.bf16.mxu0 0
        %1695 = vmatpush1.bf16.msra.mxu0 0
        %1696 = vmatprep.subr.bf16.mxu0 0
        %1697 = vmatpush1.bf16.msra.mxu0 0
        %1698 = vmatprep.subr.bf16.mxu0 0
        %1699 = vmatpush1.bf16.msra.mxu0 0
        %1700 = vmatprep.subr.bf16.mxu0 0
        %1701 = vmatpush1.bf16.msra.mxu0 0
        %1702 = vmatprep.subr.bf16.mxu0 0
        %1703 = vmatpush1.bf16.msra.mxu0 0
        %1704 = vmatprep.subr.bf16.mxu0 0
        %1705 = vmatpush1.bf16.msra.mxu0 0
        %1706 = vmatprep.subr.bf16.mxu0 0
        %1707 = vmatpush1.bf16.msra.mxu0 0
        %1708 = vmatprep.subr.bf16.mxu0 0
        %1709 = vmatpush1.bf16.msra.mxu0 0
        %1710 = vmatprep.subr.bf16.mxu0 0
        %1711 = vmatpush1.bf16.msra.mxu0 0
        %1712 = vmatprep.mubr.bf16.mxu0 0
        %1713 = vmatmul.mubr.bf16.gmra.mrb[0].mxu0 %v607
        %v1714 = vpop.f32.mrb[0].mxu0
        %v1715 = vadd.f32 %v1666, %v1714
        %v1716 = vpop.f32.mrb[0].mxu0
        %v1717 = vpop.f32.mrb[0].mxu0
        %v1718 = vadd.f32 %v1666, %v1717
        %v1719 = vpop.f32.mrb[0].mxu0
        %1720 = vdwg.mxu0
        %s1721 = scalar_lea.vmem %s7, 48
        %v1722 = vld [vmem:[%s1721] sm:$0xf]
        %v1723 = vld [vmem:[%s1721 + $0x4] sm:$0xf]
        %v1724 = vld [vmem:[%s1721 + $0x8] sm:$0xf]
        %v1725 = vld [vmem:[%s1721 + $0xc] sm:$0xf]
        %s1726 = scalar_lea.vmem %s8, 3
        %v1727 = vld [vmem:[%s1726] sm:$0x1]
        %v1729 = vlaneseq
        %v1730 = vshrl.u32 %v1729, 7
        %v1731 = vsub.s32 0, %v1730
        %v1732 = vrot.slane %v1727, %v1731
        %v1738 = vunpack.c.l.b16 %v1722
        %v1739 = vunpack.c.l.b16 %v1723
        %v1740 = vunpack.c.l.b16 %v1724
        %v1741 = vunpack.c.l.b16 %v1725
        %v1742 = vpack.c.b16 %v1739, %v1738
        %v1743 = vpack.c.b16 %v1741, %v1740
        %1746 = vmatprep.subr.bf16.mxu0 0
        %1747 = vmatpush1.bf16.msra.mxu0 %v1742
        %1748 = vmatprep.subr.bf16.mxu0 0
        %1749 = vmatpush1.bf16.msra.mxu0 %v1743
        %1750 = vmatprep.subr.bf16.mxu0 0
        %1751 = vmatpush1.bf16.msra.mxu0 0
        %1752 = vmatprep.subr.bf16.mxu0 0
        %1753 = vmatpush1.bf16.msra.mxu0 0
        %1754 = vmatprep.subr.bf16.mxu0 0
        %1755 = vmatpush1.bf16.msra.mxu0 0
        %1756 = vmatprep.subr.bf16.mxu0 0
        %1757 = vmatpush1.bf16.msra.mxu0 0
        %1758 = vmatprep.subr.bf16.mxu0 0
        %1759 = vmatpush1.bf16.msra.mxu0 0
        %1760 = vmatprep.subr.bf16.mxu0 0
        %1761 = vmatpush1.bf16.msra.mxu0 0
        %1762 = vmatprep.subr.bf16.mxu0 0
        %1763 = vmatpush1.bf16.msra.mxu0 0
        %1764 = vmatprep.subr.bf16.mxu0 0
        %1765 = vmatpush1.bf16.msra.mxu0 0
        %1766 = vmatprep.subr.bf16.mxu0 0
        %1767 = vmatpush1.bf16.msra.mxu0 0
        %1768 = vmatprep.subr.bf16.mxu0 0
        %1769 = vmatpush1.bf16.msra.mxu0 0
        %1770 = vmatprep.subr.bf16.mxu0 0
        %1771 = vmatpush1.bf16.msra.mxu0 0
        %1772 = vmatprep.subr.bf16.mxu0 0
        %1773 = vmatpush1.bf16.msra.mxu0 0
        %1774 = vmatprep.subr.bf16.mxu0 0
        %1775 = vmatpush1.bf16.msra.mxu0 0
        %1776 = vmatprep.subr.bf16.mxu0 0
        %1777 = vmatpush1.bf16.msra.mxu0 0
        %1778 = vmatprep.mubr.bf16.mxu0 0
        %1779 = vmatmul.mubr.bf16.gmra.mrb[0].mxu0 %v607
        %v1780 = vpop.f32.mrb[0].mxu0
        %v1781 = vadd.f32 %v1732, %v1780
        %v1782 = vpop.f32.mrb[0].mxu0
        %v1783 = vpop.f32.mrb[0].mxu0
        %v1784 = vadd.f32 %v1732, %v1783
        %v1785 = vpop.f32.mrb[0].mxu0
        %1786 = vdwg.mxu0
        %v1787 = vpack.c.bf16 %v1654, %v1654
        %v1788 = vpack.c.bf16 %v1718, %v1715
        %v1790 = vsel %vm722, %v1787, 0
        %v1793 = vsel %vm722, %v1788, 0
        %1795 = vmatprep.subr.bf16.mxu0 0
        %1796 = vmatpush1.bf16.xpose.msra.mxu0 %v1793
        %1797 = vmatprep.subr.bf16.mxu0 0
        %1798 = vmatpush1.bf16.xpose.msra.mxu0 0
        %1799 = vmatprep.subr.bf16.mxu0 0
        %1800 = vmatpush1.bf16.xpose.msra.mxu0 0
        %1801 = vmatprep.subr.bf16.mxu0 0
        %1802 = vmatpush1.bf16.xpose.msra.mxu0 0
        %1803 = vmatprep.subr.bf16.mxu0 0
        %1804 = vmatpush1.bf16.xpose.msra.mxu0 0
        %1805 = vmatprep.subr.bf16.mxu0 0
        %1806 = vmatpush1.bf16.xpose.msra.mxu0 0
        %1807 = vmatprep.subr.bf16.mxu0 0
        %1808 = vmatpush1.bf16.xpose.msra.mxu0 0
        %1809 = vmatprep.subr.bf16.mxu0 0
        %1810 = vmatpush1.bf16.xpose.msra.mxu0 0
        %1811 = vmatprep.subr.bf16.mxu0 0
        %1812 = vmatpush1.bf16.xpose.msra.mxu0 0
        %1813 = vmatprep.subr.bf16.mxu0 0
        %1814 = vmatpush1.bf16.xpose.msra.mxu0 0
        %1815 = vmatprep.subr.bf16.mxu0 0
        %1816 = vmatpush1.bf16.xpose.msra.mxu0 0
        %1817 = vmatprep.subr.bf16.mxu0 0
        %1818 = vmatpush1.bf16.xpose.msra.mxu0 0
        %1819 = vmatprep.subr.bf16.mxu0 0
        %1820 = vmatpush1.bf16.xpose.msra.mxu0 0
        %1821 = vmatprep.subr.bf16.mxu0 0
        %1822 = vmatpush1.bf16.xpose.msra.mxu0 0
        %1823 = vmatprep.subr.bf16.mxu0 0
        %1824 = vmatpush1.bf16.xpose.msra.mxu0 0
        %1825 = vmatprep.subr.bf16.mxu0 0
        %1826 = vmatpush1.bf16.xpose.msra.mxu0 0
        %1827 = vmatprep.mubr.bf16.mxu0 0
        %1828 = vmatmul.mubr.bf16.gmra.mrb[0].mxu0 %v1790
        %v1829 = vpop.f32.mrb[0].mxu0
        %v1830 = vadd.f32 %v720, %v1829
        %v1831 = vpop.f32.mrb[0].mxu0
        %v1832 = vpop.f32.mrb[0].mxu0
        %v1833 = vpop.f32.mrb[0].mxu0
        %1834 = vdwg.mxu0
        %v1835 = vsel %vm769, %v1830, -inf
        %1836 = vmax.xlane.f32.xlu0 %v1835
        %v1837 = vpop.xlane.xlu0 %1836
        %v1838 = vsub.f32 %v1830, %v1837
        %v1839 = vmul.f32 %v1838, 1.442695
        %v1840 = vpow.pop %v1839
        %v1841 = vsel %vm769, %v1840, 0.0
        %1842 = vadd.xlane.f32.xlu0 %v1841
        %v1843 = vpop.xlane.xlu0 %1842
        %v1844 = vrcp.pop %v1843
        %v1845 = vmul.f32 %v1840, %v1844
        %v1846 = vpack.c.bf16 %v1845, %v1845
        %v1847 = vpack.c.bf16 %v1784, %v1781
        %v1849 = vsel %vm769, %v1846, 0
        %v1852 = vsel %vm786, %v1847, 0
        %1854 = vmatprep.subr.bf16.mxu0 0
        %1855 = vmatpush1.bf16.msra.mxu0 %v1852
        %1856 = vmatprep.subr.bf16.mxu0 0
        %1857 = vmatpush1.bf16.msra.mxu0 0
        %1858 = vmatprep.subr.bf16.mxu0 0
        %1859 = vmatpush1.bf16.msra.mxu0 0
        %1860 = vmatprep.subr.bf16.mxu0 0
        %1861 = vmatpush1.bf16.msra.mxu0 0
        %1862 = vmatprep.subr.bf16.mxu0 0
        %1863 = vmatpush1.bf16.msra.mxu0 0
        %1864 = vmatprep.subr.bf16.mxu0 0
        %1865 = vmatpush1.bf16.msra.mxu0 0
        %1866 = vmatprep.subr.bf16.mxu0 0
        %1867 = vmatpush1.bf16.msra.mxu0 0
        %1868 = vmatprep.subr.bf16.mxu0 0
        %1869 = vmatpush1.bf16.msra.mxu0 0
        %1870 = vmatprep.subr.bf16.mxu0 0
        %1871 = vmatpush1.bf16.msra.mxu0 0
        %1872 = vmatprep.subr.bf16.mxu0 0
        %1873 = vmatpush1.bf16.msra.mxu0 0
        %1874 = vmatprep.subr.bf16.mxu0 0
        %1875 = vmatpush1.bf16.msra.mxu0 0
        %1876 = vmatprep.subr.bf16.mxu0 0
        %1877 = vmatpush1.bf16.msra.mxu0 0
        %1878 = vmatprep.subr.bf16.mxu0 0
        %1879 = vmatpush1.bf16.msra.mxu0 0
        %1880 = vmatprep.subr.bf16.mxu0 0
        %1881 = vmatpush1.bf16.msra.mxu0 0
        %1882 = vmatprep.subr.bf16.mxu0 0
        %1883 = vmatpush1.bf16.msra.mxu0 0
        %1884 = vmatprep.subr.bf16.mxu0 0
        %1885 = vmatpush1.bf16.msra.mxu0 0
        %1886 = vmatprep.mubr.bf16.mxu0 0
        %1887 = vmatmul.mubr.bf16.gmra.mrb[0].mxu0 %v1849
        %v1888 = vpop.f32.mrb[0].mxu0
        %v1889 = vadd.f32 0.0, %v1888
        %v1890 = vpop.f32.mrb[0].mxu0
        %v1891 = vpop.f32.mrb[0].mxu0
        %v1892 = vpop.f32.mrb[0].mxu0
        %1893 = vdwg.mxu0
        %v1894 = vpack.c.bf16 %v1889, %v1889
        %s1895 = scalar_lea.vmem %s9, 12
        %v1896 = vld [vmem:[%s1895] sm:$0xf]
        %v1898 = vsel %vm722, %v1894, 0
        %v1901 = vsel %vm1144, %v1896, 0
        %1903 = vmatprep.subr.bf16.mxu0 0
        %1904 = vmatpush1.bf16.msra.mxu0 %v1901
        %1905 = vmatprep.subr.bf16.mxu0 0
        %1906 = vmatpush1.bf16.msra.mxu0 0
        %1907 = vmatprep.subr.bf16.mxu0 0
        %1908 = vmatpush1.bf16.msra.mxu0 0
        %1909 = vmatprep.subr.bf16.mxu0 0
        %1910 = vmatpush1.bf16.msra.mxu0 0
        %1911 = vmatprep.subr.bf16.mxu0 0
        %1912 = vmatpush1.bf16.msra.mxu0 0
        %1913 = vmatprep.subr.bf16.mxu0 0
        %1914 = vmatpush1.bf16.msra.mxu0 0
        %1915 = vmatprep.subr.bf16.mxu0 0
        %1916 = vmatpush1.bf16.msra.mxu0 0
        %1917 = vmatprep.subr.bf16.mxu0 0
        %1918 = vmatpush1.bf16.msra.mxu0 0
        %1919 = vmatprep.subr.bf16.mxu0 0
        %1920 = vmatpush1.bf16.msra.mxu0 0
        %1921 = vmatprep.subr.bf16.mxu0 0
        %1922 = vmatpush1.bf16.msra.mxu0 0
        %1923 = vmatprep.subr.bf16.mxu0 0
        %1924 = vmatpush1.bf16.msra.mxu0 0
        %1925 = vmatprep.subr.bf16.mxu0 0
        %1926 = vmatpush1.bf16.msra.mxu0 0
        %1927 = vmatprep.subr.bf16.mxu0 0
        %1928 = vmatpush1.bf16.msra.mxu0 0
        %1929 = vmatprep.subr.bf16.mxu0 0
        %1930 = vmatpush1.bf16.msra.mxu0 0
        %1931 = vmatprep.subr.bf16.mxu0 0
        %1932 = vmatpush1.bf16.msra.mxu0 0
        %1933 = vmatprep.subr.bf16.mxu0 0
        %1934 = vmatpush1.bf16.msra.mxu0 0
        %1935 = vmatprep.mubr.bf16.mxu0 0
        %1936 = vmatmul.mubr.bf16.gmra.mrb[0].mxu0 %v1898
        %v1937 = vpop.f32.mrb[0].mxu0
        %v1938 = vadd.f32 0.0, %v1937
        %v1939 = vpop.f32.mrb[0].mxu0
        %v1940 = vpop.f32.mrb[0].mxu0
        %v1941 = vpop.f32.mrb[0].mxu0
        %1942 = vdwg.mxu0
        %v1943 = vadd.f32 %v1588, %v1938
        %v1944 = vld [vmem:[%s10] sm:$0x1]
        %v1946 = vlaneseq
        %v1947 = vshrl.u32 %v1946, 7
        %v1948 = vsub.s32 0, %v1947
        %v1949 = vrot.slane %v1944, %v1948
        %v1951 = vadd.f32 %v1943, %v1949
        %v1952 = vadd.f32 %v1951, %v509
        %v1953 = vld [vmem:[%s11] sm:$0x1]
        %v1954 = vld [vmem:[%s12] sm:$0x1]
        %v1955 = vsel %vm538, %v1952, 0.0
        %1956 = vadd.xlane.f32.xlu0 %v1955
        %v1957 = vpop.xlane.xlu0 %1956
        %v1958 = vrcp.pop 32.0
        %v1959 = vmul.f32 %v1957, %v1958
        %v1960 = vsub.f32 %v1952, %v1959
        %v1961 = vmul.f32 %v1960, %v1960
        %v1962 = vsel %vm538, %v1961, 0.0
        %1963 = vadd.xlane.f32.xlu0 %v1962
        %v1964 = vpop.xlane.xlu0 %1963
        %v1965 = vmul.f32 %v1964, %v1958
        %v1966 = vadd.f32 %v1965, 1e-06
        %v1967 = vrsqrt.pop %v1966
        %v1968 = vmul.f32 %v1960, %v1967
        %v1970 = vlaneseq
        %v1971 = vshrl.u32 %v1970, 7
        %v1972 = vsub.s32 0, %v1971
        %v1973 = vrot.slane %v1953, %v1972
        %v1975 = vmul.f32 %v1968, %v1973
        %v1977 = vlaneseq
        %v1978 = vshrl.u32 %v1977, 7
        %v1979 = vsub.s32 0, %v1978
        %v1980 = vrot.slane %v1954, %v1979
        %v1982 = vadd.f32 %v1975, %v1980
        %1983 = vst.msk [vmem:[%s507] sm:$0xff] %vm538, %v1982
        %p1984 = scmp.lt.s32.totalorder %s29, 1
        %s1985 = scalar_select %p1984, %s29, 1
        %s1986 = smul.addr %s1985, 8
        %s1987 = scalar_lea.vmem %s13, %s1986
        %s1988 = sand.u32 %s351, 1
        %s1989 = scalar_lea.sflag [#allocation3], %s1988
        %s1990 = sand.u32 %s351, 1
        %s1991 = smul.addr %s1990, 8
        %s1992 = scalar_lea.vmem [#allocation2], %s1991
        // Predicated region
        $region73: #{_lambda_.4} parent=71 // pred_check
          %p1993 = pneg %p335
        $region74: #{_lambda_.4} parent=71 // pred_check_branch
          %1995 = sbr.rel (%p1993) target = $region76
        $region75: #{_lambda_.4} parent=71 // pred_region
          _
        $region76: #{_lambda_.4} parent=71 // pred_fallthru
          _
        // Predicated region
        $region77: #{_lambda_.4} parent=71 // pred_check
          %p1996 = pneg %p361
        $region78: #{_lambda_.4} parent=71 // pred_check_branch
          %1998 = sbr.rel (%p1996) target = $region80
        $region79: #{_lambda_.4} parent=71 // pred_region
          %s2000 = ssub.s32 128, 128
          %2001 = vsyncadd %s1989, %s2000
          %s2002 = smul.addr %s29, 128
          %s2003 = scalar_lea.hbm %s14, %s2002
          %s2005 = sshll.u32 %s1992, 4
          %s2006 = int_to_ptr.vmem [resolvable:$true] %s2005
          %2008 = dma.vmem_to_hbm [thread:$0]  %s2006, 128, %s2003, %s1989
        $region80: #{_lambda_.4} parent=71 // pred_fallthru
          _
      $region72: #{_lambda_.4} parent=5 // pred_fallthru
        _
      %p2009 = scmp.le.s32.totalorder 2, %s24
      // Predicated region
      $region81: #{_lambda_.4} parent=5 // pred_check
        %p2010 = pneg %p2009
      $region82: #{_lambda_.4} parent=5 // pred_check_branch
        %2012 = sbr.rel (%p2010) target = $region84
      $region83: #{_lambda_.4} parent=5 // pred_region
        %s2013 = ssub.s32 %s24, 2
        // Predicated region
        $region85: #{_lambda_.4} parent=83 // pred_check
          %p2014 = pneg %p341
        $region86: #{_lambda_.4} parent=83 // pred_check_branch
          %2016 = sbr.rel (%p2014) target = $region88
        $region87: #{_lambda_.4} parent=83 // pred_region
          %p2017 = scmp.lt.s32.totalorder %s30, 1
          %s2018 = scalar_select %p2017, %s30, 1
          %s2019 = smul.addr %s2018, 8
          %s2020 = scalar_lea.vmem %s13, %s2019
        $region88: #{_lambda_.4} parent=83 // pred_fallthru
          _
        // Predicated region
        $region89: #{_lambda_.4} parent=83 // pred_check
          %p2021 = pneg %p367
        $region90: #{_lambda_.4} parent=83 // pred_check_branch
          %2023 = sbr.rel (%p2021) target = $region92
        $region91: #{_lambda_.4} parent=83 // pred_region
          %s2024 = sand.u32 %s352, 1
          %s2025 = scalar_lea.sflag [#allocation3], %s2024
          %s2026 = sand.u32 %s352, 1
          %s2027 = smul.addr %s2026, 8
          %s2028 = scalar_lea.vmem [#allocation2], %s2027
          %2029 = dma.done %s2025, 128
        $region92: #{_lambda_.4} parent=83 // pred_fallthru
          _
      $region84: #{_lambda_.4} parent=5 // pred_fallthru
        _
    $region6: #{_lambda_.4} parent=1 // loop_footer
      %s28 = sadd.s32 1, %s24
    $region7: #{_lambda_.4} parent=1 // loop_footer_branch
      %23 = sbr.rel target = $region3
    $region8: #{_lambda_.4} parent=1 // loop_exit
      _
    %2030 = vsyncpa [#allocation3], 1
    %s2031 = scalar_lea.sflag [#allocation3], 1
    %2032 = vsyncpa %s2031, 1

</llo_original>
